<compile_context>
chip_gen: v7x
topology: tpu7x:2x2x1
jax: 0.10.0
libtpu: 0.0.40
codegen_flags: <defaults>
</compile_context>

<pallas_src>
import functools

import jax
import jax.numpy as jnp
from jax.experimental import pallas as pl
from jax.experimental.pallas import tpu as pltpu

VOCAB_SIZE = 50
EMBED_DIM = 100
EMBED_PAD = 128          # K dim padded to lane multiple
HIDDEN = 200
HIDDEN_PAD = 256         # per-gate width padded to a 128-lane multiple
FC1_DIM = 256
NUM_CLASSES = 3
OUT_PAD = 128            # lane-dense output width


def lstm_fc_kernel(emb_ref, wih_ref, whh_ref, b_ref,
                   wfc1_ref, bfc1_ref, wfc2_ref, bfc2_ref,
                   out_ref, xg_sc, hs_sc, *, seq, batch):
    Hp = HIDDEN_PAD
    whh = whh_ref[...]                                   # (Hp, 4Hp)

    # Batched input projection + bias for ALL timesteps (no recurrent dependence):
    # (seq*batch, EP) @ (EP, 4Hp) -> (seq*batch, 4Hp)
    xg_sc[...] = (jnp.dot(emb_ref[...], wih_ref[...],
                          preferred_element_type=jnp.float32) + b_ref[...])

    h = jnp.zeros((batch, Hp), jnp.float32)
    c = jnp.zeros((batch, Hp), jnp.float32)

    # Fully unrolled recurrence; only h @ W_hh is on the serial critical path.
    for t in range(seq):
        xg_t = xg_sc[pl.ds(t * batch, batch), :]         # static offsets
        gates = xg_t + jnp.dot(h, whh, preferred_element_type=jnp.float32)
        # PyTorch gate order [i, f, g, o]; slices are 128-lane aligned (Hp = 256).
        i_g = jax.nn.sigmoid(gates[:, 0 * Hp:1 * Hp])
        f_g = jax.nn.sigmoid(gates[:, 1 * Hp:2 * Hp])
        g_g = jnp.tanh(gates[:, 2 * Hp:3 * Hp])
        o_g = jax.nn.sigmoid(gates[:, 3 * Hp:4 * Hp])
        c = f_g * c + i_g * g_g
        h = o_g * jnp.tanh(c)
        hs_sc[pl.ds(t * batch, batch), :] = h            # accumulate h_t

    # fc1 + ReLU + fc2, batched over all timesteps, single lane-dense store.
    hseq = hs_sc[...]                                    # (seq*batch, Hp)
    z = jnp.dot(hseq, wfc1_ref[...], preferred_element_type=jnp.float32) + bfc1_ref[...]
    z = jnp.maximum(z, 0.0)
    y = jnp.dot(z, wfc2_ref[...], preferred_element_type=jnp.float32) + bfc2_ref[...]
    out_ref[...] = y                                     # (seq*batch, 128)


def net_forward(tokens, params):
    """tokens: int32 (seq, batch). Returns float32 (seq, batch, 3)."""
    seq, batch = tokens.shape
    H, Hp, E, EP = HIDDEN, HIDDEN_PAD, EMBED_DIM, EMBED_PAD

    # Embedding lookup is a data-dependent gather — done as JAX glue.
    emb = jnp.take(params["embedding"], tokens, axis=0)              # (seq, batch, E)
    emb_flat = emb.reshape(seq * batch, E)
    emb_flat = jnp.pad(emb_flat, ((0, 0), (0, EP - E)))              # (seq*batch, EP)

    # LSTM weights: pad each gate block to Hp so gate slices start on 128-lane boundaries.
    w_ih = params["w_ih"].reshape(4, H, E)
    w_ih = jnp.pad(w_ih, ((0, 0), (0, Hp - H), (0, EP - E)))
    wih_t = w_ih.reshape(4 * Hp, EP).T                               # (EP, 4Hp)

    w_hh = params["w_hh"].reshape(4, H, H)
    w_hh = jnp.pad(w_hh, ((0, 0), (0, Hp - H), (0, Hp - H)))
    whh_t = w_hh.reshape(4 * Hp, Hp).T                               # (Hp, 4Hp)

    b = (params["b_ih"] + params["b_hh"]).reshape(4, H)
    b = jnp.pad(b, ((0, 0), (0, Hp - H))).reshape(1, 4 * Hp)         # (1, 4Hp)

    wfc1_t = jnp.pad(params["w_fc1"], ((0, 0), (0, Hp - H))).T       # (Hp, 256)
    bfc1 = params["b_fc1"].reshape(1, FC1_DIM)                       # (1, 256)
    # Lane-dense output: pad fc2 to 128 output columns, slice back below.
    wfc2_t = jnp.pad(params["w_fc2"], ((0, OUT_PAD - NUM_CLASSES), (0, 0))).T   # (256, 128)
    bfc2 = jnp.pad(params["b_fc2"], (0, OUT_PAD - NUM_CLASSES)).reshape(1, OUT_PAD)

    def full(arr):
        return pl.BlockSpec(arr.shape, lambda i, n=arr.ndim: (0,) * n)

    kernel = functools.partial(lstm_fc_kernel, seq=seq, batch=batch)

    out = pl.pallas_call(
        kernel,
        out_shape=jax.ShapeDtypeStruct((seq * batch, OUT_PAD), jnp.float32),
        grid_spec=pltpu.PrefetchScalarGridSpec(
            num_scalar_prefetch=0,
            grid=(1,),                                   # single invocation; loop is in-kernel
            in_specs=[full(emb_flat), full(wih_t), full(whh_t), full(b),
                      full(wfc1_t), full(bfc1), full(wfc2_t), full(bfc2)],
            out_specs=pl.BlockSpec((seq * batch, OUT_PAD), lambda i: (0, 0)),
            scratch_shapes=[
                pltpu.VMEM((seq * batch, 4 * Hp), jnp.float32),   # batched input projections
                pltpu.VMEM((seq * batch, Hp), jnp.float32),       # all h_t for batched fc
            ],
        ),
        compiler_params=pltpu.CompilerParams(dimension_semantics=("arbitrary",)),
    )(emb_flat, wih_t, whh_t, b, wfc1_t, bfc1, wfc2_t, bfc2)

    return out.reshape(seq, batch, OUT_PAD)[..., :NUM_CLASSES]


def make_params(key):
    keys = jax.random.split(key, 9)
    scale = 0.1
    return {
        "embedding": scale * jax.random.normal(keys[0], (VOCAB_SIZE, EMBED_DIM), jnp.float32),
        "w_ih": scale * jax.random.normal(keys[1], (4 * HIDDEN, EMBED_DIM), jnp.float32),
        "w_hh": scale * jax.random.normal(keys[2], (4 * HIDDEN, HIDDEN), jnp.float32),
        "b_ih": scale * jax.random.normal(keys[3], (4 * HIDDEN,), jnp.float32),
        "b_hh": scale * jax.random.normal(keys[4], (4 * HIDDEN,), jnp.float32),
        "w_fc1": scale * jax.random.normal(keys[5], (FC1_DIM, HIDDEN), jnp.float32),
        "b_fc1": scale * jax.random.normal(keys[6], (FC1_DIM,), jnp.float32),
        "w_fc2": scale * jax.random.normal(keys[7], (NUM_CLASSES, FC1_DIM), jnp.float32),
        "b_fc2": scale * jax.random.normal(keys[8], (NUM_CLASSES,), jnp.float32),
    }


def reference_forward(tokens, p):
    emb = jnp.take(p["embedding"], tokens, axis=0)       # (seq, batch, E)
    batch = tokens.shape[1]
    b = p["b_ih"] + p["b_hh"]

    def step(carry, x_t):
        h, c = carry
        gates = x_t @ p["w_ih"].T + h @ p["w_hh"].T + b
        i = jax.nn.sigmoid(gates[:, 0:HIDDEN])
        f = jax.nn.sigmoid(gates[:, HIDDEN:2 * HIDDEN])
        g = jnp.tanh(gates[:, 2 * HIDDEN:3 * HIDDEN])
        o = jax.nn.sigmoid(gates[:, 3 * HIDDEN:4 * HIDDEN])
        c = f * c + i * g
        h = o * jnp.tanh(c)
        return (h, c), h

    init = (jnp.zeros((batch, HIDDEN), jnp.float32),
            jnp.zeros((batch, HIDDEN), jnp.float32))
    _, hs = jax.lax.scan(step, init, emb)
    z = jnp.maximum(hs @ p["w_fc1"].T + p["b_fc1"], 0.0)
    return z @ p["w_fc2"].T + p["b_fc2"]


if __name__ == "__main__":
    key = jax.random.PRNGKey(0)
    pkey, tkey = jax.random.split(key)
    params = make_params(pkey)

    seq_len, batch = 8, 2
    tokens = jax.random.randint(tkey, (seq_len, batch), 0, VOCAB_SIZE, dtype=jnp.int32)

    out = net_forward(tokens, params)
    out = jax.block_until_ready(out)
    assert out.shape == (seq_len, batch, NUM_CLASSES), out.shape

    ref = jax.block_until_ready(reference_forward(tokens, params))
    assert jnp.allclose(out, ref, atol=1e-4, rtol=1e-4), float(jnp.max(jnp.abs(out - ref)))

    print("KERNEL_OK")
</pallas_src>

<mosaic_0001>
module attributes {stable_mosaic.version = 11 : i64} {
  func.func @lstm_fc_kernel(%arg0: i32, %arg1: memref<16x128xf32, #tpu.memory_space<vmem>>, %arg2: memref<128x1024xf32, #tpu.memory_space<vmem>>, %arg3: memref<256x1024xf32, #tpu.memory_space<vmem>>, %arg4: memref<1x1024xf32, #tpu.memory_space<vmem>>, %arg5: memref<256x256xf32, #tpu.memory_space<vmem>>, %arg6: memref<1x256xf32, #tpu.memory_space<vmem>>, %arg7: memref<256x128xf32, #tpu.memory_space<vmem>>, %arg8: memref<1x128xf32, #tpu.memory_space<vmem>>, %arg9: memref<16x128xf32, #tpu.memory_space<vmem>>, %arg10: memref<16x1024xf32, #tpu.memory_space<vmem>>, %arg11: memref<16x256xf32, #tpu.memory_space<vmem>>) attributes {dimension_semantics = [#tpu.dimension_semantics<arbitrary>], iteration_bounds = array<i64: 1>, scalar_prefetch = 0 : i64, scratch_operands = 2 : i64, tpu.core_type = #tpu.core_type<tc>, window_params = [{pipeline_mode = #tpu.pipeline_mode<synchronous>, transform_indices = @transform_0, window_bounds = array<i64: 16, 128>}, {pipeline_mode = #tpu.pipeline_mode<synchronous>, transform_indices = @transform_1, window_bounds = array<i64: 128, 1024>}, {pipeline_mode = #tpu.pipeline_mode<synchronous>, transform_indices = @transform_2, window_bounds = array<i64: 256, 1024>}, {pipeline_mode = #tpu.pipeline_mode<synchronous>, transform_indices = @transform_3, window_bounds = array<i64: 1, 1024>}, {pipeline_mode = #tpu.pipeline_mode<synchronous>, transform_indices = @transform_4, window_bounds = array<i64: 256, 256>}, {pipeline_mode = #tpu.pipeline_mode<synchronous>, transform_indices = @transform_5, window_bounds = array<i64: 1, 256>}, {pipeline_mode = #tpu.pipeline_mode<synchronous>, transform_indices = @transform_6, window_bounds = array<i64: 256, 128>}, {pipeline_mode = #tpu.pipeline_mode<synchronous>, transform_indices = @transform_7, window_bounds = array<i64: 1, 128>}, {pipeline_mode = #tpu.pipeline_mode<synchronous>, transform_indices = @transform_8, window_bounds = array<i64: 16, 128>}]} {
    %c0 = arith.constant 0 : index
    %c0_0 = arith.constant 0 : index
    %0 = vector.load %arg3[%c0, %c0_0] : memref<256x1024xf32, #tpu.memory_space<vmem>>, vector<256x1024xf32>
    %c0_1 = arith.constant 0 : index
    %c0_2 = arith.constant 0 : index
    %1 = vector.load %arg1[%c0_1, %c0_2] : memref<16x128xf32, #tpu.memory_space<vmem>>, vector<16x128xf32>
    %c0_3 = arith.constant 0 : index
    %c0_4 = arith.constant 0 : index
    %2 = vector.load %arg2[%c0_3, %c0_4] : memref<128x1024xf32, #tpu.memory_space<vmem>>, vector<128x1024xf32>
    %cst = arith.constant dense<0.000000e+00> : vector<16x1024xf32>
    %3 = tpu.matmul %1, %2, %cst {dimension_numbers = #tpu.dot_dimension_numbers<[1], [0], [0], [1], [0, 0, 1, 1], [], []>} : vector<16x128xf32>, vector<128x1024xf32>, vector<16x1024xf32> -> vector<16x1024xf32>
    %c0_5 = arith.constant 0 : index
    %c0_6 = arith.constant 0 : index
    %4 = vector.load %arg4[%c0_5, %c0_6] : memref<1x1024xf32, #tpu.memory_space<vmem>>, vector<1x1024xf32>
    %5 = vector.broadcast %4 : vector<1x1024xf32> to vector<16x1024xf32>
    %6 = arith.addf %3, %5 : vector<16x1024xf32>
    %c0_7 = arith.constant 0 : index
    %c0_8 = arith.constant 0 : index
    %7 = vector.load %arg10[%c0_7, %c0_8] : memref<16x1024xf32, #tpu.memory_space<vmem>>, vector<16x1024xf32>
    tpu.vector_store %arg10[%c0_7, %c0_8], %6 {strides = array<i32>} : memref<16x1024xf32, #tpu.memory_space<vmem>>, vector<16x1024xf32>,
    %cst_9 = arith.constant 0.000000e+00 : f32
    %8 = vector.broadcast %cst_9 : f32 to vector<2x256xf32>
    %cst_10 = arith.constant 0.000000e+00 : f32
    %9 = vector.broadcast %cst_10 : f32 to vector<2x256xf32>
    %c0_11 = arith.constant 0 : index
    %c0_12 = arith.constant 0 : index
    %10 = vector.load %arg10[%c0_11, %c0_12] : memref<16x1024xf32, #tpu.memory_space<vmem>>, vector<2x1024xf32>
    %cst_13 = arith.constant dense<0.000000e+00> : vector<2x1024xf32>
    %11 = tpu.matmul %8, %0, %cst_13 {dimension_numbers = #tpu.dot_dimension_numbers<[1], [0], [0], [1], [0, 0, 1, 1], [], []>} : vector<2x256xf32>, vector<256x1024xf32>, vector<2x1024xf32> -> vector<2x1024xf32>
    %12 = arith.addf %10, %11 : vector<2x1024xf32>
    %13 = vector.extract_strided_slice %12 {offsets = [0, 0], sizes = [2, 256], strides = [1, 1]} : vector<2x1024xf32> to vector<2x256xf32>
    %14 = arith.negf %13 : vector<2x256xf32>
    %15 = math.exp %14 : vector<2x256xf32>
    %cst_14 = arith.constant 1.000000e+00 : f32
    %16 = vector.broadcast %cst_14 : f32 to vector<2x256xf32>
    %17 = arith.addf %16, %15 : vector<2x256xf32>
    %18 = arith.divf %16, %17 : vector<2x256xf32>
    %19 = vector.extract_strided_slice %12 {offsets = [0, 256], sizes = [2, 256], strides = [1, 1]} : vector<2x1024xf32> to vector<2x256xf32>
    %20 = arith.negf %19 : vector<2x256xf32>
    %21 = math.exp %20 : vector<2x256xf32>
    %cst_15 = arith.constant 1.000000e+00 : f32
    %22 = vector.broadcast %cst_15 : f32 to vector<2x256xf32>
    %23 = arith.addf %22, %21 : vector<2x256xf32>
    %24 = arith.divf %22, %23 : vector<2x256xf32>
    %25 = vector.extract_strided_slice %12 {offsets = [0, 512], sizes = [2, 256], strides = [1, 1]} : vector<2x1024xf32> to vector<2x256xf32>
    %26 = math.tanh %25 : vector<2x256xf32>
    %27 = vector.extract_strided_slice %12 {offsets = [0, 768], sizes = [2, 256], strides = [1, 1]} : vector<2x1024xf32> to vector<2x256xf32>
    %28 = arith.negf %27 : vector<2x256xf32>
    %29 = math.exp %28 : vector<2x256xf32>
    %cst_16 = arith.constant 1.000000e+00 : f32
    %30 = vector.broadcast %cst_16 : f32 to vector<2x256xf32>
    %31 = arith.addf %30, %29 : vector<2x256xf32>
    %32 = arith.divf %30, %31 : vector<2x256xf32>
    %33 = arith.mulf %24, %9 : vector<2x256xf32>
    %34 = arith.mulf %18, %26 : vector<2x256xf32>
    %35 = arith.addf %33, %34 : vector<2x256xf32>
    %36 = math.tanh %35 : vector<2x256xf32>
    %37 = arith.mulf %32, %36 : vector<2x256xf32>
    %c0_17 = arith.constant 0 : index
    %c0_18 = arith.constant 0 : index
    %38 = vector.load %arg11[%c0_17, %c0_18] : memref<16x256xf32, #tpu.memory_space<vmem>>, vector<2x256xf32>
    tpu.vector_store %arg11[%c0_17, %c0_18], %37 {strides = array<i32>} : memref<16x256xf32, #tpu.memory_space<vmem>>, vector<2x256xf32>,
    %c2 = arith.constant 2 : index
    %c0_19 = arith.constant 0 : index
    %39 = vector.load %arg10[%c2, %c0_19] : memref<16x1024xf32, #tpu.memory_space<vmem>>, vector<2x1024xf32>
    %cst_20 = arith.constant dense<0.000000e+00> : vector<2x1024xf32>
    %40 = tpu.matmul %37, %0, %cst_20 {dimension_numbers = #tpu.dot_dimension_numbers<[1], [0], [0], [1], [0, 0, 1, 1], [], []>} : vector<2x256xf32>, vector<256x1024xf32>, vector<2x1024xf32> -> vector<2x1024xf32>
    %41 = arith.addf %39, %40 : vector<2x1024xf32>
    %42 = vector.extract_strided_slice %41 {offsets = [0, 0], sizes = [2, 256], strides = [1, 1]} : vector<2x1024xf32> to vector<2x256xf32>
    %43 = arith.negf %42 : vector<2x256xf32>
    %44 = math.exp %43 : vector<2x256xf32>
    %cst_21 = arith.constant 1.000000e+00 : f32
    %45 = vector.broadcast %cst_21 : f32 to vector<2x256xf32>
    %46 = arith.addf %45, %44 : vector<2x256xf32>
    %47 = arith.divf %45, %46 : vector<2x256xf32>
    %48 = vector.extract_strided_slice %41 {offsets = [0, 256], sizes = [2, 256], strides = [1, 1]} : vector<2x1024xf32> to vector<2x256xf32>
    %49 = arith.negf %48 : vector<2x256xf32>
    %50 = math.exp %49 : vector<2x256xf32>
    %cst_22 = arith.constant 1.000000e+00 : f32
    %51 = vector.broadcast %cst_22 : f32 to vector<2x256xf32>
    %52 = arith.addf %51, %50 : vector<2x256xf32>
    %53 = arith.divf %51, %52 : vector<2x256xf32>
    %54 = vector.extract_strided_slice %41 {offsets = [0, 512], sizes = [2, 256], strides = [1, 1]} : vector<2x1024xf32> to vector<2x256xf32>
    %55 = math.tanh %54 : vector<2x256xf32>
    %56 = vector.extract_strided_slice %41 {offsets = [0, 768], sizes = [2, 256], strides = [1, 1]} : vector<2x1024xf32> to vector<2x256xf32>
    %57 = arith.negf %56 : vector<2x256xf32>
    %58 = math.exp %57 : vector<2x256xf32>
    %cst_23 = arith.constant 1.000000e+00 : f32
    %59 = vector.broadcast %cst_23 : f32 to vector<2x256xf32>
    %60 = arith.addf %59, %58 : vector<2x256xf32>
    %61 = arith.divf %59, %60 : vector<2x256xf32>
    %62 = arith.mulf %53, %35 : vector<2x256xf32>
    %63 = arith.mulf %47, %55 : vector<2x256xf32>
    %64 = arith.addf %62, %63 : vector<2x256xf32>
    %65 = math.tanh %64 : vector<2x256xf32>
    %66 = arith.mulf %61, %65 : vector<2x256xf32>
    %c2_24 = arith.constant 2 : index
    %c0_25 = arith.constant 0 : index
    %67 = vector.load %arg11[%c2_24, %c0_25] : memref<16x256xf32, #tpu.memory_space<vmem>>, vector<2x256xf32>
    tpu.vector_store %arg11[%c2_24, %c0_25], %66 {strides = array<i32>} : memref<16x256xf32, #tpu.memory_space<vmem>>, vector<2x256xf32>,
    %c4 = arith.constant 4 : index
    %c0_26 = arith.constant 0 : index
    %68 = vector.load %arg10[%c4, %c0_26] : memref<16x1024xf32, #tpu.memory_space<vmem>>, vector<2x1024xf32>
    %cst_27 = arith.constant dense<0.000000e+00> : vector<2x1024xf32>
    %69 = tpu.matmul %66, %0, %cst_27 {dimension_numbers = #tpu.dot_dimension_numbers<[1], [0], [0], [1], [0, 0, 1, 1], [], []>} : vector<2x256xf32>, vector<256x1024xf32>, vector<2x1024xf32> -> vector<2x1024xf32>
    %70 = arith.addf %68, %69 : vector<2x1024xf32>
    %71 = vector.extract_strided_slice %70 {offsets = [0, 0], sizes = [2, 256], strides = [1, 1]} : vector<2x1024xf32> to vector<2x256xf32>
    %72 = arith.negf %71 : vector<2x256xf32>
    %73 = math.exp %72 : vector<2x256xf32>
    %cst_28 = arith.constant 1.000000e+00 : f32
    %74 = vector.broadcast %cst_28 : f32 to vector<2x256xf32>
    %75 = arith.addf %74, %73 : vector<2x256xf32>
    %76 = arith.divf %74, %75 : vector<2x256xf32>
    %77 = vector.extract_strided_slice %70 {offsets = [0, 256], sizes = [2, 256], strides = [1, 1]} : vector<2x1024xf32> to vector<2x256xf32>
    %78 = arith.negf %77 : vector<2x256xf32>
    %79 = math.exp %78 : vector<2x256xf32>
    %cst_29 = arith.constant 1.000000e+00 : f32
    %80 = vector.broadcast %cst_29 : f32 to vector<2x256xf32>
    %81 = arith.addf %80, %79 : vector<2x256xf32>
    %82 = arith.divf %80, %81 : vector<2x256xf32>
    %83 = vector.extract_strided_slice %70 {offsets = [0, 512], sizes = [2, 256], strides = [1, 1]} : vector<2x1024xf32> to vector<2x256xf32>
    %84 = math.tanh %83 : vector<2x256xf32>
    %85 = vector.extract_strided_slice %70 {offsets = [0, 768], sizes = [2, 256], strides = [1, 1]} : vector<2x1024xf32> to vector<2x256xf32>
    %86 = arith.negf %85 : vector<2x256xf32>
    %87 = math.exp %86 : vector<2x256xf32>
    %cst_30 = arith.constant 1.000000e+00 : f32
    %88 = vector.broadcast %cst_30 : f32 to vector<2x256xf32>
    %89 = arith.addf %88, %87 : vector<2x256xf32>
    %90 = arith.divf %88, %89 : vector<2x256xf32>
    %91 = arith.mulf %82, %64 : vector<2x256xf32>
    %92 = arith.mulf %76, %84 : vector<2x256xf32>
    %93 = arith.addf %91, %92 : vector<2x256xf32>
    %94 = math.tanh %93 : vector<2x256xf32>
    %95 = arith.mulf %90, %94 : vector<2x256xf32>
    %c4_31 = arith.constant 4 : index
    %c0_32 = arith.constant 0 : index
    %96 = vector.load %arg11[%c4_31, %c0_32] : memref<16x256xf32, #tpu.memory_space<vmem>>, vector<2x256xf32>
    tpu.vector_store %arg11[%c4_31, %c0_32], %95 {strides = array<i32>} : memref<16x256xf32, #tpu.memory_space<vmem>>, vector<2x256xf32>,
    %c6 = arith.constant 6 : index
    %c0_33 = arith.constant 0 : index
    %97 = vector.load %arg10[%c6, %c0_33] : memref<16x1024xf32, #tpu.memory_space<vmem>>, vector<2x1024xf32>
    %cst_34 = arith.constant dense<0.000000e+00> : vector<2x1024xf32>
    %98 = tpu.matmul %95, %0, %cst_34 {dimension_numbers = #tpu.dot_dimension_numbers<[1], [0], [0], [1], [0, 0, 1, 1], [], []>} : vector<2x256xf32>, vector<256x1024xf32>, vector<2x1024xf32> -> vector<2x1024xf32>
    %99 = arith.addf %97, %98 : vector<2x1024xf32>
    %100 = vector.extract_strided_slice %99 {offsets = [0, 0], sizes = [2, 256], strides = [1, 1]} : vector<2x1024xf32> to vector<2x256xf32>
    %101 = arith.negf %100 : vector<2x256xf32>
    %102 = math.exp %101 : vector<2x256xf32>
    %cst_35 = arith.constant 1.000000e+00 : f32
    %103 = vector.broadcast %cst_35 : f32 to vector<2x256xf32>
    %104 = arith.addf %103, %102 : vector<2x256xf32>
    %105 = arith.divf %103, %104 : vector<2x256xf32>
    %106 = vector.extract_strided_slice %99 {offsets = [0, 256], sizes = [2, 256], strides = [1, 1]} : vector<2x1024xf32> to vector<2x256xf32>
    %107 = arith.negf %106 : vector<2x256xf32>
    %108 = math.exp %107 : vector<2x256xf32>
    %cst_36 = arith.constant 1.000000e+00 : f32
    %109 = vector.broadcast %cst_36 : f32 to vector<2x256xf32>
    %110 = arith.addf %109, %108 : vector<2x256xf32>
    %111 = arith.divf %109, %110 : vector<2x256xf32>
    %112 = vector.extract_strided_slice %99 {offsets = [0, 512], sizes = [2, 256], strides = [1, 1]} : vector<2x1024xf32> to vector<2x256xf32>
    %113 = math.tanh %112 : vector<2x256xf32>
    %114 = vector.extract_strided_slice %99 {offsets = [0, 768], sizes = [2, 256], strides = [1, 1]} : vector<2x1024xf32> to vector<2x256xf32>
    %115 = arith.negf %114 : vector<2x256xf32>
    %116 = math.exp %115 : vector<2x256xf32>
    %cst_37 = arith.constant 1.000000e+00 : f32
    %117 = vector.broadcast %cst_37 : f32 to vector<2x256xf32>
    %118 = arith.addf %117, %116 : vector<2x256xf32>
    %119 = arith.divf %117, %118 : vector<2x256xf32>
    %120 = arith.mulf %111, %93 : vector<2x256xf32>
    %121 = arith.mulf %105, %113 : vector<2x256xf32>
    %122 = arith.addf %120, %121 : vector<2x256xf32>
    %123 = math.tanh %122 : vector<2x256xf32>
    %124 = arith.mulf %119, %123 : vector<2x256xf32>
    %c6_38 = arith.constant 6 : index
    %c0_39 = arith.constant 0 : index
    %125 = vector.load %arg11[%c6_38, %c0_39] : memref<16x256xf32, #tpu.memory_space<vmem>>, vector<2x256xf32>
    tpu.vector_store %arg11[%c6_38, %c0_39], %124 {strides = array<i32>} : memref<16x256xf32, #tpu.memory_space<vmem>>, vector<2x256xf32>,
    %c8 = arith.constant 8 : index
    %c0_40 = arith.constant 0 : index
    %126 = vector.load %arg10[%c8, %c0_40] : memref<16x1024xf32, #tpu.memory_space<vmem>>, vector<2x1024xf32>
    %cst_41 = arith.constant dense<0.000000e+00> : vector<2x1024xf32>
    %127 = tpu.matmul %124, %0, %cst_41 {dimension_numbers = #tpu.dot_dimension_numbers<[1], [0], [0], [1], [0, 0, 1, 1], [], []>} : vector<2x256xf32>, vector<256x1024xf32>, vector<2x1024xf32> -> vector<2x1024xf32>
    %128 = arith.addf %126, %127 : vector<2x1024xf32>
    %129 = vector.extract_strided_slice %128 {offsets = [0, 0], sizes = [2, 256], strides = [1, 1]} : vector<2x1024xf32> to vector<2x256xf32>
    %130 = arith.negf %129 : vector<2x256xf32>
    %131 = math.exp %130 : vector<2x256xf32>
    %cst_42 = arith.constant 1.000000e+00 : f32
    %132 = vector.broadcast %cst_42 : f32 to vector<2x256xf32>
    %133 = arith.addf %132, %131 : vector<2x256xf32>
    %134 = arith.divf %132, %133 : vector<2x256xf32>
    %135 = vector.extract_strided_slice %128 {offsets = [0, 256], sizes = [2, 256], strides = [1, 1]} : vector<2x1024xf32> to vector<2x256xf32>
    %136 = arith.negf %135 : vector<2x256xf32>
    %137 = math.exp %136 : vector<2x256xf32>
    %cst_43 = arith.constant 1.000000e+00 : f32
    %138 = vector.broadcast %cst_43 : f32 to vector<2x256xf32>
    %139 = arith.addf %138, %137 : vector<2x256xf32>
    %140 = arith.divf %138, %139 : vector<2x256xf32>
    %141 = vector.extract_strided_slice %128 {offsets = [0, 512], sizes = [2, 256], strides = [1, 1]} : vector<2x1024xf32> to vector<2x256xf32>
    %142 = math.tanh %141 : vector<2x256xf32>
    %143 = vector.extract_strided_slice %128 {offsets = [0, 768], sizes = [2, 256], strides = [1, 1]} : vector<2x1024xf32> to vector<2x256xf32>
    %144 = arith.negf %143 : vector<2x256xf32>
    %145 = math.exp %144 : vector<2x256xf32>
    %cst_44 = arith.constant 1.000000e+00 : f32
    %146 = vector.broadcast %cst_44 : f32 to vector<2x256xf32>
    %147 = arith.addf %146, %145 : vector<2x256xf32>
    %148 = arith.divf %146, %147 : vector<2x256xf32>
    %149 = arith.mulf %140, %122 : vector<2x256xf32>
    %150 = arith.mulf %134, %142 : vector<2x256xf32>
    %151 = arith.addf %149, %150 : vector<2x256xf32>
    %152 = math.tanh %151 : vector<2x256xf32>
    %153 = arith.mulf %148, %152 : vector<2x256xf32>
    %c8_45 = arith.constant 8 : index
    %c0_46 = arith.constant 0 : index
    %154 = vector.load %arg11[%c8_45, %c0_46] : memref<16x256xf32, #tpu.memory_space<vmem>>, vector<2x256xf32>
    tpu.vector_store %arg11[%c8_45, %c0_46], %153 {strides = array<i32>} : memref<16x256xf32, #tpu.memory_space<vmem>>, vector<2x256xf32>,
    %c10 = arith.constant 10 : index
    %c0_47 = arith.constant 0 : index
    %155 = vector.load %arg10[%c10, %c0_47] : memref<16x1024xf32, #tpu.memory_space<vmem>>, vector<2x1024xf32>
    %cst_48 = arith.constant dense<0.000000e+00> : vector<2x1024xf32>
    %156 = tpu.matmul %153, %0, %cst_48 {dimension_numbers = #tpu.dot_dimension_numbers<[1], [0], [0], [1], [0, 0, 1, 1], [], []>} : vector<2x256xf32>, vector<256x1024xf32>, vector<2x1024xf32> -> vector<2x1024xf32>
    %157 = arith.addf %155, %156 : vector<2x1024xf32>
    %158 = vector.extract_strided_slice %157 {offsets = [0, 0], sizes = [2, 256], strides = [1, 1]} : vector<2x1024xf32> to vector<2x256xf32>
    %159 = arith.negf %158 : vector<2x256xf32>
    %160 = math.exp %159 : vector<2x256xf32>
    %cst_49 = arith.constant 1.000000e+00 : f32
    %161 = vector.broadcast %cst_49 : f32 to vector<2x256xf32>
    %162 = arith.addf %161, %160 : vector<2x256xf32>
    %163 = arith.divf %161, %162 : vector<2x256xf32>
    %164 = vector.extract_strided_slice %157 {offsets = [0, 256], sizes = [2, 256], strides = [1, 1]} : vector<2x1024xf32> to vector<2x256xf32>
    %165 = arith.negf %164 : vector<2x256xf32>
    %166 = math.exp %165 : vector<2x256xf32>
    %cst_50 = arith.constant 1.000000e+00 : f32
    %167 = vector.broadcast %cst_50 : f32 to vector<2x256xf32>
    %168 = arith.addf %167, %166 : vector<2x256xf32>
    %169 = arith.divf %167, %168 : vector<2x256xf32>
    %170 = vector.extract_strided_slice %157 {offsets = [0, 512], sizes = [2, 256], strides = [1, 1]} : vector<2x1024xf32> to vector<2x256xf32>
    %171 = math.tanh %170 : vector<2x256xf32>
    %172 = vector.extract_strided_slice %157 {offsets = [0, 768], sizes = [2, 256], strides = [1, 1]} : vector<2x1024xf32> to vector<2x256xf32>
    %173 = arith.negf %172 : vector<2x256xf32>
    %174 = math.exp %173 : vector<2x256xf32>
    %cst_51 = arith.constant 1.000000e+00 : f32
    %175 = vector.broadcast %cst_51 : f32 to vector<2x256xf32>
    %176 = arith.addf %175, %174 : vector<2x256xf32>
    %177 = arith.divf %175, %176 : vector<2x256xf32>
    %178 = arith.mulf %169, %151 : vector<2x256xf32>
    %179 = arith.mulf %163, %171 : vector<2x256xf32>
    %180 = arith.addf %178, %179 : vector<2x256xf32>
    %181 = math.tanh %180 : vector<2x256xf32>
    %182 = arith.mulf %177, %181 : vector<2x256xf32>
    %c10_52 = arith.constant 10 : index
    %c0_53 = arith.constant 0 : index
    %183 = vector.load %arg11[%c10_52, %c0_53] : memref<16x256xf32, #tpu.memory_space<vmem>>, vector<2x256xf32>
    tpu.vector_store %arg11[%c10_52, %c0_53], %182 {strides = array<i32>} : memref<16x256xf32, #tpu.memory_space<vmem>>, vector<2x256xf32>,
    %c12 = arith.constant 12 : index
    %c0_54 = arith.constant 0 : index
    %184 = vector.load %arg10[%c12, %c0_54] : memref<16x1024xf32, #tpu.memory_space<vmem>>, vector<2x1024xf32>
    %cst_55 = arith.constant dense<0.000000e+00> : vector<2x1024xf32>
    %185 = tpu.matmul %182, %0, %cst_55 {dimension_numbers = #tpu.dot_dimension_numbers<[1], [0], [0], [1], [0, 0, 1, 1], [], []>} : vector<2x256xf32>, vector<256x1024xf32>, vector<2x1024xf32> -> vector<2x1024xf32>
    %186 = arith.addf %184, %185 : vector<2x1024xf32>
    %187 = vector.extract_strided_slice %186 {offsets = [0, 0], sizes = [2, 256], strides = [1, 1]} : vector<2x1024xf32> to vector<2x256xf32>
    %188 = arith.negf %187 : vector<2x256xf32>
    %189 = math.exp %188 : vector<2x256xf32>
    %cst_56 = arith.constant 1.000000e+00 : f32
    %190 = vector.broadcast %cst_56 : f32 to vector<2x256xf32>
    %191 = arith.addf %190, %189 : vector<2x256xf32>
    %192 = arith.divf %190, %191 : vector<2x256xf32>
    %193 = vector.extract_strided_slice %186 {offsets = [0, 256], sizes = [2, 256], strides = [1, 1]} : vector<2x1024xf32> to vector<2x256xf32>
    %194 = arith.negf %193 : vector<2x256xf32>
    %195 = math.exp %194 : vector<2x256xf32>
    %cst_57 = arith.constant 1.000000e+00 : f32
    %196 = vector.broadcast %cst_57 : f32 to vector<2x256xf32>
    %197 = arith.addf %196, %195 : vector<2x256xf32>
    %198 = arith.divf %196, %197 : vector<2x256xf32>
    %199 = vector.extract_strided_slice %186 {offsets = [0, 512], sizes = [2, 256], strides = [1, 1]} : vector<2x1024xf32> to vector<2x256xf32>
    %200 = math.tanh %199 : vector<2x256xf32>
    %201 = vector.extract_strided_slice %186 {offsets = [0, 768], sizes = [2, 256], strides = [1, 1]} : vector<2x1024xf32> to vector<2x256xf32>
    %202 = arith.negf %201 : vector<2x256xf32>
    %203 = math.exp %202 : vector<2x256xf32>
    %cst_58 = arith.constant 1.000000e+00 : f32
    %204 = vector.broadcast %cst_58 : f32 to vector<2x256xf32>
    %205 = arith.addf %204, %203 : vector<2x256xf32>
    %206 = arith.divf %204, %205 : vector<2x256xf32>
    %207 = arith.mulf %198, %180 : vector<2x256xf32>
    %208 = arith.mulf %192, %200 : vector<2x256xf32>
    %209 = arith.addf %207, %208 : vector<2x256xf32>
    %210 = math.tanh %209 : vector<2x256xf32>
    %211 = arith.mulf %206, %210 : vector<2x256xf32>
    %c12_59 = arith.constant 12 : index
    %c0_60 = arith.constant 0 : index
    %212 = vector.load %arg11[%c12_59, %c0_60] : memref<16x256xf32, #tpu.memory_space<vmem>>, vector<2x256xf32>
    tpu.vector_store %arg11[%c12_59, %c0_60], %211 {strides = array<i32>} : memref<16x256xf32, #tpu.memory_space<vmem>>, vector<2x256xf32>,
    %c14 = arith.constant 14 : index
    %c0_61 = arith.constant 0 : index
    %213 = vector.load %arg10[%c14, %c0_61] : memref<16x1024xf32, #tpu.memory_space<vmem>>, vector<2x1024xf32>
    %cst_62 = arith.constant dense<0.000000e+00> : vector<2x1024xf32>
    %214 = tpu.matmul %211, %0, %cst_62 {dimension_numbers = #tpu.dot_dimension_numbers<[1], [0], [0], [1], [0, 0, 1, 1], [], []>} : vector<2x256xf32>, vector<256x1024xf32>, vector<2x1024xf32> -> vector<2x1024xf32>
    %215 = arith.addf %213, %214 : vector<2x1024xf32>
    %216 = vector.extract_strided_slice %215 {offsets = [0, 0], sizes = [2, 256], strides = [1, 1]} : vector<2x1024xf32> to vector<2x256xf32>
    %217 = arith.negf %216 : vector<2x256xf32>
    %218 = math.exp %217 : vector<2x256xf32>
    %cst_63 = arith.constant 1.000000e+00 : f32
    %219 = vector.broadcast %cst_63 : f32 to vector<2x256xf32>
    %220 = arith.addf %219, %218 : vector<2x256xf32>
    %221 = arith.divf %219, %220 : vector<2x256xf32>
    %222 = vector.extract_strided_slice %215 {offsets = [0, 256], sizes = [2, 256], strides = [1, 1]} : vector<2x1024xf32> to vector<2x256xf32>
    %223 = arith.negf %222 : vector<2x256xf32>
    %224 = math.exp %223 : vector<2x256xf32>
    %cst_64 = arith.constant 1.000000e+00 : f32
    %225 = vector.broadcast %cst_64 : f32 to vector<2x256xf32>
    %226 = arith.addf %225, %224 : vector<2x256xf32>
    %227 = arith.divf %225, %226 : vector<2x256xf32>
    %228 = vector.extract_strided_slice %215 {offsets = [0, 512], sizes = [2, 256], strides = [1, 1]} : vector<2x1024xf32> to vector<2x256xf32>
    %229 = math.tanh %228 : vector<2x256xf32>
    %230 = vector.extract_strided_slice %215 {offsets = [0, 768], sizes = [2, 256], strides = [1, 1]} : vector<2x1024xf32> to vector<2x256xf32>
    %231 = arith.negf %230 : vector<2x256xf32>
    %232 = math.exp %231 : vector<2x256xf32>
    %cst_65 = arith.constant 1.000000e+00 : f32
    %233 = vector.broadcast %cst_65 : f32 to vector<2x256xf32>
    %234 = arith.addf %233, %232 : vector<2x256xf32>
    %235 = arith.divf %233, %234 : vector<2x256xf32>
    %236 = arith.mulf %227, %209 : vector<2x256xf32>
    %237 = arith.mulf %221, %229 : vector<2x256xf32>
    %238 = arith.addf %236, %237 : vector<2x256xf32>
    %239 = math.tanh %238 : vector<2x256xf32>
    %240 = arith.mulf %235, %239 : vector<2x256xf32>
    %c14_66 = arith.constant 14 : index
    %c0_67 = arith.constant 0 : index
    %241 = vector.load %arg11[%c14_66, %c0_67] : memref<16x256xf32, #tpu.memory_space<vmem>>, vector<2x256xf32>
    tpu.vector_store %arg11[%c14_66, %c0_67], %240 {strides = array<i32>} : memref<16x256xf32, #tpu.memory_space<vmem>>, vector<2x256xf32>,
    %c0_68 = arith.constant 0 : index
    %c0_69 = arith.constant 0 : index
    %242 = vector.load %arg11[%c0_68, %c0_69] : memref<16x256xf32, #tpu.memory_space<vmem>>, vector<16x256xf32>
    %c0_70 = arith.constant 0 : index
    %c0_71 = arith.constant 0 : index
    %243 = vector.load %arg5[%c0_70, %c0_71] : memref<256x256xf32, #tpu.memory_space<vmem>>, vector<256x256xf32>
    %cst_72 = arith.constant dense<0.000000e+00> : vector<16x256xf32>
    %244 = tpu.matmul %242, %243, %cst_72 {dimension_numbers = #tpu.dot_dimension_numbers<[1], [0], [0], [1], [0, 0, 1, 1], [], []>} : vector<16x256xf32>, vector<256x256xf32>, vector<16x256xf32> -> vector<16x256xf32>
    %c0_73 = arith.constant 0 : index
    %c0_74 = arith.constant 0 : index
    %245 = vector.load %arg6[%c0_73, %c0_74] : memref<1x256xf32, #tpu.memory_space<vmem>>, vector<1x256xf32>
    %246 = vector.broadcast %245 : vector<1x256xf32> to vector<16x256xf32>
    %247 = arith.addf %244, %246 : vector<16x256xf32>
    %cst_75 = arith.constant 0.000000e+00 : f32
    %248 = vector.broadcast %cst_75 : f32 to vector<16x256xf32>
    %249 = arith.maximumf %247, %248 : vector<16x256xf32>
    %c0_76 = arith.constant 0 : index
    %c0_77 = arith.constant 0 : index
    %250 = vector.load %arg7[%c0_76, %c0_77] : memref<256x128xf32, #tpu.memory_space<vmem>>, vector<256x128xf32>
    %cst_78 = arith.constant dense<0.000000e+00> : vector<16x128xf32>
    %251 = tpu.matmul %249, %250, %cst_78 {dimension_numbers = #tpu.dot_dimension_numbers<[1], [0], [0], [1], [0, 0, 1, 1], [], []>} : vector<16x256xf32>, vector<256x128xf32>, vector<16x128xf32> -> vector<16x128xf32>
    %c0_79 = arith.constant 0 : index
    %c0_80 = arith.constant 0 : index
    %252 = vector.load %arg8[%c0_79, %c0_80] : memref<1x128xf32, #tpu.memory_space<vmem>>, vector<1x128xf32>
    %253 = vector.broadcast %252 : vector<1x128xf32> to vector<16x128xf32>
    %254 = arith.addf %251, %253 : vector<16x128xf32>
    %c0_81 = arith.constant 0 : index
    %c0_82 = arith.constant 0 : index
    %255 = vector.load %arg9[%c0_81, %c0_82] : memref<16x128xf32, #tpu.memory_space<vmem>>, vector<16x128xf32>
    tpu.vector_store %arg9[%c0_81, %c0_82], %254 {strides = array<i32>} : memref<16x128xf32, #tpu.memory_space<vmem>>, vector<16x128xf32>,
    return
  }
  func.func @transform_0(%arg0: i32) -> (i32, i32) {
    %c0_i32 = arith.constant 0 : i32
    %c0_i32_0 = arith.constant 0 : i32
    %c0_i32_1 = arith.constant 0 : i32
    return %c0_i32, %c0_i32_0 : i32, i32
  }
  func.func @transform_1(%arg0: i32) -> (i32, i32) {
    %c0_i32 = arith.constant 0 : i32
    %c0_i32_0 = arith.constant 0 : i32
    %c0_i32_1 = arith.constant 0 : i32
    return %c0_i32, %c0_i32_0 : i32, i32
  }
  func.func @transform_2(%arg0: i32) -> (i32, i32) {
    %c0_i32 = arith.constant 0 : i32
    %c0_i32_0 = arith.constant 0 : i32
    %c0_i32_1 = arith.constant 0 : i32
    return %c0_i32, %c0_i32_0 : i32, i32
  }
  func.func @transform_3(%arg0: i32) -> (i32, i32) {
    %c0_i32 = arith.constant 0 : i32
    %c0_i32_0 = arith.constant 0 : i32
    %c0_i32_1 = arith.constant 0 : i32
    return %c0_i32, %c0_i32_0 : i32, i32
  }
  func.func @transform_4(%arg0: i32) -> (i32, i32) {
    %c0_i32 = arith.constant 0 : i32
    %c0_i32_0 = arith.constant 0 : i32
    %c0_i32_1 = arith.constant 0 : i32
    return %c0_i32, %c0_i32_0 : i32, i32
  }
  func.func @transform_5(%arg0: i32) -> (i32, i32) {
    %c0_i32 = arith.constant 0 : i32
    %c0_i32_0 = arith.constant 0 : i32
    %c0_i32_1 = arith.constant 0 : i32
    return %c0_i32, %c0_i32_0 : i32, i32
  }
  func.func @transform_6(%arg0: i32) -> (i32, i32) {
    %c0_i32 = arith.constant 0 : i32
    %c0_i32_0 = arith.constant 0 : i32
    %c0_i32_1 = arith.constant 0 : i32
    return %c0_i32, %c0_i32_0 : i32, i32
  }
  func.func @transform_7(%arg0: i32) -> (i32, i32) {
    %c0_i32 = arith.constant 0 : i32
    %c0_i32_0 = arith.constant 0 : i32
    %c0_i32_1 = arith.constant 0 : i32
    return %c0_i32, %c0_i32_0 : i32, i32
  }
  func.func @transform_8(%arg0: i32) -> (i32, i32) {
    %c0_i32 = arith.constant 0 : i32
    %c0_i32_0 = arith.constant 0 : i32
    %c0_i32_1 = arith.constant 0 : i32
    return %c0_i32, %c0_i32_0 : i32, i32
  }
}

</mosaic_0001>

<llo_original>
// kernel: tpu_custom_call.1
$region0: #{tpu_custom_call.1}
  #allocation0 [shape = 'u32[]', space=smem, size = 0x4, offset = 0x4, fixed_abs, tag = 'smem constant byte address 0x4 - core index']
  #allocation1 [shape = 'u32[144,128]{1,0:T(1,128)}', space=vmem, size = 0x12000, scoped, tag = 'internal scratch']
  #allocation2 [shape = 'f32[16,1024]{1,0:T(8,128)}', space=vmem, size = 0x10000, scoped, tag = 'scratch operand']
  #allocation3 [shape = 'f32[16,256]{1,0:T(8,128)}', space=vmem, size = 0x4000, scoped, tag = 'scratch operand']
  %s0 = inlined_call_operand.hbm [shape: f32[16,128], index: 0, kind: input, shape index: {}]
  %s1 = inlined_call_operand.hbm [shape: f32[128,1024], index: 1, kind: input, shape index: {}]
  %s2 = inlined_call_operand.hbm [shape: f32[256,1024], index: 2, kind: input, shape index: {}]
  %s3 = inlined_call_operand.vmem [shape: f32[1,1024], index: 3, kind: input, shape index: {}]
  %s4 = inlined_call_operand.hbm [shape: f32[256,256], index: 4, kind: input, shape index: {}]
  %s5 = inlined_call_operand.vmem [shape: f32[1,256], index: 5, kind: input, shape index: {}]
  %s6 = inlined_call_operand.hbm [shape: f32[256,128], index: 6, kind: input, shape index: {}]
  %s7 = inlined_call_operand.vmem [shape: f32[1,128], index: 7, kind: input, shape index: {}]
  %s8 = inlined_call_operand.hbm [shape: f32[16,128], index: 8, kind: output, shape index: {}]
  %s9 = sld [smem:[#allocation0]]
  $region62: #{tpu_custom_call.1} parent=0
    _
  %s11 = ssub.s32 1, %s9
  %s12 = scalar_select 0, %s11, %s9
  $region1: #{tpu_custom_call.1} parent=0
    #allocation4 [shape = 'u8[8192]{0}', space=vmem, size = 0x2000, scoped, tag = 'input window, operand 0, single buffered']
    #allocation5 [shape = 's32[1]{0}', space=sflag, size = 0x4, scoped, tag = 'scoped memory for tpu_custom_call.1']
    #allocation6 [shape = 's32[1]{0}', space=sflag, size = 0x4, scoped, tag = 'scoped memory for tpu_custom_call.1']
    #allocation7 [shape = 'u8[524288]{0}', space=vmem, size = 0x80000, scoped, tag = 'input window, operand 1, single buffered']
    #allocation8 [shape = 's32[1]{0}', space=sflag, size = 0x4, scoped, tag = 'scoped memory for tpu_custom_call.1']
    #allocation9 [shape = 'u8[1048576]{0}', space=vmem, size = 0x100000, scoped, tag = 'input window, operand 2, single buffered']
    #allocation10 [shape = 'u8[262144]{0}', space=vmem, size = 0x40000, scoped, tag = 'input window, operand 4, single buffered']
    #allocation11 [shape = 's32[1]{0}', space=sflag, size = 0x4, scoped, tag = 'scoped memory for tpu_custom_call.1']
    #allocation12 [shape = 'u8[131072]{0}', space=vmem, size = 0x20000, scoped, tag = 'input window, operand 6, single buffered']
    #allocation13 [shape = 'u8[8192]{0}', space=vmem, size = 0x2000, scoped, tag = 'output window, operand 0, single buffered']
    %13 = vsyncpa [#allocation5], 0
    %14 = vsyncpa [#allocation8], 0
    %15 = vsyncpa [#allocation11], 0
    %16 = vsyncpa [#allocation6], 0
    // Predicated region
    $region2: #{tpu_custom_call.1} parent=1 // pred_check
      _
    $region3: #{tpu_custom_call.1} parent=1 // pred_check_branch
      %18 = sbr.rel (0) target = $region5
    $region4: #{tpu_custom_call.1} parent=1 // pred_region
      %s20 = ssub.s32 256, 256
      %21 = vsyncadd [#allocation5], %s20
      %s22 = sshll.u32 [#allocation4], 4
      %s23 = int_to_ptr.vmem [resolvable:$true] %s22
      %28 = dma.hbm_to_vmem [thread:$0]  %s0, 256, %s23, [#allocation5], 128, 128, 8
    $region5: #{tpu_custom_call.1} parent=1 // pred_fallthru
      _
    // Predicated region
    $region6: #{tpu_custom_call.1} parent=1 // pred_check
      _
    $region7: #{tpu_custom_call.1} parent=1 // pred_check_branch
      %30 = sbr.rel (0) target = $region9
    $region8: #{tpu_custom_call.1} parent=1 // pred_region
      %s32 = ssub.s32 16384, 16384
      %33 = vsyncadd [#allocation8], %s32
      %s34 = sshll.u32 [#allocation7], 4
      %s35 = int_to_ptr.vmem [resolvable:$true] %s34
      %40 = dma.hbm_to_vmem [thread:$0]  %s1, 16384, %s35, [#allocation8], 1024, 1024, 64
    $region9: #{tpu_custom_call.1} parent=1 // pred_fallthru
      _
    // Predicated region
    $region10: #{tpu_custom_call.1} parent=1 // pred_check
      _
    $region11: #{tpu_custom_call.1} parent=1 // pred_check_branch
      %42 = sbr.rel (0) target = $region13
    $region12: #{tpu_custom_call.1} parent=1 // pred_region
      %s44 = ssub.s32 32768, 32768
      %45 = vsyncadd [#allocation8], %s44
      %s46 = sshll.u32 [#allocation9], 4
      %s47 = int_to_ptr.vmem [resolvable:$true] %s46
      %52 = dma.hbm_to_vmem [thread:$0]  %s2, 32768, %s47, [#allocation8], 1024, 1024, 64
    $region13: #{tpu_custom_call.1} parent=1 // pred_fallthru
      _
    // Predicated region
    $region14: #{tpu_custom_call.1} parent=1 // pred_check
      _
    $region15: #{tpu_custom_call.1} parent=1 // pred_check_branch
      %54 = sbr.rel (0) target = $region17
    $region16: #{tpu_custom_call.1} parent=1 // pred_region
      _
    $region17: #{tpu_custom_call.1} parent=1 // pred_fallthru
      _
    // Predicated region
    $region18: #{tpu_custom_call.1} parent=1 // pred_check
      _
    $region19: #{tpu_custom_call.1} parent=1 // pred_check_branch
      %56 = sbr.rel (0) target = $region21
    $region20: #{tpu_custom_call.1} parent=1 // pred_region
      %s58 = ssub.s32 8192, 8192
      %59 = vsyncadd [#allocation11], %s58
      %s60 = sshll.u32 [#allocation10], 4
      %s61 = int_to_ptr.vmem [resolvable:$true] %s60
      %66 = dma.hbm_to_vmem [thread:$0]  %s4, 8192, %s61, [#allocation11], 256, 256, 16
    $region21: #{tpu_custom_call.1} parent=1 // pred_fallthru
      _
    // Predicated region
    $region22: #{tpu_custom_call.1} parent=1 // pred_check
      _
    $region23: #{tpu_custom_call.1} parent=1 // pred_check_branch
      %68 = sbr.rel (0) target = $region25
    $region24: #{tpu_custom_call.1} parent=1 // pred_region
      _
    $region25: #{tpu_custom_call.1} parent=1 // pred_fallthru
      _
    // Predicated region
    $region26: #{tpu_custom_call.1} parent=1 // pred_check
      _
    $region27: #{tpu_custom_call.1} parent=1 // pred_check_branch
      %70 = sbr.rel (0) target = $region29
    $region28: #{tpu_custom_call.1} parent=1 // pred_region
      %s72 = ssub.s32 4096, 4096
      %73 = vsyncadd [#allocation11], %s72
      %s74 = sshll.u32 [#allocation12], 4
      %s75 = int_to_ptr.vmem [resolvable:$true] %s74
      %80 = dma.hbm_to_vmem [thread:$0]  %s6, 4096, %s75, [#allocation11], 128, 128, 8
    $region29: #{tpu_custom_call.1} parent=1 // pred_fallthru
      _
    // Predicated region
    $region30: #{tpu_custom_call.1} parent=1 // pred_check
      _
    $region31: #{tpu_custom_call.1} parent=1 // pred_check_branch
      %82 = sbr.rel (0) target = $region33
    $region32: #{tpu_custom_call.1} parent=1 // pred_region
      _
    $region33: #{tpu_custom_call.1} parent=1 // pred_fallthru
      _
    // Predicated region
    $region34: #{tpu_custom_call.1} parent=1 // pred_check
      _
    $region35: #{tpu_custom_call.1} parent=1 // pred_check_branch
      %84 = sbr.rel (0) target = $region37
    $region36: #{tpu_custom_call.1} parent=1 // pred_region
      %85 = dma.done [#allocation5], 256
    $region37: #{tpu_custom_call.1} parent=1 // pred_fallthru
      _
    // Predicated region
    $region38: #{tpu_custom_call.1} parent=1 // pred_check
      _
    $region39: #{tpu_custom_call.1} parent=1 // pred_check_branch
      %87 = sbr.rel (0) target = $region41
    $region40: #{tpu_custom_call.1} parent=1 // pred_region
      %88 = dma.done [#allocation8], 16384
    $region41: #{tpu_custom_call.1} parent=1 // pred_fallthru
      _
    // Predicated region
    $region42: #{tpu_custom_call.1} parent=1 // pred_check
      _
    $region43: #{tpu_custom_call.1} parent=1 // pred_check_branch
      %90 = sbr.rel (0) target = $region45
    $region44: #{tpu_custom_call.1} parent=1 // pred_region
      %91 = dma.done [#allocation8], 32768
    $region45: #{tpu_custom_call.1} parent=1 // pred_fallthru
      _
    // Predicated region
    $region46: #{tpu_custom_call.1} parent=1 // pred_check
      _
    $region47: #{tpu_custom_call.1} parent=1 // pred_check_branch
      %93 = sbr.rel (0) target = $region49
    $region48: #{tpu_custom_call.1} parent=1 // pred_region
      %94 = dma.done [#allocation11], 8192
    $region49: #{tpu_custom_call.1} parent=1 // pred_fallthru
      _
    // Predicated region
    $region50: #{tpu_custom_call.1} parent=1 // pred_check
      _
    $region51: #{tpu_custom_call.1} parent=1 // pred_check_branch
      %96 = sbr.rel (0) target = $region53
    $region52: #{tpu_custom_call.1} parent=1 // pred_region
      %97 = dma.done [#allocation11], 4096
    $region53: #{tpu_custom_call.1} parent=1 // pred_fallthru
      _
    %v98 = vld [vmem:[#allocation9] sm:$0xff]
    %v99 = vld [vmem:[#allocation9 + $0x8] sm:$0xff]
    %v100 = vld [vmem:[#allocation9 + $0x10] sm:$0xff]
    %v101 = vld [vmem:[#allocation9 + $0x18] sm:$0xff]
    %v102 = vld [vmem:[#allocation9 + $0x20] sm:$0xff]
    %v103 = vld [vmem:[#allocation9 + $0x28] sm:$0xff]
    %v104 = vld [vmem:[#allocation9 + $0x30] sm:$0xff]
    %v105 = vld [vmem:[#allocation9 + $0x38] sm:$0xff]
    %v106 = vld [vmem:[#allocation9 + $0x40] sm:$0xff]
    %v107 = vld [vmem:[#allocation9 + $0x48] sm:$0xff]
    %v108 = vld [vmem:[#allocation9 + $0x50] sm:$0xff]
    %v109 = vld [vmem:[#allocation9 + $0x58] sm:$0xff]
    %v110 = vld [vmem:[#allocation9 + $0x60] sm:$0xff]
    %v111 = vld [vmem:[#allocation9 + $0x68] sm:$0xff]
    %v112 = vld [vmem:[#allocation9 + $0x70] sm:$0xff]
    %v113 = vld [vmem:[#allocation9 + $0x78] sm:$0xff]
    %v114 = vld [vmem:[#allocation9 + $0x80] sm:$0xff]
    %v115 = vld [vmem:[#allocation9 + $0x88] sm:$0xff]
    %v116 = vld [vmem:[#allocation9 + $0x90] sm:$0xff]
    %v117 = vld [vmem:[#allocation9 + $0x98] sm:$0xff]
    %v118 = vld [vmem:[#allocation9 + $0xa0] sm:$0xff]
    %v119 = vld [vmem:[#allocation9 + $0xa8] sm:$0xff]
    %v120 = vld [vmem:[#allocation9 + $0xb0] sm:$0xff]
    %v121 = vld [vmem:[#allocation9 + $0xb8] sm:$0xff]
    %v122 = vld [vmem:[#allocation9 + $0xc0] sm:$0xff]
    %v123 = vld [vmem:[#allocation9 + $0xc8] sm:$0xff]
    %v124 = vld [vmem:[#allocation9 + $0xd0] sm:$0xff]
    %v125 = vld [vmem:[#allocation9 + $0xd8] sm:$0xff]
    %v126 = vld [vmem:[#allocation9 + $0xe0] sm:$0xff]
    %v127 = vld [vmem:[#allocation9 + $0xe8] sm:$0xff]
    %v128 = vld [vmem:[#allocation9 + $0xf0] sm:$0xff]
    %v129 = vld [vmem:[#allocation9 + $0xf8] sm:$0xff]
    %v130 = vld [vmem:[#allocation9 + $0x100] sm:$0xff]
    %v131 = vld [vmem:[#allocation9 + $0x108] sm:$0xff]
    %v132 = vld [vmem:[#allocation9 + $0x110] sm:$0xff]
    %v133 = vld [vmem:[#allocation9 + $0x118] sm:$0xff]
    %v134 = vld [vmem:[#allocation9 + $0x120] sm:$0xff]
    %v135 = vld [vmem:[#allocation9 + $0x128] sm:$0xff]
    %v136 = vld [vmem:[#allocation9 + $0x130] sm:$0xff]
    %v137 = vld [vmem:[#allocation9 + $0x138] sm:$0xff]
    %v138 = vld [vmem:[#allocation9 + $0x140] sm:$0xff]
    %v139 = vld [vmem:[#allocation9 + $0x148] sm:$0xff]
    %v140 = vld [vmem:[#allocation9 + $0x150] sm:$0xff]
    %v141 = vld [vmem:[#allocation9 + $0x158] sm:$0xff]
    %v142 = vld [vmem:[#allocation9 + $0x160] sm:$0xff]
    %v143 = vld [vmem:[#allocation9 + $0x168] sm:$0xff]
    %v144 = vld [vmem:[#allocation9 + $0x170] sm:$0xff]
    %v145 = vld [vmem:[#allocation9 + $0x178] sm:$0xff]
    %v146 = vld [vmem:[#allocation9 + $0x180] sm:$0xff]
    %v147 = vld [vmem:[#allocation9 + $0x188] sm:$0xff]
    %v148 = vld [vmem:[#allocation9 + $0x190] sm:$0xff]
    %v149 = vld [vmem:[#allocation9 + $0x198] sm:$0xff]
    %v150 = vld [vmem:[#allocation9 + $0x1a0] sm:$0xff]
    %v151 = vld [vmem:[#allocation9 + $0x1a8] sm:$0xff]
    %v152 = vld [vmem:[#allocation9 + $0x1b0] sm:$0xff]
    %v153 = vld [vmem:[#allocation9 + $0x1b8] sm:$0xff]
    %v154 = vld [vmem:[#allocation9 + $0x1c0] sm:$0xff]
    %v155 = vld [vmem:[#allocation9 + $0x1c8] sm:$0xff]
    %v156 = vld [vmem:[#allocation9 + $0x1d0] sm:$0xff]
    %v157 = vld [vmem:[#allocation9 + $0x1d8] sm:$0xff]
    %v158 = vld [vmem:[#allocation9 + $0x1e0] sm:$0xff]
    %v159 = vld [vmem:[#allocation9 + $0x1e8] sm:$0xff]
    %v160 = vld [vmem:[#allocation9 + $0x1f0] sm:$0xff]
    %v161 = vld [vmem:[#allocation9 + $0x1f8] sm:$0xff]
    %v162 = vld [vmem:[#allocation9 + $0x200] sm:$0xff]
    %v163 = vld [vmem:[#allocation9 + $0x208] sm:$0xff]
    %v164 = vld [vmem:[#allocation9 + $0x210] sm:$0xff]
    %v165 = vld [vmem:[#allocation9 + $0x218] sm:$0xff]
    %v166 = vld [vmem:[#allocation9 + $0x220] sm:$0xff]
    %v167 = vld [vmem:[#allocation9 + $0x228] sm:$0xff]
    %v168 = vld [vmem:[#allocation9 + $0x230] sm:$0xff]
    %v169 = vld [vmem:[#allocation9 + $0x238] sm:$0xff]
    %v170 = vld [vmem:[#allocation9 + $0x240] sm:$0xff]
    %v171 = vld [vmem:[#allocation9 + $0x248] sm:$0xff]
    %v172 = vld [vmem:[#allocation9 + $0x250] sm:$0xff]
    %v173 = vld [vmem:[#allocation9 + $0x258] sm:$0xff]
    %v174 = vld [vmem:[#allocation9 + $0x260] sm:$0xff]
    %v175 = vld [vmem:[#allocation9 + $0x268] sm:$0xff]
    %v176 = vld [vmem:[#allocation9 + $0x270] sm:$0xff]
    %v177 = vld [vmem:[#allocation9 + $0x278] sm:$0xff]
    %v178 = vld [vmem:[#allocation9 + $0x280] sm:$0xff]
    %v179 = vld [vmem:[#allocation9 + $0x288] sm:$0xff]
    %v180 = vld [vmem:[#allocation9 + $0x290] sm:$0xff]
    %v181 = vld [vmem:[#allocation9 + $0x298] sm:$0xff]
    %v182 = vld [vmem:[#allocation9 + $0x2a0] sm:$0xff]
    %v183 = vld [vmem:[#allocation9 + $0x2a8] sm:$0xff]
    %v184 = vld [vmem:[#allocation9 + $0x2b0] sm:$0xff]
    %v185 = vld [vmem:[#allocation9 + $0x2b8] sm:$0xff]
    %v186 = vld [vmem:[#allocation9 + $0x2c0] sm:$0xff]
    %v187 = vld [vmem:[#allocation9 + $0x2c8] sm:$0xff]
    %v188 = vld [vmem:[#allocation9 + $0x2d0] sm:$0xff]
    %v189 = vld [vmem:[#allocation9 + $0x2d8] sm:$0xff]
    %v190 = vld [vmem:[#allocation9 + $0x2e0] sm:$0xff]
    %v191 = vld [vmem:[#allocation9 + $0x2e8] sm:$0xff]
    %v192 = vld [vmem:[#allocation9 + $0x2f0] sm:$0xff]
    %v193 = vld [vmem:[#allocation9 + $0x2f8] sm:$0xff]
    %v194 = vld [vmem:[#allocation9 + $0x300] sm:$0xff]
    %v195 = vld [vmem:[#allocation9 + $0x308] sm:$0xff]
    %v196 = vld [vmem:[#allocation9 + $0x310] sm:$0xff]
    %v197 = vld [vmem:[#allocation9 + $0x318] sm:$0xff]
    %v198 = vld [vmem:[#allocation9 + $0x320] sm:$0xff]
    %v199 = vld [vmem:[#allocation9 + $0x328] sm:$0xff]
    %v200 = vld [vmem:[#allocation9 + $0x330] sm:$0xff]
    %v201 = vld [vmem:[#allocation9 + $0x338] sm:$0xff]
    %v202 = vld [vmem:[#allocation9 + $0x340] sm:$0xff]
    %v203 = vld [vmem:[#allocation9 + $0x348] sm:$0xff]
    %v204 = vld [vmem:[#allocation9 + $0x350] sm:$0xff]
    %v205 = vld [vmem:[#allocation9 + $0x358] sm:$0xff]
    %v206 = vld [vmem:[#allocation9 + $0x360] sm:$0xff]
    %v207 = vld [vmem:[#allocation9 + $0x368] sm:$0xff]
    %v208 = vld [vmem:[#allocation9 + $0x370] sm:$0xff]
    %v209 = vld [vmem:[#allocation9 + $0x378] sm:$0xff]
    %v210 = vld [vmem:[#allocation9 + $0x380] sm:$0xff]
    %v211 = vld [vmem:[#allocation9 + $0x388] sm:$0xff]
    %v212 = vld [vmem:[#allocation9 + $0x390] sm:$0xff]
    %v213 = vld [vmem:[#allocation9 + $0x398] sm:$0xff]
    %v214 = vld [vmem:[#allocation9 + $0x3a0] sm:$0xff]
    %v215 = vld [vmem:[#allocation9 + $0x3a8] sm:$0xff]
    %v216 = vld [vmem:[#allocation9 + $0x3b0] sm:$0xff]
    %v217 = vld [vmem:[#allocation9 + $0x3b8] sm:$0xff]
    %v218 = vld [vmem:[#allocation9 + $0x3c0] sm:$0xff]
    %v219 = vld [vmem:[#allocation9 + $0x3c8] sm:$0xff]
    %v220 = vld [vmem:[#allocation9 + $0x3d0] sm:$0xff]
    %v221 = vld [vmem:[#allocation9 + $0x3d8] sm:$0xff]
    %v222 = vld [vmem:[#allocation9 + $0x3e0] sm:$0xff]
    %v223 = vld [vmem:[#allocation9 + $0x3e8] sm:$0xff]
    %v224 = vld [vmem:[#allocation9 + $0x3f0] sm:$0xff]
    %v225 = vld [vmem:[#allocation9 + $0x3f8] sm:$0xff]
    %v226 = vld [vmem:[#allocation9 + $0x400] sm:$0xff]
    %v227 = vld [vmem:[#allocation9 + $0x408] sm:$0xff]
    %v228 = vld [vmem:[#allocation9 + $0x410] sm:$0xff]
    %v229 = vld [vmem:[#allocation9 + $0x418] sm:$0xff]
    %v230 = vld [vmem:[#allocation9 + $0x420] sm:$0xff]
    %v231 = vld [vmem:[#allocation9 + $0x428] sm:$0xff]
    %v232 = vld [vmem:[#allocation9 + $0x430] sm:$0xff]
    %v233 = vld [vmem:[#allocation9 + $0x438] sm:$0xff]
    %v234 = vld [vmem:[#allocation9 + $0x440] sm:$0xff]
    %v235 = vld [vmem:[#allocation9 + $0x448] sm:$0xff]
    %v236 = vld [vmem:[#allocation9 + $0x450] sm:$0xff]
    %v237 = vld [vmem:[#allocation9 + $0x458] sm:$0xff]
    %v238 = vld [vmem:[#allocation9 + $0x460] sm:$0xff]
    %v239 = vld [vmem:[#allocation9 + $0x468] sm:$0xff]
    %v240 = vld [vmem:[#allocation9 + $0x470] sm:$0xff]
    %v241 = vld [vmem:[#allocation9 + $0x478] sm:$0xff]
    %v242 = vld [vmem:[#allocation9 + $0x480] sm:$0xff]
    %v243 = vld [vmem:[#allocation9 + $0x488] sm:$0xff]
    %v244 = vld [vmem:[#allocation9 + $0x490] sm:$0xff]
    %v245 = vld [vmem:[#allocation9 + $0x498] sm:$0xff]
    %v246 = vld [vmem:[#allocation9 + $0x4a0] sm:$0xff]
    %v247 = vld [vmem:[#allocation9 + $0x4a8] sm:$0xff]
    %v248 = vld [vmem:[#allocation9 + $0x4b0] sm:$0xff]
    %v249 = vld [vmem:[#allocation9 + $0x4b8] sm:$0xff]
    %v250 = vld [vmem:[#allocation9 + $0x4c0] sm:$0xff]
    %v251 = vld [vmem:[#allocation9 + $0x4c8] sm:$0xff]
    %v252 = vld [vmem:[#allocation9 + $0x4d0] sm:$0xff]
    %v253 = vld [vmem:[#allocation9 + $0x4d8] sm:$0xff]
    %v254 = vld [vmem:[#allocation9 + $0x4e0] sm:$0xff]
    %v255 = vld [vmem:[#allocation9 + $0x4e8] sm:$0xff]
    %v256 = vld [vmem:[#allocation9 + $0x4f0] sm:$0xff]
    %v257 = vld [vmem:[#allocation9 + $0x4f8] sm:$0xff]
    %v258 = vld [vmem:[#allocation9 + $0x500] sm:$0xff]
    %v259 = vld [vmem:[#allocation9 + $0x508] sm:$0xff]
    %v260 = vld [vmem:[#allocation9 + $0x510] sm:$0xff]
    %v261 = vld [vmem:[#allocation9 + $0x518] sm:$0xff]
    %v262 = vld [vmem:[#allocation9 + $0x520] sm:$0xff]
    %v263 = vld [vmem:[#allocation9 + $0x528] sm:$0xff]
    %v264 = vld [vmem:[#allocation9 + $0x530] sm:$0xff]
    %v265 = vld [vmem:[#allocation9 + $0x538] sm:$0xff]
    %v266 = vld [vmem:[#allocation9 + $0x540] sm:$0xff]
    %v267 = vld [vmem:[#allocation9 + $0x548] sm:$0xff]
    %v268 = vld [vmem:[#allocation9 + $0x550] sm:$0xff]
    %v269 = vld [vmem:[#allocation9 + $0x558] sm:$0xff]
    %v270 = vld [vmem:[#allocation9 + $0x560] sm:$0xff]
    %v271 = vld [vmem:[#allocation9 + $0x568] sm:$0xff]
    %v272 = vld [vmem:[#allocation9 + $0x570] sm:$0xff]
    %v273 = vld [vmem:[#allocation9 + $0x578] sm:$0xff]
    %v274 = vld [vmem:[#allocation9 + $0x580] sm:$0xff]
    %v275 = vld [vmem:[#allocation9 + $0x588] sm:$0xff]
    %v276 = vld [vmem:[#allocation9 + $0x590] sm:$0xff]
    %v277 = vld [vmem:[#allocation9 + $0x598] sm:$0xff]
    %v278 = vld [vmem:[#allocation9 + $0x5a0] sm:$0xff]
    %v279 = vld [vmem:[#allocation9 + $0x5a8] sm:$0xff]
    %v280 = vld [vmem:[#allocation9 + $0x5b0] sm:$0xff]
    %v281 = vld [vmem:[#allocation9 + $0x5b8] sm:$0xff]
    %v282 = vld [vmem:[#allocation9 + $0x5c0] sm:$0xff]
    %v283 = vld [vmem:[#allocation9 + $0x5c8] sm:$0xff]
    %v284 = vld [vmem:[#allocation9 + $0x5d0] sm:$0xff]
    %v285 = vld [vmem:[#allocation9 + $0x5d8] sm:$0xff]
    %v286 = vld [vmem:[#allocation9 + $0x5e0] sm:$0xff]
    %v287 = vld [vmem:[#allocation9 + $0x5e8] sm:$0xff]
    %v288 = vld [vmem:[#allocation9 + $0x5f0] sm:$0xff]
    %v289 = vld [vmem:[#allocation9 + $0x5f8] sm:$0xff]
    %v290 = vld [vmem:[#allocation9 + $0x600] sm:$0xff]
    %v291 = vld [vmem:[#allocation9 + $0x608] sm:$0xff]
    %v292 = vld [vmem:[#allocation9 + $0x610] sm:$0xff]
    %v293 = vld [vmem:[#allocation9 + $0x618] sm:$0xff]
    %v294 = vld [vmem:[#allocation9 + $0x620] sm:$0xff]
    %v295 = vld [vmem:[#allocation9 + $0x628] sm:$0xff]
    %v296 = vld [vmem:[#allocation9 + $0x630] sm:$0xff]
    %v297 = vld [vmem:[#allocation9 + $0x638] sm:$0xff]
    %v298 = vld [vmem:[#allocation9 + $0x640] sm:$0xff]
    %v299 = vld [vmem:[#allocation9 + $0x648] sm:$0xff]
    %v300 = vld [vmem:[#allocation9 + $0x650] sm:$0xff]
    %v301 = vld [vmem:[#allocation9 + $0x658] sm:$0xff]
    %v302 = vld [vmem:[#allocation9 + $0x660] sm:$0xff]
    %v303 = vld [vmem:[#allocation9 + $0x668] sm:$0xff]
    %v304 = vld [vmem:[#allocation9 + $0x670] sm:$0xff]
    %v305 = vld [vmem:[#allocation9 + $0x678] sm:$0xff]
    %v306 = vld [vmem:[#allocation9 + $0x680] sm:$0xff]
    %v307 = vld [vmem:[#allocation9 + $0x688] sm:$0xff]
    %v308 = vld [vmem:[#allocation9 + $0x690] sm:$0xff]
    %v309 = vld [vmem:[#allocation9 + $0x698] sm:$0xff]
    %v310 = vld [vmem:[#allocation9 + $0x6a0] sm:$0xff]
    %v311 = vld [vmem:[#allocation9 + $0x6a8] sm:$0xff]
    %v312 = vld [vmem:[#allocation9 + $0x6b0] sm:$0xff]
    %v313 = vld [vmem:[#allocation9 + $0x6b8] sm:$0xff]
    %v314 = vld [vmem:[#allocation9 + $0x6c0] sm:$0xff]
    %v315 = vld [vmem:[#allocation9 + $0x6c8] sm:$0xff]
    %v316 = vld [vmem:[#allocation9 + $0x6d0] sm:$0xff]
    %v317 = vld [vmem:[#allocation9 + $0x6d8] sm:$0xff]
    %v318 = vld [vmem:[#allocation9 + $0x6e0] sm:$0xff]
    %v319 = vld [vmem:[#allocation9 + $0x6e8] sm:$0xff]
    %v320 = vld [vmem:[#allocation9 + $0x6f0] sm:$0xff]
    %v321 = vld [vmem:[#allocation9 + $0x6f8] sm:$0xff]
    %v322 = vld [vmem:[#allocation9 + $0x700] sm:$0xff]
    %v323 = vld [vmem:[#allocation9 + $0x708] sm:$0xff]
    %v324 = vld [vmem:[#allocation9 + $0x710] sm:$0xff]
    %v325 = vld [vmem:[#allocation9 + $0x718] sm:$0xff]
    %v326 = vld [vmem:[#allocation9 + $0x720] sm:$0xff]
    %v327 = vld [vmem:[#allocation9 + $0x728] sm:$0xff]
    %v328 = vld [vmem:[#allocation9 + $0x730] sm:$0xff]
    %v329 = vld [vmem:[#allocation9 + $0x738] sm:$0xff]
    %v330 = vld [vmem:[#allocation9 + $0x740] sm:$0xff]
    %v331 = vld [vmem:[#allocation9 + $0x748] sm:$0xff]
    %v332 = vld [vmem:[#allocation9 + $0x750] sm:$0xff]
    %v333 = vld [vmem:[#allocation9 + $0x758] sm:$0xff]
    %v334 = vld [vmem:[#allocation9 + $0x760] sm:$0xff]
    %v335 = vld [vmem:[#allocation9 + $0x768] sm:$0xff]
    %v336 = vld [vmem:[#allocation9 + $0x770] sm:$0xff]
    %v337 = vld [vmem:[#allocation9 + $0x778] sm:$0xff]
    %v338 = vld [vmem:[#allocation9 + $0x780] sm:$0xff]
    %v339 = vld [vmem:[#allocation9 + $0x788] sm:$0xff]
    %v340 = vld [vmem:[#allocation9 + $0x790] sm:$0xff]
    %v341 = vld [vmem:[#allocation9 + $0x798] sm:$0xff]
    %v342 = vld [vmem:[#allocation9 + $0x7a0] sm:$0xff]
    %v343 = vld [vmem:[#allocation9 + $0x7a8] sm:$0xff]
    %v344 = vld [vmem:[#allocation9 + $0x7b0] sm:$0xff]
    %v345 = vld [vmem:[#allocation9 + $0x7b8] sm:$0xff]
    %v346 = vld [vmem:[#allocation9 + $0x7c0] sm:$0xff]
    %v347 = vld [vmem:[#allocation9 + $0x7c8] sm:$0xff]
    %v348 = vld [vmem:[#allocation9 + $0x7d0] sm:$0xff]
    %v349 = vld [vmem:[#allocation9 + $0x7d8] sm:$0xff]
    %v350 = vld [vmem:[#allocation9 + $0x7e0] sm:$0xff]
    %v351 = vld [vmem:[#allocation9 + $0x7e8] sm:$0xff]
    %v352 = vld [vmem:[#allocation9 + $0x7f0] sm:$0xff]
    %v353 = vld [vmem:[#allocation9 + $0x7f8] sm:$0xff]
    %v354 = vld [vmem:[#allocation4] sm:$0xff]
    %v355 = vld [vmem:[#allocation4 + $0x8] sm:$0xff]
    %v356 = vld [vmem:[#allocation7] sm:$0xff]
    %v357 = vld [vmem:[#allocation7 + $0x8] sm:$0xff]
    %v358 = vld [vmem:[#allocation7 + $0x10] sm:$0xff]
    %v359 = vld [vmem:[#allocation7 + $0x18] sm:$0xff]
    %v360 = vld [vmem:[#allocation7 + $0x20] sm:$0xff]
    %v361 = vld [vmem:[#allocation7 + $0x28] sm:$0xff]
    %v362 = vld [vmem:[#allocation7 + $0x30] sm:$0xff]
    %v363 = vld [vmem:[#allocation7 + $0x38] sm:$0xff]
    %v364 = vld [vmem:[#allocation7 + $0x40] sm:$0xff]
    %v365 = vld [vmem:[#allocation7 + $0x48] sm:$0xff]
    %v366 = vld [vmem:[#allocation7 + $0x50] sm:$0xff]
    %v367 = vld [vmem:[#allocation7 + $0x58] sm:$0xff]
    %v368 = vld [vmem:[#allocation7 + $0x60] sm:$0xff]
    %v369 = vld [vmem:[#allocation7 + $0x68] sm:$0xff]
    %v370 = vld [vmem:[#allocation7 + $0x70] sm:$0xff]
    %v371 = vld [vmem:[#allocation7 + $0x78] sm:$0xff]
    %v372 = vld [vmem:[#allocation7 + $0x80] sm:$0xff]
    %v373 = vld [vmem:[#allocation7 + $0x88] sm:$0xff]
    %v374 = vld [vmem:[#allocation7 + $0x90] sm:$0xff]
    %v375 = vld [vmem:[#allocation7 + $0x98] sm:$0xff]
    %v376 = vld [vmem:[#allocation7 + $0xa0] sm:$0xff]
    %v377 = vld [vmem:[#allocation7 + $0xa8] sm:$0xff]
    %v378 = vld [vmem:[#allocation7 + $0xb0] sm:$0xff]
    %v379 = vld [vmem:[#allocation7 + $0xb8] sm:$0xff]
    %v380 = vld [vmem:[#allocation7 + $0xc0] sm:$0xff]
    %v381 = vld [vmem:[#allocation7 + $0xc8] sm:$0xff]
    %v382 = vld [vmem:[#allocation7 + $0xd0] sm:$0xff]
    %v383 = vld [vmem:[#allocation7 + $0xd8] sm:$0xff]
    %v384 = vld [vmem:[#allocation7 + $0xe0] sm:$0xff]
    %v385 = vld [vmem:[#allocation7 + $0xe8] sm:$0xff]
    %v386 = vld [vmem:[#allocation7 + $0xf0] sm:$0xff]
    %v387 = vld [vmem:[#allocation7 + $0xf8] sm:$0xff]
    %v388 = vld [vmem:[#allocation7 + $0x100] sm:$0xff]
    %v389 = vld [vmem:[#allocation7 + $0x108] sm:$0xff]
    %v390 = vld [vmem:[#allocation7 + $0x110] sm:$0xff]
    %v391 = vld [vmem:[#allocation7 + $0x118] sm:$0xff]
    %v392 = vld [vmem:[#allocation7 + $0x120] sm:$0xff]
    %v393 = vld [vmem:[#allocation7 + $0x128] sm:$0xff]
    %v394 = vld [vmem:[#allocation7 + $0x130] sm:$0xff]
    %v395 = vld [vmem:[#allocation7 + $0x138] sm:$0xff]
    %v396 = vld [vmem:[#allocation7 + $0x140] sm:$0xff]
    %v397 = vld [vmem:[#allocation7 + $0x148] sm:$0xff]
    %v398 = vld [vmem:[#allocation7 + $0x150] sm:$0xff]
    %v399 = vld [vmem:[#allocation7 + $0x158] sm:$0xff]
    %v400 = vld [vmem:[#allocation7 + $0x160] sm:$0xff]
    %v401 = vld [vmem:[#allocation7 + $0x168] sm:$0xff]
    %v402 = vld [vmem:[#allocation7 + $0x170] sm:$0xff]
    %v403 = vld [vmem:[#allocation7 + $0x178] sm:$0xff]
    %v404 = vld [vmem:[#allocation7 + $0x180] sm:$0xff]
    %v405 = vld [vmem:[#allocation7 + $0x188] sm:$0xff]
    %v406 = vld [vmem:[#allocation7 + $0x190] sm:$0xff]
    %v407 = vld [vmem:[#allocation7 + $0x198] sm:$0xff]
    %v408 = vld [vmem:[#allocation7 + $0x1a0] sm:$0xff]
    %v409 = vld [vmem:[#allocation7 + $0x1a8] sm:$0xff]
    %v410 = vld [vmem:[#allocation7 + $0x1b0] sm:$0xff]
    %v411 = vld [vmem:[#allocation7 + $0x1b8] sm:$0xff]
    %v412 = vld [vmem:[#allocation7 + $0x1c0] sm:$0xff]
    %v413 = vld [vmem:[#allocation7 + $0x1c8] sm:$0xff]
    %v414 = vld [vmem:[#allocation7 + $0x1d0] sm:$0xff]
    %v415 = vld [vmem:[#allocation7 + $0x1d8] sm:$0xff]
    %v416 = vld [vmem:[#allocation7 + $0x1e0] sm:$0xff]
    %v417 = vld [vmem:[#allocation7 + $0x1e8] sm:$0xff]
    %v418 = vld [vmem:[#allocation7 + $0x1f0] sm:$0xff]
    %v419 = vld [vmem:[#allocation7 + $0x1f8] sm:$0xff]
    %v420 = vld [vmem:[#allocation7 + $0x200] sm:$0xff]
    %v421 = vld [vmem:[#allocation7 + $0x208] sm:$0xff]
    %v422 = vld [vmem:[#allocation7 + $0x210] sm:$0xff]
    %v423 = vld [vmem:[#allocation7 + $0x218] sm:$0xff]
    %v424 = vld [vmem:[#allocation7 + $0x220] sm:$0xff]
    %v425 = vld [vmem:[#allocation7 + $0x228] sm:$0xff]
    %v426 = vld [vmem:[#allocation7 + $0x230] sm:$0xff]
    %v427 = vld [vmem:[#allocation7 + $0x238] sm:$0xff]
    %v428 = vld [vmem:[#allocation7 + $0x240] sm:$0xff]
    %v429 = vld [vmem:[#allocation7 + $0x248] sm:$0xff]
    %v430 = vld [vmem:[#allocation7 + $0x250] sm:$0xff]
    %v431 = vld [vmem:[#allocation7 + $0x258] sm:$0xff]
    %v432 = vld [vmem:[#allocation7 + $0x260] sm:$0xff]
    %v433 = vld [vmem:[#allocation7 + $0x268] sm:$0xff]
    %v434 = vld [vmem:[#allocation7 + $0x270] sm:$0xff]
    %v435 = vld [vmem:[#allocation7 + $0x278] sm:$0xff]
    %v436 = vld [vmem:[#allocation7 + $0x280] sm:$0xff]
    %v437 = vld [vmem:[#allocation7 + $0x288] sm:$0xff]
    %v438 = vld [vmem:[#allocation7 + $0x290] sm:$0xff]
    %v439 = vld [vmem:[#allocation7 + $0x298] sm:$0xff]
    %v440 = vld [vmem:[#allocation7 + $0x2a0] sm:$0xff]
    %v441 = vld [vmem:[#allocation7 + $0x2a8] sm:$0xff]
    %v442 = vld [vmem:[#allocation7 + $0x2b0] sm:$0xff]
    %v443 = vld [vmem:[#allocation7 + $0x2b8] sm:$0xff]
    %v444 = vld [vmem:[#allocation7 + $0x2c0] sm:$0xff]
    %v445 = vld [vmem:[#allocation7 + $0x2c8] sm:$0xff]
    %v446 = vld [vmem:[#allocation7 + $0x2d0] sm:$0xff]
    %v447 = vld [vmem:[#allocation7 + $0x2d8] sm:$0xff]
    %v448 = vld [vmem:[#allocation7 + $0x2e0] sm:$0xff]
    %v449 = vld [vmem:[#allocation7 + $0x2e8] sm:$0xff]
    %v450 = vld [vmem:[#allocation7 + $0x2f0] sm:$0xff]
    %v451 = vld [vmem:[#allocation7 + $0x2f8] sm:$0xff]
    %v452 = vld [vmem:[#allocation7 + $0x300] sm:$0xff]
    %v453 = vld [vmem:[#allocation7 + $0x308] sm:$0xff]
    %v454 = vld [vmem:[#allocation7 + $0x310] sm:$0xff]
    %v455 = vld [vmem:[#allocation7 + $0x318] sm:$0xff]
    %v456 = vld [vmem:[#allocation7 + $0x320] sm:$0xff]
    %v457 = vld [vmem:[#allocation7 + $0x328] sm:$0xff]
    %v458 = vld [vmem:[#allocation7 + $0x330] sm:$0xff]
    %v459 = vld [vmem:[#allocation7 + $0x338] sm:$0xff]
    %v460 = vld [vmem:[#allocation7 + $0x340] sm:$0xff]
    %v461 = vld [vmem:[#allocation7 + $0x348] sm:$0xff]
    %v462 = vld [vmem:[#allocation7 + $0x350] sm:$0xff]
    %v463 = vld [vmem:[#allocation7 + $0x358] sm:$0xff]
    %v464 = vld [vmem:[#allocation7 + $0x360] sm:$0xff]
    %v465 = vld [vmem:[#allocation7 + $0x368] sm:$0xff]
    %v466 = vld [vmem:[#allocation7 + $0x370] sm:$0xff]
    %v467 = vld [vmem:[#allocation7 + $0x378] sm:$0xff]
    %v468 = vld [vmem:[#allocation7 + $0x380] sm:$0xff]
    %v469 = vld [vmem:[#allocation7 + $0x388] sm:$0xff]
    %v470 = vld [vmem:[#allocation7 + $0x390] sm:$0xff]
    %v471 = vld [vmem:[#allocation7 + $0x398] sm:$0xff]
    %v472 = vld [vmem:[#allocation7 + $0x3a0] sm:$0xff]
    %v473 = vld [vmem:[#allocation7 + $0x3a8] sm:$0xff]
    %v474 = vld [vmem:[#allocation7 + $0x3b0] sm:$0xff]
    %v475 = vld [vmem:[#allocation7 + $0x3b8] sm:$0xff]
    %v476 = vld [vmem:[#allocation7 + $0x3c0] sm:$0xff]
    %v477 = vld [vmem:[#allocation7 + $0x3c8] sm:$0xff]
    %v478 = vld [vmem:[#allocation7 + $0x3d0] sm:$0xff]
    %v479 = vld [vmem:[#allocation7 + $0x3d8] sm:$0xff]
    %v480 = vld [vmem:[#allocation7 + $0x3e0] sm:$0xff]
    %v481 = vld [vmem:[#allocation7 + $0x3e8] sm:$0xff]
    %v482 = vld [vmem:[#allocation7 + $0x3f0] sm:$0xff]
    %v483 = vld [vmem:[#allocation7 + $0x3f8] sm:$0xff]
    %v484 = vld [vmem:[%s3] sm:$0xff]
    %v486 = vlaneseq
    %v487 = vshrl.u32 %v486, 7
    %v488 = vsub.s32 0, %v487
    %v489 = vrot.slane %v484, %v488
    %v490 = vlaneseq
    %v491 = vshrl.u32 %v490, 7
    %v492 = vsub.s32 1, %v491
    %v493 = vrot.slane %v484, %v492
    %v494 = vlaneseq
    %v495 = vshrl.u32 %v494, 7
    %v496 = vsub.s32 2, %v495
    %v497 = vrot.slane %v484, %v496
    %v498 = vlaneseq
    %v499 = vshrl.u32 %v498, 7
    %v500 = vsub.s32 3, %v499
    %v501 = vrot.slane %v484, %v500
    %v502 = vlaneseq
    %v503 = vshrl.u32 %v502, 7
    %v504 = vsub.s32 4, %v503
    %v505 = vrot.slane %v484, %v504
    %v506 = vlaneseq
    %v507 = vshrl.u32 %v506, 7
    %v508 = vsub.s32 5, %v507
    %v509 = vrot.slane %v484, %v508
    %v510 = vlaneseq
    %v511 = vshrl.u32 %v510, 7
    %v512 = vsub.s32 6, %v511
    %v513 = vrot.slane %v484, %v512
    %v514 = vlaneseq
    %v515 = vshrl.u32 %v514, 7
    %v516 = vsub.s32 7, %v515
    %v517 = vrot.slane %v484, %v516
    %526 = vmatprep.subr.mxu0 %v357
    %527 = vmatpush1.msra.mxu0 %v356
    %528 = vmatprep.subr.mxu0 %v365
    %529 = vmatpush1.msra.mxu0 %v364
    %530 = vmatprep.subr.mxu0 %v373
    %531 = vmatpush1.msra.mxu0 %v372
    %532 = vmatprep.subr.mxu0 %v381
    %533 = vmatpush1.msra.mxu0 %v380
    %534 = vmatprep.subr.mxu0 %v389
    %535 = vmatpush1.msra.mxu0 %v388
    %536 = vmatprep.subr.mxu0 %v397
    %537 = vmatpush1.msra.mxu0 %v396
    %538 = vmatprep.subr.mxu0 %v405
    %539 = vmatpush1.msra.mxu0 %v404
    %540 = vmatprep.subr.mxu0 %v413
    %541 = vmatpush1.msra.mxu0 %v412
    %542 = vmatprep.subr.mxu0 %v421
    %543 = vmatpush1.msra.mxu0 %v420
    %544 = vmatprep.subr.mxu0 %v429
    %545 = vmatpush1.msra.mxu0 %v428
    %546 = vmatprep.subr.mxu0 %v437
    %547 = vmatpush1.msra.mxu0 %v436
    %548 = vmatprep.subr.mxu0 %v445
    %549 = vmatpush1.msra.mxu0 %v444
    %550 = vmatprep.subr.mxu0 %v453
    %551 = vmatpush1.msra.mxu0 %v452
    %552 = vmatprep.subr.mxu0 %v461
    %553 = vmatpush1.msra.mxu0 %v460
    %554 = vmatprep.subr.mxu0 %v469
    %555 = vmatpush1.msra.mxu0 %v468
    %556 = vmatprep.subr.mxu0 %v477
    %557 = vmatpush1.msra.mxu0 %v476
    %558 = vmatprep.subr.mxu0 0.0
    %559 = vmatpush1.msra.mxu0 0.0
    %560 = vmatprep.subr.mxu0 0.0
    %561 = vmatpush1.msra.mxu0 0.0
    %562 = vmatprep.subr.mxu0 0.0
    %563 = vmatpush1.msra.mxu0 0.0
    %564 = vmatprep.subr.mxu0 0.0
    %565 = vmatpush1.msra.mxu0 0.0
    %566 = vmatprep.subr.mxu0 0.0
    %567 = vmatpush1.msra.mxu0 0.0
    %568 = vmatprep.subr.mxu0 0.0
    %569 = vmatpush1.msra.mxu0 0.0
    %570 = vmatprep.subr.mxu0 0.0
    %571 = vmatpush1.msra.mxu0 0.0
    %572 = vmatprep.subr.mxu0 0.0
    %573 = vmatpush1.msra.mxu0 0.0
    %574 = vmatprep.subr.mxu0 0.0
    %575 = vmatpush1.msra.mxu0 0.0
    %576 = vmatprep.subr.mxu0 0.0
    %577 = vmatpush1.msra.mxu0 0.0
    %578 = vmatprep.subr.mxu0 0.0
    %579 = vmatpush1.msra.mxu0 0.0
    %580 = vmatprep.subr.mxu0 0.0
    %581 = vmatpush1.msra.mxu0 0.0
    %582 = vmatprep.subr.mxu0 0.0
    %583 = vmatpush1.msra.mxu0 0.0
    %584 = vmatprep.subr.mxu0 0.0
    %585 = vmatpush1.msra.mxu0 0.0
    %586 = vmatprep.subr.mxu0 0.0
    %587 = vmatpush1.msra.mxu0 0.0
    %588 = vmatprep.subr.mxu0 0.0
    %589 = vmatpush1.msra.mxu0 0.0
    %590 = vmatprep.mubr.f32.mxu0 0.0
    %591 = vmatmul.mubr.f32.gmra.mrb[0].mxu0 %v354
    %v592 = vpop.f32.mrb[0].mxu0
    %v593 = vadd.f32 %v489, %v592
    %v594 = vpop.f32.mrb[0].mxu0
    %v595 = vadd.f32 %v493, %v594
    %596 = vmatprep.mubr.f32.mxu0 0.0
    %597 = vmatmul.mubr.f32.gmra.mrb[0].mxu0 %v355
    %v598 = vpop.f32.mrb[0].mxu0
    %v599 = vadd.f32 %v489, %v598
    %v600 = vpop.f32.mrb[0].mxu0
    %v601 = vadd.f32 %v493, %v600
    %602 = vdwg.mxu0
    %603 = vmatprep.subr.mxu0 %v359
    %604 = vmatpush1.msra.mxu0 %v358
    %605 = vmatprep.subr.mxu0 %v367
    %606 = vmatpush1.msra.mxu0 %v366
    %607 = vmatprep.subr.mxu0 %v375
    %608 = vmatpush1.msra.mxu0 %v374
    %609 = vmatprep.subr.mxu0 %v383
    %610 = vmatpush1.msra.mxu0 %v382
    %611 = vmatprep.subr.mxu0 %v391
    %612 = vmatpush1.msra.mxu0 %v390
    %613 = vmatprep.subr.mxu0 %v399
    %614 = vmatpush1.msra.mxu0 %v398
    %615 = vmatprep.subr.mxu0 %v407
    %616 = vmatpush1.msra.mxu0 %v406
    %617 = vmatprep.subr.mxu0 %v415
    %618 = vmatpush1.msra.mxu0 %v414
    %619 = vmatprep.subr.mxu0 %v423
    %620 = vmatpush1.msra.mxu0 %v422
    %621 = vmatprep.subr.mxu0 %v431
    %622 = vmatpush1.msra.mxu0 %v430
    %623 = vmatprep.subr.mxu0 %v439
    %624 = vmatpush1.msra.mxu0 %v438
    %625 = vmatprep.subr.mxu0 %v447
    %626 = vmatpush1.msra.mxu0 %v446
    %627 = vmatprep.subr.mxu0 %v455
    %628 = vmatpush1.msra.mxu0 %v454
    %629 = vmatprep.subr.mxu0 %v463
    %630 = vmatpush1.msra.mxu0 %v462
    %631 = vmatprep.subr.mxu0 %v471
    %632 = vmatpush1.msra.mxu0 %v470
    %633 = vmatprep.subr.mxu0 %v479
    %634 = vmatpush1.msra.mxu0 %v478
    %635 = vmatprep.subr.mxu0 0.0
    %636 = vmatpush1.msra.mxu0 0.0
    %637 = vmatprep.subr.mxu0 0.0
    %638 = vmatpush1.msra.mxu0 0.0
    %639 = vmatprep.subr.mxu0 0.0
    %640 = vmatpush1.msra.mxu0 0.0
    %641 = vmatprep.subr.mxu0 0.0
    %642 = vmatpush1.msra.mxu0 0.0
    %643 = vmatprep.subr.mxu0 0.0
    %644 = vmatpush1.msra.mxu0 0.0
    %645 = vmatprep.subr.mxu0 0.0
    %646 = vmatpush1.msra.mxu0 0.0
    %647 = vmatprep.subr.mxu0 0.0
    %648 = vmatpush1.msra.mxu0 0.0
    %649 = vmatprep.subr.mxu0 0.0
    %650 = vmatpush1.msra.mxu0 0.0
    %651 = vmatprep.subr.mxu0 0.0
    %652 = vmatpush1.msra.mxu0 0.0
    %653 = vmatprep.subr.mxu0 0.0
    %654 = vmatpush1.msra.mxu0 0.0
    %655 = vmatprep.subr.mxu0 0.0
    %656 = vmatpush1.msra.mxu0 0.0
    %657 = vmatprep.subr.mxu0 0.0
    %658 = vmatpush1.msra.mxu0 0.0
    %659 = vmatprep.subr.mxu0 0.0
    %660 = vmatpush1.msra.mxu0 0.0
    %661 = vmatprep.subr.mxu0 0.0
    %662 = vmatpush1.msra.mxu0 0.0
    %663 = vmatprep.subr.mxu0 0.0
    %664 = vmatpush1.msra.mxu0 0.0
    %665 = vmatprep.subr.mxu0 0.0
    %666 = vmatpush1.msra.mxu0 0.0
    %667 = vmatprep.mubr.f32.mxu0 0.0
    %668 = vmatmul.mubr.f32.gmra.mrb[0].mxu0 %v354
    %v669 = vpop.f32.mrb[0].mxu0
    %v670 = vadd.f32 %v497, %v669
    %v671 = vpop.f32.mrb[0].mxu0
    %v672 = vadd.f32 %v501, %v671
    %673 = vmatprep.mubr.f32.mxu0 0.0
    %674 = vmatmul.mubr.f32.gmra.mrb[0].mxu0 %v355
    %v675 = vpop.f32.mrb[0].mxu0
    %v676 = vadd.f32 %v497, %v675
    %v677 = vpop.f32.mrb[0].mxu0
    %v678 = vadd.f32 %v501, %v677
    %679 = vdwg.mxu0
    %680 = vmatprep.subr.mxu0 %v361
    %681 = vmatpush1.msra.mxu0 %v360
    %682 = vmatprep.subr.mxu0 %v369
    %683 = vmatpush1.msra.mxu0 %v368
    %684 = vmatprep.subr.mxu0 %v377
    %685 = vmatpush1.msra.mxu0 %v376
    %686 = vmatprep.subr.mxu0 %v385
    %687 = vmatpush1.msra.mxu0 %v384
    %688 = vmatprep.subr.mxu0 %v393
    %689 = vmatpush1.msra.mxu0 %v392
    %690 = vmatprep.subr.mxu0 %v401
    %691 = vmatpush1.msra.mxu0 %v400
    %692 = vmatprep.subr.mxu0 %v409
    %693 = vmatpush1.msra.mxu0 %v408
    %694 = vmatprep.subr.mxu0 %v417
    %695 = vmatpush1.msra.mxu0 %v416
    %696 = vmatprep.subr.mxu0 %v425
    %697 = vmatpush1.msra.mxu0 %v424
    %698 = vmatprep.subr.mxu0 %v433
    %699 = vmatpush1.msra.mxu0 %v432
    %700 = vmatprep.subr.mxu0 %v441
    %701 = vmatpush1.msra.mxu0 %v440
    %702 = vmatprep.subr.mxu0 %v449
    %703 = vmatpush1.msra.mxu0 %v448
    %704 = vmatprep.subr.mxu0 %v457
    %705 = vmatpush1.msra.mxu0 %v456
    %706 = vmatprep.subr.mxu0 %v465
    %707 = vmatpush1.msra.mxu0 %v464
    %708 = vmatprep.subr.mxu0 %v473
    %709 = vmatpush1.msra.mxu0 %v472
    %710 = vmatprep.subr.mxu0 %v481
    %711 = vmatpush1.msra.mxu0 %v480
    %712 = vmatprep.subr.mxu0 0.0
    %713 = vmatpush1.msra.mxu0 0.0
    %714 = vmatprep.subr.mxu0 0.0
    %715 = vmatpush1.msra.mxu0 0.0
    %716 = vmatprep.subr.mxu0 0.0
    %717 = vmatpush1.msra.mxu0 0.0
    %718 = vmatprep.subr.mxu0 0.0
    %719 = vmatpush1.msra.mxu0 0.0
    %720 = vmatprep.subr.mxu0 0.0
    %721 = vmatpush1.msra.mxu0 0.0
    %722 = vmatprep.subr.mxu0 0.0
    %723 = vmatpush1.msra.mxu0 0.0
    %724 = vmatprep.subr.mxu0 0.0
    %725 = vmatpush1.msra.mxu0 0.0
    %726 = vmatprep.subr.mxu0 0.0
    %727 = vmatpush1.msra.mxu0 0.0
    %728 = vmatprep.subr.mxu0 0.0
    %729 = vmatpush1.msra.mxu0 0.0
    %730 = vmatprep.subr.mxu0 0.0
    %731 = vmatpush1.msra.mxu0 0.0
    %732 = vmatprep.subr.mxu0 0.0
    %733 = vmatpush1.msra.mxu0 0.0
    %734 = vmatprep.subr.mxu0 0.0
    %735 = vmatpush1.msra.mxu0 0.0
    %736 = vmatprep.subr.mxu0 0.0
    %737 = vmatpush1.msra.mxu0 0.0
    %738 = vmatprep.subr.mxu0 0.0
    %739 = vmatpush1.msra.mxu0 0.0
    %740 = vmatprep.subr.mxu0 0.0
    %741 = vmatpush1.msra.mxu0 0.0
    %742 = vmatprep.subr.mxu0 0.0
    %743 = vmatpush1.msra.mxu0 0.0
    %744 = vmatprep.mubr.f32.mxu0 0.0
    %745 = vmatmul.mubr.f32.gmra.mrb[0].mxu0 %v354
    %v746 = vpop.f32.mrb[0].mxu0
    %v747 = vadd.f32 %v505, %v746
    %v748 = vpop.f32.mrb[0].mxu0
    %v749 = vadd.f32 %v509, %v748
    %750 = vmatprep.mubr.f32.mxu0 0.0
    %751 = vmatmul.mubr.f32.gmra.mrb[0].mxu0 %v355
    %v752 = vpop.f32.mrb[0].mxu0
    %v753 = vadd.f32 %v505, %v752
    %v754 = vpop.f32.mrb[0].mxu0
    %v755 = vadd.f32 %v509, %v754
    %756 = vdwg.mxu0
    %757 = vmatprep.subr.mxu0 %v363
    %758 = vmatpush1.msra.mxu0 %v362
    %759 = vmatprep.subr.mxu0 %v371
    %760 = vmatpush1.msra.mxu0 %v370
    %761 = vmatprep.subr.mxu0 %v379
    %762 = vmatpush1.msra.mxu0 %v378
    %763 = vmatprep.subr.mxu0 %v387
    %764 = vmatpush1.msra.mxu0 %v386
    %765 = vmatprep.subr.mxu0 %v395
    %766 = vmatpush1.msra.mxu0 %v394
    %767 = vmatprep.subr.mxu0 %v403
    %768 = vmatpush1.msra.mxu0 %v402
    %769 = vmatprep.subr.mxu0 %v411
    %770 = vmatpush1.msra.mxu0 %v410
    %771 = vmatprep.subr.mxu0 %v419
    %772 = vmatpush1.msra.mxu0 %v418
    %773 = vmatprep.subr.mxu0 %v427
    %774 = vmatpush1.msra.mxu0 %v426
    %775 = vmatprep.subr.mxu0 %v435
    %776 = vmatpush1.msra.mxu0 %v434
    %777 = vmatprep.subr.mxu0 %v443
    %778 = vmatpush1.msra.mxu0 %v442
    %779 = vmatprep.subr.mxu0 %v451
    %780 = vmatpush1.msra.mxu0 %v450
    %781 = vmatprep.subr.mxu0 %v459
    %782 = vmatpush1.msra.mxu0 %v458
    %783 = vmatprep.subr.mxu0 %v467
    %784 = vmatpush1.msra.mxu0 %v466
    %785 = vmatprep.subr.mxu0 %v475
    %786 = vmatpush1.msra.mxu0 %v474
    %787 = vmatprep.subr.mxu0 %v483
    %788 = vmatpush1.msra.mxu0 %v482
    %789 = vmatprep.subr.mxu0 0.0
    %790 = vmatpush1.msra.mxu0 0.0
    %791 = vmatprep.subr.mxu0 0.0
    %792 = vmatpush1.msra.mxu0 0.0
    %793 = vmatprep.subr.mxu0 0.0
    %794 = vmatpush1.msra.mxu0 0.0
    %795 = vmatprep.subr.mxu0 0.0
    %796 = vmatpush1.msra.mxu0 0.0
    %797 = vmatprep.subr.mxu0 0.0
    %798 = vmatpush1.msra.mxu0 0.0
    %799 = vmatprep.subr.mxu0 0.0
    %800 = vmatpush1.msra.mxu0 0.0
    %801 = vmatprep.subr.mxu0 0.0
    %802 = vmatpush1.msra.mxu0 0.0
    %803 = vmatprep.subr.mxu0 0.0
    %804 = vmatpush1.msra.mxu0 0.0
    %805 = vmatprep.subr.mxu0 0.0
    %806 = vmatpush1.msra.mxu0 0.0
    %807 = vmatprep.subr.mxu0 0.0
    %808 = vmatpush1.msra.mxu0 0.0
    %809 = vmatprep.subr.mxu0 0.0
    %810 = vmatpush1.msra.mxu0 0.0
    %811 = vmatprep.subr.mxu0 0.0
    %812 = vmatpush1.msra.mxu0 0.0
    %813 = vmatprep.subr.mxu0 0.0
    %814 = vmatpush1.msra.mxu0 0.0
    %815 = vmatprep.subr.mxu0 0.0
    %816 = vmatpush1.msra.mxu0 0.0
    %817 = vmatprep.subr.mxu0 0.0
    %818 = vmatpush1.msra.mxu0 0.0
    %819 = vmatprep.subr.mxu0 0.0
    %820 = vmatpush1.msra.mxu0 0.0
    %821 = vmatprep.mubr.f32.mxu0 0.0
    %822 = vmatmul.mubr.f32.gmra.mrb[0].mxu0 %v354
    %v823 = vpop.f32.mrb[0].mxu0
    %v824 = vadd.f32 %v513, %v823
    %v825 = vpop.f32.mrb[0].mxu0
    %v826 = vadd.f32 %v517, %v825
    %827 = vmatprep.mubr.f32.mxu0 0.0
    %828 = vmatmul.mubr.f32.gmra.mrb[0].mxu0 %v355
    %v829 = vpop.f32.mrb[0].mxu0
    %v830 = vadd.f32 %v513, %v829
    %v831 = vpop.f32.mrb[0].mxu0
    %v832 = vadd.f32 %v517, %v831
    %833 = vdwg.mxu0
    %834 = vst [vmem:[#allocation2] sm:$0xff] %v593
    %835 = vst [vmem:[#allocation2 + $0x8] sm:$0xff] %v595
    %836 = vst [vmem:[#allocation2 + $0x10] sm:$0xff] %v670
    %837 = vst [vmem:[#allocation2 + $0x18] sm:$0xff] %v672
    %838 = vst [vmem:[#allocation2 + $0x20] sm:$0xff] %v747
    %839 = vst [vmem:[#allocation2 + $0x28] sm:$0xff] %v749
    %840 = vst [vmem:[#allocation2 + $0x30] sm:$0xff] %v824
    %841 = vst [vmem:[#allocation2 + $0x38] sm:$0xff] %v826
    %842 = vst [vmem:[#allocation2 + $0x40] sm:$0xff] %v599
    %843 = vst [vmem:[#allocation2 + $0x48] sm:$0xff] %v601
    %844 = vst [vmem:[#allocation2 + $0x50] sm:$0xff] %v676
    %845 = vst [vmem:[#allocation2 + $0x58] sm:$0xff] %v678
    %846 = vst [vmem:[#allocation2 + $0x60] sm:$0xff] %v753
    %847 = vst [vmem:[#allocation2 + $0x68] sm:$0xff] %v755
    %848 = vst [vmem:[#allocation2 + $0x70] sm:$0xff] %v830
    %849 = vst [vmem:[#allocation2 + $0x78] sm:$0xff] %v832
    %v850 = vld [vmem:[#allocation2] sm:$0x3]
    %v851 = vld [vmem:[#allocation2 + $0x8] sm:$0x3]
    %v852 = vld [vmem:[#allocation2 + $0x10] sm:$0x3]
    %v853 = vld [vmem:[#allocation2 + $0x18] sm:$0x3]
    %v854 = vld [vmem:[#allocation2 + $0x20] sm:$0x3]
    %v855 = vld [vmem:[#allocation2 + $0x28] sm:$0x3]
    %v856 = vld [vmem:[#allocation2 + $0x30] sm:$0x3]
    %v857 = vld [vmem:[#allocation2 + $0x38] sm:$0x3]
    %858 = vmatprep.subr.mxu0 %v99
    %859 = vmatpush1.msra.mxu0 %v98
    %860 = vmatprep.subr.mxu0 %v107
    %861 = vmatpush1.msra.mxu0 %v106
    %862 = vmatprep.subr.mxu0 %v115
    %863 = vmatpush1.msra.mxu0 %v114
    %864 = vmatprep.subr.mxu0 %v123
    %865 = vmatpush1.msra.mxu0 %v122
    %866 = vmatprep.subr.mxu0 %v131
    %867 = vmatpush1.msra.mxu0 %v130
    %868 = vmatprep.subr.mxu0 %v139
    %869 = vmatpush1.msra.mxu0 %v138
    %870 = vmatprep.subr.mxu0 %v147
    %871 = vmatpush1.msra.mxu0 %v146
    %872 = vmatprep.subr.mxu0 %v155
    %873 = vmatpush1.msra.mxu0 %v154
    %874 = vmatprep.subr.mxu0 %v163
    %875 = vmatpush1.msra.mxu0 %v162
    %876 = vmatprep.subr.mxu0 %v171
    %877 = vmatpush1.msra.mxu0 %v170
    %878 = vmatprep.subr.mxu0 %v179
    %879 = vmatpush1.msra.mxu0 %v178
    %880 = vmatprep.subr.mxu0 %v187
    %881 = vmatpush1.msra.mxu0 %v186
    %882 = vmatprep.subr.mxu0 %v195
    %883 = vmatpush1.msra.mxu0 %v194
    %884 = vmatprep.subr.mxu0 %v203
    %885 = vmatpush1.msra.mxu0 %v202
    %886 = vmatprep.subr.mxu0 %v211
    %887 = vmatpush1.msra.mxu0 %v210
    %888 = vmatprep.subr.mxu0 %v219
    %889 = vmatpush1.msra.mxu0 %v218
    %890 = vmatprep.subr.mxu0 %v227
    %891 = vmatpush1.msra.mxu0 %v226
    %892 = vmatprep.subr.mxu0 %v235
    %893 = vmatpush1.msra.mxu0 %v234
    %894 = vmatprep.subr.mxu0 %v243
    %895 = vmatpush1.msra.mxu0 %v242
    %896 = vmatprep.subr.mxu0 %v251
    %897 = vmatpush1.msra.mxu0 %v250
    %898 = vmatprep.subr.mxu0 %v259
    %899 = vmatpush1.msra.mxu0 %v258
    %900 = vmatprep.subr.mxu0 %v267
    %901 = vmatpush1.msra.mxu0 %v266
    %902 = vmatprep.subr.mxu0 %v275
    %903 = vmatpush1.msra.mxu0 %v274
    %904 = vmatprep.subr.mxu0 %v283
    %905 = vmatpush1.msra.mxu0 %v282
    %906 = vmatprep.subr.mxu0 %v291
    %907 = vmatpush1.msra.mxu0 %v290
    %908 = vmatprep.subr.mxu0 %v299
    %909 = vmatpush1.msra.mxu0 %v298
    %910 = vmatprep.subr.mxu0 %v307
    %911 = vmatpush1.msra.mxu0 %v306
    %912 = vmatprep.subr.mxu0 %v315
    %913 = vmatpush1.msra.mxu0 %v314
    %914 = vmatprep.subr.mxu0 %v323
    %915 = vmatpush1.msra.mxu0 %v322
    %916 = vmatprep.subr.mxu0 %v331
    %917 = vmatpush1.msra.mxu0 %v330
    %918 = vmatprep.subr.mxu0 %v339
    %919 = vmatpush1.msra.mxu0 %v338
    %920 = vmatprep.subr.mxu0 %v347
    %921 = vmatpush1.msra.mxu0 %v346
    %922 = vmatprep.mubr.f32.mxu0 0.0
    %923 = vmatmul.mubr.f32.gmra.mrb[0].mxu0 0.0
    %v924 = vpop.f32.mrb[0].mxu0
    %v925 = vadd.f32 0.0, %v924
    %v926 = vpop.f32.mrb[0].mxu0
    %v927 = vadd.f32 0.0, %v926
    %928 = vdwg.mxu0
    %929 = vmatprep.subr.mxu0 %v101
    %930 = vmatpush1.msra.mxu0 %v100
    %931 = vmatprep.subr.mxu0 %v109
    %932 = vmatpush1.msra.mxu0 %v108
    %933 = vmatprep.subr.mxu0 %v117
    %934 = vmatpush1.msra.mxu0 %v116
    %935 = vmatprep.subr.mxu0 %v125
    %936 = vmatpush1.msra.mxu0 %v124
    %937 = vmatprep.subr.mxu0 %v133
    %938 = vmatpush1.msra.mxu0 %v132
    %939 = vmatprep.subr.mxu0 %v141
    %940 = vmatpush1.msra.mxu0 %v140
    %941 = vmatprep.subr.mxu0 %v149
    %942 = vmatpush1.msra.mxu0 %v148
    %943 = vmatprep.subr.mxu0 %v157
    %944 = vmatpush1.msra.mxu0 %v156
    %945 = vmatprep.subr.mxu0 %v165
    %946 = vmatpush1.msra.mxu0 %v164
    %947 = vmatprep.subr.mxu0 %v173
    %948 = vmatpush1.msra.mxu0 %v172
    %949 = vmatprep.subr.mxu0 %v181
    %950 = vmatpush1.msra.mxu0 %v180
    %951 = vmatprep.subr.mxu0 %v189
    %952 = vmatpush1.msra.mxu0 %v188
    %953 = vmatprep.subr.mxu0 %v197
    %954 = vmatpush1.msra.mxu0 %v196
    %955 = vmatprep.subr.mxu0 %v205
    %956 = vmatpush1.msra.mxu0 %v204
    %957 = vmatprep.subr.mxu0 %v213
    %958 = vmatpush1.msra.mxu0 %v212
    %959 = vmatprep.subr.mxu0 %v221
    %960 = vmatpush1.msra.mxu0 %v220
    %961 = vmatprep.subr.mxu0 %v229
    %962 = vmatpush1.msra.mxu0 %v228
    %963 = vmatprep.subr.mxu0 %v237
    %964 = vmatpush1.msra.mxu0 %v236
    %965 = vmatprep.subr.mxu0 %v245
    %966 = vmatpush1.msra.mxu0 %v244
    %967 = vmatprep.subr.mxu0 %v253
    %968 = vmatpush1.msra.mxu0 %v252
    %969 = vmatprep.subr.mxu0 %v261
    %970 = vmatpush1.msra.mxu0 %v260
    %971 = vmatprep.subr.mxu0 %v269
    %972 = vmatpush1.msra.mxu0 %v268
    %973 = vmatprep.subr.mxu0 %v277
    %974 = vmatpush1.msra.mxu0 %v276
    %975 = vmatprep.subr.mxu0 %v285
    %976 = vmatpush1.msra.mxu0 %v284
    %977 = vmatprep.subr.mxu0 %v293
    %978 = vmatpush1.msra.mxu0 %v292
    %979 = vmatprep.subr.mxu0 %v301
    %980 = vmatpush1.msra.mxu0 %v300
    %981 = vmatprep.subr.mxu0 %v309
    %982 = vmatpush1.msra.mxu0 %v308
    %983 = vmatprep.subr.mxu0 %v317
    %984 = vmatpush1.msra.mxu0 %v316
    %985 = vmatprep.subr.mxu0 %v325
    %986 = vmatpush1.msra.mxu0 %v324
    %987 = vmatprep.subr.mxu0 %v333
    %988 = vmatpush1.msra.mxu0 %v332
    %989 = vmatprep.subr.mxu0 %v341
    %990 = vmatpush1.msra.mxu0 %v340
    %991 = vmatprep.subr.mxu0 %v349
    %992 = vmatpush1.msra.mxu0 %v348
    %993 = vmatprep.mubr.f32.mxu0 0.0
    %994 = vmatmul.mubr.f32.gmra.mrb[0].mxu0 0.0
    %v995 = vpop.f32.mrb[0].mxu0
    %v996 = vadd.f32 0.0, %v995
    %v997 = vpop.f32.mrb[0].mxu0
    %v998 = vadd.f32 0.0, %v997
    %999 = vdwg.mxu0
    %1000 = vmatprep.subr.mxu0 %v103
    %1001 = vmatpush1.msra.mxu0 %v102
    %1002 = vmatprep.subr.mxu0 %v111
    %1003 = vmatpush1.msra.mxu0 %v110
    %1004 = vmatprep.subr.mxu0 %v119
    %1005 = vmatpush1.msra.mxu0 %v118
    %1006 = vmatprep.subr.mxu0 %v127
    %1007 = vmatpush1.msra.mxu0 %v126
    %1008 = vmatprep.subr.mxu0 %v135
    %1009 = vmatpush1.msra.mxu0 %v134
    %1010 = vmatprep.subr.mxu0 %v143
    %1011 = vmatpush1.msra.mxu0 %v142
    %1012 = vmatprep.subr.mxu0 %v151
    %1013 = vmatpush1.msra.mxu0 %v150
    %1014 = vmatprep.subr.mxu0 %v159
    %1015 = vmatpush1.msra.mxu0 %v158
    %1016 = vmatprep.subr.mxu0 %v167
    %1017 = vmatpush1.msra.mxu0 %v166
    %1018 = vmatprep.subr.mxu0 %v175
    %1019 = vmatpush1.msra.mxu0 %v174
    %1020 = vmatprep.subr.mxu0 %v183
    %1021 = vmatpush1.msra.mxu0 %v182
    %1022 = vmatprep.subr.mxu0 %v191
    %1023 = vmatpush1.msra.mxu0 %v190
    %1024 = vmatprep.subr.mxu0 %v199
    %1025 = vmatpush1.msra.mxu0 %v198
    %1026 = vmatprep.subr.mxu0 %v207
    %1027 = vmatpush1.msra.mxu0 %v206
    %1028 = vmatprep.subr.mxu0 %v215
    %1029 = vmatpush1.msra.mxu0 %v214
    %1030 = vmatprep.subr.mxu0 %v223
    %1031 = vmatpush1.msra.mxu0 %v222
    %1032 = vmatprep.subr.mxu0 %v231
    %1033 = vmatpush1.msra.mxu0 %v230
    %1034 = vmatprep.subr.mxu0 %v239
    %1035 = vmatpush1.msra.mxu0 %v238
    %1036 = vmatprep.subr.mxu0 %v247
    %1037 = vmatpush1.msra.mxu0 %v246
    %1038 = vmatprep.subr.mxu0 %v255
    %1039 = vmatpush1.msra.mxu0 %v254
    %1040 = vmatprep.subr.mxu0 %v263
    %1041 = vmatpush1.msra.mxu0 %v262
    %1042 = vmatprep.subr.mxu0 %v271
    %1043 = vmatpush1.msra.mxu0 %v270
    %1044 = vmatprep.subr.mxu0 %v279
    %1045 = vmatpush1.msra.mxu0 %v278
    %1046 = vmatprep.subr.mxu0 %v287
    %1047 = vmatpush1.msra.mxu0 %v286
    %1048 = vmatprep.subr.mxu0 %v295
    %1049 = vmatpush1.msra.mxu0 %v294
    %1050 = vmatprep.subr.mxu0 %v303
    %1051 = vmatpush1.msra.mxu0 %v302
    %1052 = vmatprep.subr.mxu0 %v311
    %1053 = vmatpush1.msra.mxu0 %v310
    %1054 = vmatprep.subr.mxu0 %v319
    %1055 = vmatpush1.msra.mxu0 %v318
    %1056 = vmatprep.subr.mxu0 %v327
    %1057 = vmatpush1.msra.mxu0 %v326
    %1058 = vmatprep.subr.mxu0 %v335
    %1059 = vmatpush1.msra.mxu0 %v334
    %1060 = vmatprep.subr.mxu0 %v343
    %1061 = vmatpush1.msra.mxu0 %v342
    %1062 = vmatprep.subr.mxu0 %v351
    %1063 = vmatpush1.msra.mxu0 %v350
    %1064 = vmatprep.mubr.f32.mxu0 0.0
    %1065 = vmatmul.mubr.f32.gmra.mrb[0].mxu0 0.0
    %v1066 = vpop.f32.mrb[0].mxu0
    %v1067 = vadd.f32 0.0, %v1066
    %v1068 = vpop.f32.mrb[0].mxu0
    %v1069 = vadd.f32 0.0, %v1068
    %1070 = vdwg.mxu0
    %1071 = vmatprep.subr.mxu0 %v105
    %1072 = vmatpush1.msra.mxu0 %v104
    %1073 = vmatprep.subr.mxu0 %v113
    %1074 = vmatpush1.msra.mxu0 %v112
    %1075 = vmatprep.subr.mxu0 %v121
    %1076 = vmatpush1.msra.mxu0 %v120
    %1077 = vmatprep.subr.mxu0 %v129
    %1078 = vmatpush1.msra.mxu0 %v128
    %1079 = vmatprep.subr.mxu0 %v137
    %1080 = vmatpush1.msra.mxu0 %v136
    %1081 = vmatprep.subr.mxu0 %v145
    %1082 = vmatpush1.msra.mxu0 %v144
    %1083 = vmatprep.subr.mxu0 %v153
    %1084 = vmatpush1.msra.mxu0 %v152
    %1085 = vmatprep.subr.mxu0 %v161
    %1086 = vmatpush1.msra.mxu0 %v160
    %1087 = vmatprep.subr.mxu0 %v169
    %1088 = vmatpush1.msra.mxu0 %v168
    %1089 = vmatprep.subr.mxu0 %v177
    %1090 = vmatpush1.msra.mxu0 %v176
    %1091 = vmatprep.subr.mxu0 %v185
    %1092 = vmatpush1.msra.mxu0 %v184
    %1093 = vmatprep.subr.mxu0 %v193
    %1094 = vmatpush1.msra.mxu0 %v192
    %1095 = vmatprep.subr.mxu0 %v201
    %1096 = vmatpush1.msra.mxu0 %v200
    %1097 = vmatprep.subr.mxu0 %v209
    %1098 = vmatpush1.msra.mxu0 %v208
    %1099 = vmatprep.subr.mxu0 %v217
    %1100 = vmatpush1.msra.mxu0 %v216
    %1101 = vmatprep.subr.mxu0 %v225
    %1102 = vmatpush1.msra.mxu0 %v224
    %1103 = vmatprep.subr.mxu0 %v233
    %1104 = vmatpush1.msra.mxu0 %v232
    %1105 = vmatprep.subr.mxu0 %v241
    %1106 = vmatpush1.msra.mxu0 %v240
    %1107 = vmatprep.subr.mxu0 %v249
    %1108 = vmatpush1.msra.mxu0 %v248
    %1109 = vmatprep.subr.mxu0 %v257
    %1110 = vmatpush1.msra.mxu0 %v256
    %1111 = vmatprep.subr.mxu0 %v265
    %1112 = vmatpush1.msra.mxu0 %v264
    %1113 = vmatprep.subr.mxu0 %v273
    %1114 = vmatpush1.msra.mxu0 %v272
    %1115 = vmatprep.subr.mxu0 %v281
    %1116 = vmatpush1.msra.mxu0 %v280
    %1117 = vmatprep.subr.mxu0 %v289
    %1118 = vmatpush1.msra.mxu0 %v288
    %1119 = vmatprep.subr.mxu0 %v297
    %1120 = vmatpush1.msra.mxu0 %v296
    %1121 = vmatprep.subr.mxu0 %v305
    %1122 = vmatpush1.msra.mxu0 %v304
    %1123 = vmatprep.subr.mxu0 %v313
    %1124 = vmatpush1.msra.mxu0 %v312
    %1125 = vmatprep.subr.mxu0 %v321
    %1126 = vmatpush1.msra.mxu0 %v320
    %1127 = vmatprep.subr.mxu0 %v329
    %1128 = vmatpush1.msra.mxu0 %v328
    %1129 = vmatprep.subr.mxu0 %v337
    %1130 = vmatpush1.msra.mxu0 %v336
    %1131 = vmatprep.subr.mxu0 %v345
    %1132 = vmatpush1.msra.mxu0 %v344
    %1133 = vmatprep.subr.mxu0 %v353
    %1134 = vmatpush1.msra.mxu0 %v352
    %1135 = vmatprep.mubr.f32.mxu0 0.0
    %1136 = vmatmul.mubr.f32.gmra.mrb[0].mxu0 0.0
    %v1137 = vpop.f32.mrb[0].mxu0
    %v1138 = vadd.f32 0.0, %v1137
    %v1139 = vpop.f32.mrb[0].mxu0
    %v1140 = vadd.f32 0.0, %v1139
    %1141 = vdwg.mxu0
    %v1142 = vadd.f32 %v850, %v925
    %v1143 = vadd.f32 %v851, %v927
    %v1144 = vadd.f32 %v852, %v996
    %v1145 = vadd.f32 %v853, %v998
    %v1146 = vadd.f32 %v854, %v1067
    %v1147 = vadd.f32 %v855, %v1069
    %v1148 = vadd.f32 %v856, %v1138
    %v1149 = vadd.f32 %v857, %v1140
    %v1150 = vxor.u32 %v1142, 2147483648
    %v1151 = vxor.u32 %v1143, 2147483648
    %v1152 = vmul.f32 %v1150, 1.442695
    %v1153 = vpow.pop %v1152
    %v1154 = vmul.f32 %v1151, 1.442695
    %v1155 = vpow.pop %v1154
    %v1156 = vadd.f32 %v1153, 1.0
    %v1157 = vadd.f32 %v1155, 1.0
    %v1158 = vrcp.pop %v1156
    %v1159 = vmul.f32 1.0, %v1158
    %v1160 = vrcp.pop %v1157
    %v1161 = vmul.f32 1.0, %v1160
    %v1162 = vxor.u32 %v1144, 2147483648
    %v1163 = vxor.u32 %v1145, 2147483648
    %v1164 = vmul.f32 %v1162, 1.442695
    %v1165 = vpow.pop %v1164
    %v1166 = vmul.f32 %v1163, 1.442695
    %v1167 = vpow.pop %v1166
    %v1168 = vadd.f32 %v1165, 1.0
    %v1169 = vadd.f32 %v1167, 1.0
    %v1170 = vrcp.pop %v1168
    %v1171 = vmul.f32 1.0, %v1170
    %v1172 = vrcp.pop %v1169
    %v1173 = vmul.f32 1.0, %v1172
    %v1174 = vtanh.pop %v1146
    %v1175 = vtanh.pop %v1147
    %v1176 = vxor.u32 %v1148, 2147483648
    %v1177 = vxor.u32 %v1149, 2147483648
    %v1178 = vmul.f32 %v1176, 1.442695
    %v1179 = vpow.pop %v1178
    %v1180 = vmul.f32 %v1177, 1.442695
    %v1181 = vpow.pop %v1180
    %v1182 = vadd.f32 %v1179, 1.0
    %v1183 = vadd.f32 %v1181, 1.0
    %v1184 = vrcp.pop %v1182
    %v1185 = vmul.f32 1.0, %v1184
    %v1186 = vrcp.pop %v1183
    %v1187 = vmul.f32 1.0, %v1186
    %v1188 = vmul.f32 %v1171, 0.0
    %v1189 = vmul.f32 %v1173, 0.0
    %v1190 = vmul.f32 %v1159, %v1174
    %v1191 = vmul.f32 %v1161, %v1175
    %v1192 = vadd.f32 %v1188, %v1190
    %v1193 = vadd.f32 %v1189, %v1191
    %v1194 = vtanh.pop %v1192
    %v1195 = vtanh.pop %v1193
    %v1196 = vmul.f32 %v1185, %v1194
    %v1197 = vmul.f32 %v1187, %v1195
    %1198 = vst [vmem:[#allocation3] sm:$0x3] %v1196
    %1199 = vst [vmem:[#allocation3 + $0x8] sm:$0x3] %v1197
    %v1200 = vld [vmem:[#allocation2] sm:$0xc]
    %v1201 = vld [vmem:[#allocation2 + $0x8] sm:$0xc]
    %v1202 = vld [vmem:[#allocation2 + $0x10] sm:$0xc]
    %v1203 = vld [vmem:[#allocation2 + $0x18] sm:$0xc]
    %v1204 = vld [vmem:[#allocation2 + $0x20] sm:$0xc]
    %v1205 = vld [vmem:[#allocation2 + $0x28] sm:$0xc]
    %v1206 = vld [vmem:[#allocation2 + $0x30] sm:$0xc]
    %v1207 = vld [vmem:[#allocation2 + $0x38] sm:$0xc]
    %1208 = vmatprep.subr.mxu0 %v99
    %1209 = vmatpush1.msra.mxu0 %v98
    %1210 = vmatprep.subr.mxu0 %v107
    %1211 = vmatpush1.msra.mxu0 %v106
    %1212 = vmatprep.subr.mxu0 %v115
    %1213 = vmatpush1.msra.mxu0 %v114
    %1214 = vmatprep.subr.mxu0 %v123
    %1215 = vmatpush1.msra.mxu0 %v122
    %1216 = vmatprep.subr.mxu0 %v131
    %1217 = vmatpush1.msra.mxu0 %v130
    %1218 = vmatprep.subr.mxu0 %v139
    %1219 = vmatpush1.msra.mxu0 %v138
    %1220 = vmatprep.subr.mxu0 %v147
    %1221 = vmatpush1.msra.mxu0 %v146
    %1222 = vmatprep.subr.mxu0 %v155
    %1223 = vmatpush1.msra.mxu0 %v154
    %1224 = vmatprep.subr.mxu0 %v163
    %1225 = vmatpush1.msra.mxu0 %v162
    %1226 = vmatprep.subr.mxu0 %v171
    %1227 = vmatpush1.msra.mxu0 %v170
    %1228 = vmatprep.subr.mxu0 %v179
    %1229 = vmatpush1.msra.mxu0 %v178
    %1230 = vmatprep.subr.mxu0 %v187
    %1231 = vmatpush1.msra.mxu0 %v186
    %1232 = vmatprep.subr.mxu0 %v195
    %1233 = vmatpush1.msra.mxu0 %v194
    %1234 = vmatprep.subr.mxu0 %v203
    %1235 = vmatpush1.msra.mxu0 %v202
    %1236 = vmatprep.subr.mxu0 %v211
    %1237 = vmatpush1.msra.mxu0 %v210
    %1238 = vmatprep.subr.mxu0 %v219
    %1239 = vmatpush1.msra.mxu0 %v218
    %1240 = vmatprep.subr.mxu0 %v227
    %1241 = vmatpush1.msra.mxu0 %v226
    %1242 = vmatprep.subr.mxu0 %v235
    %1243 = vmatpush1.msra.mxu0 %v234
    %1244 = vmatprep.subr.mxu0 %v243
    %1245 = vmatpush1.msra.mxu0 %v242
    %1246 = vmatprep.subr.mxu0 %v251
    %1247 = vmatpush1.msra.mxu0 %v250
    %1248 = vmatprep.subr.mxu0 %v259
    %1249 = vmatpush1.msra.mxu0 %v258
    %1250 = vmatprep.subr.mxu0 %v267
    %1251 = vmatpush1.msra.mxu0 %v266
    %1252 = vmatprep.subr.mxu0 %v275
    %1253 = vmatpush1.msra.mxu0 %v274
    %1254 = vmatprep.subr.mxu0 %v283
    %1255 = vmatpush1.msra.mxu0 %v282
    %1256 = vmatprep.subr.mxu0 %v291
    %1257 = vmatpush1.msra.mxu0 %v290
    %1258 = vmatprep.subr.mxu0 %v299
    %1259 = vmatpush1.msra.mxu0 %v298
    %1260 = vmatprep.subr.mxu0 %v307
    %1261 = vmatpush1.msra.mxu0 %v306
    %1262 = vmatprep.subr.mxu0 %v315
    %1263 = vmatpush1.msra.mxu0 %v314
    %1264 = vmatprep.subr.mxu0 %v323
    %1265 = vmatpush1.msra.mxu0 %v322
    %1266 = vmatprep.subr.mxu0 %v331
    %1267 = vmatpush1.msra.mxu0 %v330
    %1268 = vmatprep.subr.mxu0 %v339
    %1269 = vmatpush1.msra.mxu0 %v338
    %1270 = vmatprep.subr.mxu0 %v347
    %1271 = vmatpush1.msra.mxu0 %v346
    %1272 = vmatprep.mubr.f32.mxu0 %v1197
    %1273 = vmatmul.mubr.f32.gmra.mrb[0].mxu0 %v1196
    %v1274 = vpop.f32.mrb[0].mxu0
    %v1275 = vadd.f32 0.0, %v1274
    %v1276 = vpop.f32.mrb[0].mxu0
    %v1277 = vadd.f32 0.0, %v1276
    %1278 = vdwg.mxu0
    %1279 = vmatprep.subr.mxu0 %v101
    %1280 = vmatpush1.msra.mxu0 %v100
    %1281 = vmatprep.subr.mxu0 %v109
    %1282 = vmatpush1.msra.mxu0 %v108
    %1283 = vmatprep.subr.mxu0 %v117
    %1284 = vmatpush1.msra.mxu0 %v116
    %1285 = vmatprep.subr.mxu0 %v125
    %1286 = vmatpush1.msra.mxu0 %v124
    %1287 = vmatprep.subr.mxu0 %v133
    %1288 = vmatpush1.msra.mxu0 %v132
    %1289 = vmatprep.subr.mxu0 %v141
    %1290 = vmatpush1.msra.mxu0 %v140
    %1291 = vmatprep.subr.mxu0 %v149
    %1292 = vmatpush1.msra.mxu0 %v148
    %1293 = vmatprep.subr.mxu0 %v157
    %1294 = vmatpush1.msra.mxu0 %v156
    %1295 = vmatprep.subr.mxu0 %v165
    %1296 = vmatpush1.msra.mxu0 %v164
    %1297 = vmatprep.subr.mxu0 %v173
    %1298 = vmatpush1.msra.mxu0 %v172
    %1299 = vmatprep.subr.mxu0 %v181
    %1300 = vmatpush1.msra.mxu0 %v180
    %1301 = vmatprep.subr.mxu0 %v189
    %1302 = vmatpush1.msra.mxu0 %v188
    %1303 = vmatprep.subr.mxu0 %v197
    %1304 = vmatpush1.msra.mxu0 %v196
    %1305 = vmatprep.subr.mxu0 %v205
    %1306 = vmatpush1.msra.mxu0 %v204
    %1307 = vmatprep.subr.mxu0 %v213
    %1308 = vmatpush1.msra.mxu0 %v212
    %1309 = vmatprep.subr.mxu0 %v221
    %1310 = vmatpush1.msra.mxu0 %v220
    %1311 = vmatprep.subr.mxu0 %v229
    %1312 = vmatpush1.msra.mxu0 %v228
    %1313 = vmatprep.subr.mxu0 %v237
    %1314 = vmatpush1.msra.mxu0 %v236
    %1315 = vmatprep.subr.mxu0 %v245
    %1316 = vmatpush1.msra.mxu0 %v244
    %1317 = vmatprep.subr.mxu0 %v253
    %1318 = vmatpush1.msra.mxu0 %v252
    %1319 = vmatprep.subr.mxu0 %v261
    %1320 = vmatpush1.msra.mxu0 %v260
    %1321 = vmatprep.subr.mxu0 %v269
    %1322 = vmatpush1.msra.mxu0 %v268
    %1323 = vmatprep.subr.mxu0 %v277
    %1324 = vmatpush1.msra.mxu0 %v276
    %1325 = vmatprep.subr.mxu0 %v285
    %1326 = vmatpush1.msra.mxu0 %v284
    %1327 = vmatprep.subr.mxu0 %v293
    %1328 = vmatpush1.msra.mxu0 %v292
    %1329 = vmatprep.subr.mxu0 %v301
    %1330 = vmatpush1.msra.mxu0 %v300
    %1331 = vmatprep.subr.mxu0 %v309
    %1332 = vmatpush1.msra.mxu0 %v308
    %1333 = vmatprep.subr.mxu0 %v317
    %1334 = vmatpush1.msra.mxu0 %v316
    %1335 = vmatprep.subr.mxu0 %v325
    %1336 = vmatpush1.msra.mxu0 %v324
    %1337 = vmatprep.subr.mxu0 %v333
    %1338 = vmatpush1.msra.mxu0 %v332
    %1339 = vmatprep.subr.mxu0 %v341
    %1340 = vmatpush1.msra.mxu0 %v340
    %1341 = vmatprep.subr.mxu0 %v349
    %1342 = vmatpush1.msra.mxu0 %v348
    %1343 = vmatprep.mubr.f32.mxu0 %v1197
    %1344 = vmatmul.mubr.f32.gmra.mrb[0].mxu0 %v1196
    %v1345 = vpop.f32.mrb[0].mxu0
    %v1346 = vadd.f32 0.0, %v1345
    %v1347 = vpop.f32.mrb[0].mxu0
    %v1348 = vadd.f32 0.0, %v1347
    %1349 = vdwg.mxu0
    %1350 = vmatprep.subr.mxu0 %v103
    %1351 = vmatpush1.msra.mxu0 %v102
    %1352 = vmatprep.subr.mxu0 %v111
    %1353 = vmatpush1.msra.mxu0 %v110
    %1354 = vmatprep.subr.mxu0 %v119
    %1355 = vmatpush1.msra.mxu0 %v118
    %1356 = vmatprep.subr.mxu0 %v127
    %1357 = vmatpush1.msra.mxu0 %v126
    %1358 = vmatprep.subr.mxu0 %v135
    %1359 = vmatpush1.msra.mxu0 %v134
    %1360 = vmatprep.subr.mxu0 %v143
    %1361 = vmatpush1.msra.mxu0 %v142
    %1362 = vmatprep.subr.mxu0 %v151
    %1363 = vmatpush1.msra.mxu0 %v150
    %1364 = vmatprep.subr.mxu0 %v159
    %1365 = vmatpush1.msra.mxu0 %v158
    %1366 = vmatprep.subr.mxu0 %v167
    %1367 = vmatpush1.msra.mxu0 %v166
    %1368 = vmatprep.subr.mxu0 %v175
    %1369 = vmatpush1.msra.mxu0 %v174
    %1370 = vmatprep.subr.mxu0 %v183
    %1371 = vmatpush1.msra.mxu0 %v182
    %1372 = vmatprep.subr.mxu0 %v191
    %1373 = vmatpush1.msra.mxu0 %v190
    %1374 = vmatprep.subr.mxu0 %v199
    %1375 = vmatpush1.msra.mxu0 %v198
    %1376 = vmatprep.subr.mxu0 %v207
    %1377 = vmatpush1.msra.mxu0 %v206
    %1378 = vmatprep.subr.mxu0 %v215
    %1379 = vmatpush1.msra.mxu0 %v214
    %1380 = vmatprep.subr.mxu0 %v223
    %1381 = vmatpush1.msra.mxu0 %v222
    %1382 = vmatprep.subr.mxu0 %v231
    %1383 = vmatpush1.msra.mxu0 %v230
    %1384 = vmatprep.subr.mxu0 %v239
    %1385 = vmatpush1.msra.mxu0 %v238
    %1386 = vmatprep.subr.mxu0 %v247
    %1387 = vmatpush1.msra.mxu0 %v246
    %1388 = vmatprep.subr.mxu0 %v255
    %1389 = vmatpush1.msra.mxu0 %v254
    %1390 = vmatprep.subr.mxu0 %v263
    %1391 = vmatpush1.msra.mxu0 %v262
    %1392 = vmatprep.subr.mxu0 %v271
    %1393 = vmatpush1.msra.mxu0 %v270
    %1394 = vmatprep.subr.mxu0 %v279
    %1395 = vmatpush1.msra.mxu0 %v278
    %1396 = vmatprep.subr.mxu0 %v287
    %1397 = vmatpush1.msra.mxu0 %v286
    %1398 = vmatprep.subr.mxu0 %v295
    %1399 = vmatpush1.msra.mxu0 %v294
    %1400 = vmatprep.subr.mxu0 %v303
    %1401 = vmatpush1.msra.mxu0 %v302
    %1402 = vmatprep.subr.mxu0 %v311
    %1403 = vmatpush1.msra.mxu0 %v310
    %1404 = vmatprep.subr.mxu0 %v319
    %1405 = vmatpush1.msra.mxu0 %v318
    %1406 = vmatprep.subr.mxu0 %v327
    %1407 = vmatpush1.msra.mxu0 %v326
    %1408 = vmatprep.subr.mxu0 %v335
    %1409 = vmatpush1.msra.mxu0 %v334
    %1410 = vmatprep.subr.mxu0 %v343
    %1411 = vmatpush1.msra.mxu0 %v342
    %1412 = vmatprep.subr.mxu0 %v351
    %1413 = vmatpush1.msra.mxu0 %v350
    %1414 = vmatprep.mubr.f32.mxu0 %v1197
    %1415 = vmatmul.mubr.f32.gmra.mrb[0].mxu0 %v1196
    %v1416 = vpop.f32.mrb[0].mxu0
    %v1417 = vadd.f32 0.0, %v1416
    %v1418 = vpop.f32.mrb[0].mxu0
    %v1419 = vadd.f32 0.0, %v1418
    %1420 = vdwg.mxu0
    %1421 = vmatprep.subr.mxu0 %v105
    %1422 = vmatpush1.msra.mxu0 %v104
    %1423 = vmatprep.subr.mxu0 %v113
    %1424 = vmatpush1.msra.mxu0 %v112
    %1425 = vmatprep.subr.mxu0 %v121
    %1426 = vmatpush1.msra.mxu0 %v120
    %1427 = vmatprep.subr.mxu0 %v129
    %1428 = vmatpush1.msra.mxu0 %v128
    %1429 = vmatprep.subr.mxu0 %v137
    %1430 = vmatpush1.msra.mxu0 %v136
    %1431 = vmatprep.subr.mxu0 %v145
    %1432 = vmatpush1.msra.mxu0 %v144
    %1433 = vmatprep.subr.mxu0 %v153
    %1434 = vmatpush1.msra.mxu0 %v152
    %1435 = vmatprep.subr.mxu0 %v161
    %1436 = vmatpush1.msra.mxu0 %v160
    %1437 = vmatprep.subr.mxu0 %v169
    %1438 = vmatpush1.msra.mxu0 %v168
    %1439 = vmatprep.subr.mxu0 %v177
    %1440 = vmatpush1.msra.mxu0 %v176
    %1441 = vmatprep.subr.mxu0 %v185
    %1442 = vmatpush1.msra.mxu0 %v184
    %1443 = vmatprep.subr.mxu0 %v193
    %1444 = vmatpush1.msra.mxu0 %v192
    %1445 = vmatprep.subr.mxu0 %v201
    %1446 = vmatpush1.msra.mxu0 %v200
    %1447 = vmatprep.subr.mxu0 %v209
    %1448 = vmatpush1.msra.mxu0 %v208
    %1449 = vmatprep.subr.mxu0 %v217
    %1450 = vmatpush1.msra.mxu0 %v216
    %1451 = vmatprep.subr.mxu0 %v225
    %1452 = vmatpush1.msra.mxu0 %v224
    %1453 = vmatprep.subr.mxu0 %v233
    %1454 = vmatpush1.msra.mxu0 %v232
    %1455 = vmatprep.subr.mxu0 %v241
    %1456 = vmatpush1.msra.mxu0 %v240
    %1457 = vmatprep.subr.mxu0 %v249
    %1458 = vmatpush1.msra.mxu0 %v248
    %1459 = vmatprep.subr.mxu0 %v257
    %1460 = vmatpush1.msra.mxu0 %v256
    %1461 = vmatprep.subr.mxu0 %v265
    %1462 = vmatpush1.msra.mxu0 %v264
    %1463 = vmatprep.subr.mxu0 %v273
    %1464 = vmatpush1.msra.mxu0 %v272
    %1465 = vmatprep.subr.mxu0 %v281
    %1466 = vmatpush1.msra.mxu0 %v280
    %1467 = vmatprep.subr.mxu0 %v289
    %1468 = vmatpush1.msra.mxu0 %v288
    %1469 = vmatprep.subr.mxu0 %v297
    %1470 = vmatpush1.msra.mxu0 %v296
    %1471 = vmatprep.subr.mxu0 %v305
    %1472 = vmatpush1.msra.mxu0 %v304
    %1473 = vmatprep.subr.mxu0 %v313
    %1474 = vmatpush1.msra.mxu0 %v312
    %1475 = vmatprep.subr.mxu0 %v321
    %1476 = vmatpush1.msra.mxu0 %v320
    %1477 = vmatprep.subr.mxu0 %v329
    %1478 = vmatpush1.msra.mxu0 %v328
    %1479 = vmatprep.subr.mxu0 %v337
    %1480 = vmatpush1.msra.mxu0 %v336
    %1481 = vmatprep.subr.mxu0 %v345
    %1482 = vmatpush1.msra.mxu0 %v344
    %1483 = vmatprep.subr.mxu0 %v353
    %1484 = vmatpush1.msra.mxu0 %v352
    %1485 = vmatprep.mubr.f32.mxu0 %v1197
    %1486 = vmatmul.mubr.f32.gmra.mrb[0].mxu0 %v1196
    %v1487 = vpop.f32.mrb[0].mxu0
    %v1488 = vadd.f32 0.0, %v1487
    %v1489 = vpop.f32.mrb[0].mxu0
    %v1490 = vadd.f32 0.0, %v1489
    %1491 = vdwg.mxu0
    %v1500 = vrot.slane %v1275, 6
    %v1501 = vrot.slane %v1277, 6
    %v1502 = vrot.slane %v1346, 6
    %v1503 = vrot.slane %v1348, 6
    %v1504 = vrot.slane %v1417, 6
    %v1505 = vrot.slane %v1419, 6
    %v1506 = vrot.slane %v1488, 6
    %v1507 = vrot.slane %v1490, 6
    %v1516 = vadd.f32 %v1200, %v1500
    %v1517 = vadd.f32 %v1201, %v1501
    %v1518 = vadd.f32 %v1202, %v1502
    %v1519 = vadd.f32 %v1203, %v1503
    %v1520 = vadd.f32 %v1204, %v1504
    %v1521 = vadd.f32 %v1205, %v1505
    %v1522 = vadd.f32 %v1206, %v1506
    %v1523 = vadd.f32 %v1207, %v1507
    %v1524 = vxor.u32 %v1516, 2147483648
    %v1525 = vxor.u32 %v1517, 2147483648
    %v1526 = vmul.f32 %v1524, 1.442695
    %v1527 = vpow.pop %v1526
    %v1528 = vmul.f32 %v1525, 1.442695
    %v1529 = vpow.pop %v1528
    %v1530 = vadd.f32 %v1527, 1.0
    %v1531 = vadd.f32 %v1529, 1.0
    %v1532 = vrcp.pop %v1530
    %v1533 = vmul.f32 1.0, %v1532
    %v1534 = vrcp.pop %v1531
    %v1535 = vmul.f32 1.0, %v1534
    %v1536 = vxor.u32 %v1518, 2147483648
    %v1537 = vxor.u32 %v1519, 2147483648
    %v1538 = vmul.f32 %v1536, 1.442695
    %v1539 = vpow.pop %v1538
    %v1540 = vmul.f32 %v1537, 1.442695
    %v1541 = vpow.pop %v1540
    %v1542 = vadd.f32 %v1539, 1.0
    %v1543 = vadd.f32 %v1541, 1.0
    %v1544 = vrcp.pop %v1542
    %v1545 = vmul.f32 1.0, %v1544
    %v1546 = vrcp.pop %v1543
    %v1547 = vmul.f32 1.0, %v1546
    %v1548 = vtanh.pop %v1520
    %v1549 = vtanh.pop %v1521
    %v1550 = vxor.u32 %v1522, 2147483648
    %v1551 = vxor.u32 %v1523, 2147483648
    %v1552 = vmul.f32 %v1550, 1.442695
    %v1553 = vpow.pop %v1552
    %v1554 = vmul.f32 %v1551, 1.442695
    %v1555 = vpow.pop %v1554
    %v1556 = vadd.f32 %v1553, 1.0
    %v1557 = vadd.f32 %v1555, 1.0
    %v1558 = vrcp.pop %v1556
    %v1559 = vmul.f32 1.0, %v1558
    %v1560 = vrcp.pop %v1557
    %v1561 = vmul.f32 1.0, %v1560
    %v1564 = vrot.slane %v1192, 6
    %v1565 = vrot.slane %v1193, 6
    %v1568 = vmul.f32 %v1545, %v1564
    %v1569 = vmul.f32 %v1547, %v1565
    %v1570 = vmul.f32 %v1533, %v1548
    %v1571 = vmul.f32 %v1535, %v1549
    %v1572 = vadd.f32 %v1568, %v1570
    %v1573 = vadd.f32 %v1569, %v1571
    %v1574 = vtanh.pop %v1572
    %v1575 = vtanh.pop %v1573
    %v1576 = vmul.f32 %v1559, %v1574
    %v1577 = vmul.f32 %v1561, %v1575
    %1578 = vst [vmem:[#allocation3] sm:$0xc] %v1576
    %1579 = vst [vmem:[#allocation3 + $0x8] sm:$0xc] %v1577
    %v1580 = vld [vmem:[#allocation2] sm:$0x30]
    %v1581 = vld [vmem:[#allocation2 + $0x8] sm:$0x30]
    %v1582 = vld [vmem:[#allocation2 + $0x10] sm:$0x30]
    %v1583 = vld [vmem:[#allocation2 + $0x18] sm:$0x30]
    %v1584 = vld [vmem:[#allocation2 + $0x20] sm:$0x30]
    %v1585 = vld [vmem:[#allocation2 + $0x28] sm:$0x30]
    %v1586 = vld [vmem:[#allocation2 + $0x30] sm:$0x30]
    %v1587 = vld [vmem:[#allocation2 + $0x38] sm:$0x30]
    %v1590 = vrot.slane %v1576, 2
    %v1591 = vrot.slane %v1577, 2
    %1594 = vmatprep.subr.mxu0 %v99
    %1595 = vmatpush1.msra.mxu0 %v98
    %1596 = vmatprep.subr.mxu0 %v107
    %1597 = vmatpush1.msra.mxu0 %v106
    %1598 = vmatprep.subr.mxu0 %v115
    %1599 = vmatpush1.msra.mxu0 %v114
    %1600 = vmatprep.subr.mxu0 %v123
    %1601 = vmatpush1.msra.mxu0 %v122
    %1602 = vmatprep.subr.mxu0 %v131
    %1603 = vmatpush1.msra.mxu0 %v130
    %1604 = vmatprep.subr.mxu0 %v139
    %1605 = vmatpush1.msra.mxu0 %v138
    %1606 = vmatprep.subr.mxu0 %v147
    %1607 = vmatpush1.msra.mxu0 %v146
    %1608 = vmatprep.subr.mxu0 %v155
    %1609 = vmatpush1.msra.mxu0 %v154
    %1610 = vmatprep.subr.mxu0 %v163
    %1611 = vmatpush1.msra.mxu0 %v162
    %1612 = vmatprep.subr.mxu0 %v171
    %1613 = vmatpush1.msra.mxu0 %v170
    %1614 = vmatprep.subr.mxu0 %v179
    %1615 = vmatpush1.msra.mxu0 %v178
    %1616 = vmatprep.subr.mxu0 %v187
    %1617 = vmatpush1.msra.mxu0 %v186
    %1618 = vmatprep.subr.mxu0 %v195
    %1619 = vmatpush1.msra.mxu0 %v194
    %1620 = vmatprep.subr.mxu0 %v203
    %1621 = vmatpush1.msra.mxu0 %v202
    %1622 = vmatprep.subr.mxu0 %v211
    %1623 = vmatpush1.msra.mxu0 %v210
    %1624 = vmatprep.subr.mxu0 %v219
    %1625 = vmatpush1.msra.mxu0 %v218
    %1626 = vmatprep.subr.mxu0 %v227
    %1627 = vmatpush1.msra.mxu0 %v226
    %1628 = vmatprep.subr.mxu0 %v235
    %1629 = vmatpush1.msra.mxu0 %v234
    %1630 = vmatprep.subr.mxu0 %v243
    %1631 = vmatpush1.msra.mxu0 %v242
    %1632 = vmatprep.subr.mxu0 %v251
    %1633 = vmatpush1.msra.mxu0 %v250
    %1634 = vmatprep.subr.mxu0 %v259
    %1635 = vmatpush1.msra.mxu0 %v258
    %1636 = vmatprep.subr.mxu0 %v267
    %1637 = vmatpush1.msra.mxu0 %v266
    %1638 = vmatprep.subr.mxu0 %v275
    %1639 = vmatpush1.msra.mxu0 %v274
    %1640 = vmatprep.subr.mxu0 %v283
    %1641 = vmatpush1.msra.mxu0 %v282
    %1642 = vmatprep.subr.mxu0 %v291
    %1643 = vmatpush1.msra.mxu0 %v290
    %1644 = vmatprep.subr.mxu0 %v299
    %1645 = vmatpush1.msra.mxu0 %v298
    %1646 = vmatprep.subr.mxu0 %v307
    %1647 = vmatpush1.msra.mxu0 %v306
    %1648 = vmatprep.subr.mxu0 %v315
    %1649 = vmatpush1.msra.mxu0 %v314
    %1650 = vmatprep.subr.mxu0 %v323
    %1651 = vmatpush1.msra.mxu0 %v322
    %1652 = vmatprep.subr.mxu0 %v331
    %1653 = vmatpush1.msra.mxu0 %v330
    %1654 = vmatprep.subr.mxu0 %v339
    %1655 = vmatpush1.msra.mxu0 %v338
    %1656 = vmatprep.subr.mxu0 %v347
    %1657 = vmatpush1.msra.mxu0 %v346
    %1658 = vmatprep.mubr.f32.mxu0 %v1591
    %1659 = vmatmul.mubr.f32.gmra.mrb[0].mxu0 %v1590
    %v1660 = vpop.f32.mrb[0].mxu0
    %v1661 = vadd.f32 0.0, %v1660
    %v1662 = vpop.f32.mrb[0].mxu0
    %v1663 = vadd.f32 0.0, %v1662
    %1664 = vdwg.mxu0
    %1665 = vmatprep.subr.mxu0 %v101
    %1666 = vmatpush1.msra.mxu0 %v100
    %1667 = vmatprep.subr.mxu0 %v109
    %1668 = vmatpush1.msra.mxu0 %v108
    %1669 = vmatprep.subr.mxu0 %v117
    %1670 = vmatpush1.msra.mxu0 %v116
    %1671 = vmatprep.subr.mxu0 %v125
    %1672 = vmatpush1.msra.mxu0 %v124
    %1673 = vmatprep.subr.mxu0 %v133
    %1674 = vmatpush1.msra.mxu0 %v132
    %1675 = vmatprep.subr.mxu0 %v141
    %1676 = vmatpush1.msra.mxu0 %v140
    %1677 = vmatprep.subr.mxu0 %v149
    %1678 = vmatpush1.msra.mxu0 %v148
    %1679 = vmatprep.subr.mxu0 %v157
    %1680 = vmatpush1.msra.mxu0 %v156
    %1681 = vmatprep.subr.mxu0 %v165
    %1682 = vmatpush1.msra.mxu0 %v164
    %1683 = vmatprep.subr.mxu0 %v173
    %1684 = vmatpush1.msra.mxu0 %v172
    %1685 = vmatprep.subr.mxu0 %v181
    %1686 = vmatpush1.msra.mxu0 %v180
    %1687 = vmatprep.subr.mxu0 %v189
    %1688 = vmatpush1.msra.mxu0 %v188
    %1689 = vmatprep.subr.mxu0 %v197
    %1690 = vmatpush1.msra.mxu0 %v196
    %1691 = vmatprep.subr.mxu0 %v205
    %1692 = vmatpush1.msra.mxu0 %v204
    %1693 = vmatprep.subr.mxu0 %v213
    %1694 = vmatpush1.msra.mxu0 %v212
    %1695 = vmatprep.subr.mxu0 %v221
    %1696 = vmatpush1.msra.mxu0 %v220
    %1697 = vmatprep.subr.mxu0 %v229
    %1698 = vmatpush1.msra.mxu0 %v228
    %1699 = vmatprep.subr.mxu0 %v237
    %1700 = vmatpush1.msra.mxu0 %v236
    %1701 = vmatprep.subr.mxu0 %v245
    %1702 = vmatpush1.msra.mxu0 %v244
    %1703 = vmatprep.subr.mxu0 %v253
    %1704 = vmatpush1.msra.mxu0 %v252
    %1705 = vmatprep.subr.mxu0 %v261
    %1706 = vmatpush1.msra.mxu0 %v260
    %1707 = vmatprep.subr.mxu0 %v269
    %1708 = vmatpush1.msra.mxu0 %v268
    %1709 = vmatprep.subr.mxu0 %v277
    %1710 = vmatpush1.msra.mxu0 %v276
    %1711 = vmatprep.subr.mxu0 %v285
    %1712 = vmatpush1.msra.mxu0 %v284
    %1713 = vmatprep.subr.mxu0 %v293
    %1714 = vmatpush1.msra.mxu0 %v292
    %1715 = vmatprep.subr.mxu0 %v301
    %1716 = vmatpush1.msra.mxu0 %v300
    %1717 = vmatprep.subr.mxu0 %v309
    %1718 = vmatpush1.msra.mxu0 %v308
    %1719 = vmatprep.subr.mxu0 %v317
    %1720 = vmatpush1.msra.mxu0 %v316
    %1721 = vmatprep.subr.mxu0 %v325
    %1722 = vmatpush1.msra.mxu0 %v324
    %1723 = vmatprep.subr.mxu0 %v333
    %1724 = vmatpush1.msra.mxu0 %v332
    %1725 = vmatprep.subr.mxu0 %v341
    %1726 = vmatpush1.msra.mxu0 %v340
    %1727 = vmatprep.subr.mxu0 %v349
    %1728 = vmatpush1.msra.mxu0 %v348
    %1729 = vmatprep.mubr.f32.mxu0 %v1591
    %1730 = vmatmul.mubr.f32.gmra.mrb[0].mxu0 %v1590
    %v1731 = vpop.f32.mrb[0].mxu0
    %v1732 = vadd.f32 0.0, %v1731
    %v1733 = vpop.f32.mrb[0].mxu0
    %v1734 = vadd.f32 0.0, %v1733
    %1735 = vdwg.mxu0
    %1736 = vmatprep.subr.mxu0 %v103
    %1737 = vmatpush1.msra.mxu0 %v102
    %1738 = vmatprep.subr.mxu0 %v111
    %1739 = vmatpush1.msra.mxu0 %v110
    %1740 = vmatprep.subr.mxu0 %v119
    %1741 = vmatpush1.msra.mxu0 %v118
    %1742 = vmatprep.subr.mxu0 %v127
    %1743 = vmatpush1.msra.mxu0 %v126
    %1744 = vmatprep.subr.mxu0 %v135
    %1745 = vmatpush1.msra.mxu0 %v134
    %1746 = vmatprep.subr.mxu0 %v143
    %1747 = vmatpush1.msra.mxu0 %v142
    %1748 = vmatprep.subr.mxu0 %v151
    %1749 = vmatpush1.msra.mxu0 %v150
    %1750 = vmatprep.subr.mxu0 %v159
    %1751 = vmatpush1.msra.mxu0 %v158
    %1752 = vmatprep.subr.mxu0 %v167
    %1753 = vmatpush1.msra.mxu0 %v166
    %1754 = vmatprep.subr.mxu0 %v175
    %1755 = vmatpush1.msra.mxu0 %v174
    %1756 = vmatprep.subr.mxu0 %v183
    %1757 = vmatpush1.msra.mxu0 %v182
    %1758 = vmatprep.subr.mxu0 %v191
    %1759 = vmatpush1.msra.mxu0 %v190
    %1760 = vmatprep.subr.mxu0 %v199
    %1761 = vmatpush1.msra.mxu0 %v198
    %1762 = vmatprep.subr.mxu0 %v207
    %1763 = vmatpush1.msra.mxu0 %v206
    %1764 = vmatprep.subr.mxu0 %v215
    %1765 = vmatpush1.msra.mxu0 %v214
    %1766 = vmatprep.subr.mxu0 %v223
    %1767 = vmatpush1.msra.mxu0 %v222
    %1768 = vmatprep.subr.mxu0 %v231
    %1769 = vmatpush1.msra.mxu0 %v230
    %1770 = vmatprep.subr.mxu0 %v239
    %1771 = vmatpush1.msra.mxu0 %v238
    %1772 = vmatprep.subr.mxu0 %v247
    %1773 = vmatpush1.msra.mxu0 %v246
    %1774 = vmatprep.subr.mxu0 %v255
    %1775 = vmatpush1.msra.mxu0 %v254
    %1776 = vmatprep.subr.mxu0 %v263
    %1777 = vmatpush1.msra.mxu0 %v262
    %1778 = vmatprep.subr.mxu0 %v271
    %1779 = vmatpush1.msra.mxu0 %v270
    %1780 = vmatprep.subr.mxu0 %v279
    %1781 = vmatpush1.msra.mxu0 %v278
    %1782 = vmatprep.subr.mxu0 %v287
    %1783 = vmatpush1.msra.mxu0 %v286
    %1784 = vmatprep.subr.mxu0 %v295
    %1785 = vmatpush1.msra.mxu0 %v294
    %1786 = vmatprep.subr.mxu0 %v303
    %1787 = vmatpush1.msra.mxu0 %v302
    %1788 = vmatprep.subr.mxu0 %v311
    %1789 = vmatpush1.msra.mxu0 %v310
    %1790 = vmatprep.subr.mxu0 %v319
    %1791 = vmatpush1.msra.mxu0 %v318
    %1792 = vmatprep.subr.mxu0 %v327
    %1793 = vmatpush1.msra.mxu0 %v326
    %1794 = vmatprep.subr.mxu0 %v335
    %1795 = vmatpush1.msra.mxu0 %v334
    %1796 = vmatprep.subr.mxu0 %v343
    %1797 = vmatpush1.msra.mxu0 %v342
    %1798 = vmatprep.subr.mxu0 %v351
    %1799 = vmatpush1.msra.mxu0 %v350
    %1800 = vmatprep.mubr.f32.mxu0 %v1591
    %1801 = vmatmul.mubr.f32.gmra.mrb[0].mxu0 %v1590
    %v1802 = vpop.f32.mrb[0].mxu0
    %v1803 = vadd.f32 0.0, %v1802
    %v1804 = vpop.f32.mrb[0].mxu0
    %v1805 = vadd.f32 0.0, %v1804
    %1806 = vdwg.mxu0
    %1807 = vmatprep.subr.mxu0 %v105
    %1808 = vmatpush1.msra.mxu0 %v104
    %1809 = vmatprep.subr.mxu0 %v113
    %1810 = vmatpush1.msra.mxu0 %v112
    %1811 = vmatprep.subr.mxu0 %v121
    %1812 = vmatpush1.msra.mxu0 %v120
    %1813 = vmatprep.subr.mxu0 %v129
    %1814 = vmatpush1.msra.mxu0 %v128
    %1815 = vmatprep.subr.mxu0 %v137
    %1816 = vmatpush1.msra.mxu0 %v136
    %1817 = vmatprep.subr.mxu0 %v145
    %1818 = vmatpush1.msra.mxu0 %v144
    %1819 = vmatprep.subr.mxu0 %v153
    %1820 = vmatpush1.msra.mxu0 %v152
    %1821 = vmatprep.subr.mxu0 %v161
    %1822 = vmatpush1.msra.mxu0 %v160
    %1823 = vmatprep.subr.mxu0 %v169
    %1824 = vmatpush1.msra.mxu0 %v168
    %1825 = vmatprep.subr.mxu0 %v177
    %1826 = vmatpush1.msra.mxu0 %v176
    %1827 = vmatprep.subr.mxu0 %v185
    %1828 = vmatpush1.msra.mxu0 %v184
    %1829 = vmatprep.subr.mxu0 %v193
    %1830 = vmatpush1.msra.mxu0 %v192
    %1831 = vmatprep.subr.mxu0 %v201
    %1832 = vmatpush1.msra.mxu0 %v200
    %1833 = vmatprep.subr.mxu0 %v209
    %1834 = vmatpush1.msra.mxu0 %v208
    %1835 = vmatprep.subr.mxu0 %v217
    %1836 = vmatpush1.msra.mxu0 %v216
    %1837 = vmatprep.subr.mxu0 %v225
    %1838 = vmatpush1.msra.mxu0 %v224
    %1839 = vmatprep.subr.mxu0 %v233
    %1840 = vmatpush1.msra.mxu0 %v232
    %1841 = vmatprep.subr.mxu0 %v241
    %1842 = vmatpush1.msra.mxu0 %v240
    %1843 = vmatprep.subr.mxu0 %v249
    %1844 = vmatpush1.msra.mxu0 %v248
    %1845 = vmatprep.subr.mxu0 %v257
    %1846 = vmatpush1.msra.mxu0 %v256
    %1847 = vmatprep.subr.mxu0 %v265
    %1848 = vmatpush1.msra.mxu0 %v264
    %1849 = vmatprep.subr.mxu0 %v273
    %1850 = vmatpush1.msra.mxu0 %v272
    %1851 = vmatprep.subr.mxu0 %v281
    %1852 = vmatpush1.msra.mxu0 %v280
    %1853 = vmatprep.subr.mxu0 %v289
    %1854 = vmatpush1.msra.mxu0 %v288
    %1855 = vmatprep.subr.mxu0 %v297
    %1856 = vmatpush1.msra.mxu0 %v296
    %1857 = vmatprep.subr.mxu0 %v305
    %1858 = vmatpush1.msra.mxu0 %v304
    %1859 = vmatprep.subr.mxu0 %v313
    %1860 = vmatpush1.msra.mxu0 %v312
    %1861 = vmatprep.subr.mxu0 %v321
    %1862 = vmatpush1.msra.mxu0 %v320
    %1863 = vmatprep.subr.mxu0 %v329
    %1864 = vmatpush1.msra.mxu0 %v328
    %1865 = vmatprep.subr.mxu0 %v337
    %1866 = vmatpush1.msra.mxu0 %v336
    %1867 = vmatprep.subr.mxu0 %v345
    %1868 = vmatpush1.msra.mxu0 %v344
    %1869 = vmatprep.subr.mxu0 %v353
    %1870 = vmatpush1.msra.mxu0 %v352
    %1871 = vmatprep.mubr.f32.mxu0 %v1591
    %1872 = vmatmul.mubr.f32.gmra.mrb[0].mxu0 %v1590
    %v1873 = vpop.f32.mrb[0].mxu0
    %v1874 = vadd.f32 0.0, %v1873
    %v1875 = vpop.f32.mrb[0].mxu0
    %v1876 = vadd.f32 0.0, %v1875
    %1877 = vdwg.mxu0
    %v1886 = vrot.slane %v1661, 4
    %v1887 = vrot.slane %v1663, 4
    %v1888 = vrot.slane %v1732, 4
    %v1889 = vrot.slane %v1734, 4
    %v1890 = vrot.slane %v1803, 4
    %v1891 = vrot.slane %v1805, 4
    %v1892 = vrot.slane %v1874, 4
    %v1893 = vrot.slane %v1876, 4
    %v1902 = vadd.f32 %v1580, %v1886
    %v1903 = vadd.f32 %v1581, %v1887
    %v1904 = vadd.f32 %v1582, %v1888
    %v1905 = vadd.f32 %v1583, %v1889
    %v1906 = vadd.f32 %v1584, %v1890
    %v1907 = vadd.f32 %v1585, %v1891
    %v1908 = vadd.f32 %v1586, %v1892
    %v1909 = vadd.f32 %v1587, %v1893
    %v1910 = vxor.u32 %v1902, 2147483648
    %v1911 = vxor.u32 %v1903, 2147483648
    %v1912 = vmul.f32 %v1910, 1.442695
    %v1913 = vpow.pop %v1912
    %v1914 = vmul.f32 %v1911, 1.442695
    %v1915 = vpow.pop %v1914
    %v1916 = vadd.f32 %v1913, 1.0
    %v1917 = vadd.f32 %v1915, 1.0
    %v1918 = vrcp.pop %v1916
    %v1919 = vmul.f32 1.0, %v1918
    %v1920 = vrcp.pop %v1917
    %v1921 = vmul.f32 1.0, %v1920
    %v1922 = vxor.u32 %v1904, 2147483648
    %v1923 = vxor.u32 %v1905, 2147483648
    %v1924 = vmul.f32 %v1922, 1.442695
    %v1925 = vpow.pop %v1924
    %v1926 = vmul.f32 %v1923, 1.442695
    %v1927 = vpow.pop %v1926
    %v1928 = vadd.f32 %v1925, 1.0
    %v1929 = vadd.f32 %v1927, 1.0
    %v1930 = vrcp.pop %v1928
    %v1931 = vmul.f32 1.0, %v1930
    %v1932 = vrcp.pop %v1929
    %v1933 = vmul.f32 1.0, %v1932
    %v1934 = vtanh.pop %v1906
    %v1935 = vtanh.pop %v1907
    %v1936 = vxor.u32 %v1908, 2147483648
    %v1937 = vxor.u32 %v1909, 2147483648
    %v1938 = vmul.f32 %v1936, 1.442695
    %v1939 = vpow.pop %v1938
    %v1940 = vmul.f32 %v1937, 1.442695
    %v1941 = vpow.pop %v1940
    %v1942 = vadd.f32 %v1939, 1.0
    %v1943 = vadd.f32 %v1941, 1.0
    %v1944 = vrcp.pop %v1942
    %v1945 = vmul.f32 1.0, %v1944
    %v1946 = vrcp.pop %v1943
    %v1947 = vmul.f32 1.0, %v1946
    %v1950 = vrot.slane %v1572, 6
    %v1951 = vrot.slane %v1573, 6
    %v1954 = vmul.f32 %v1931, %v1950
    %v1955 = vmul.f32 %v1933, %v1951
    %v1956 = vmul.f32 %v1919, %v1934
    %v1957 = vmul.f32 %v1921, %v1935
    %v1958 = vadd.f32 %v1954, %v1956
    %v1959 = vadd.f32 %v1955, %v1957
    %v1960 = vtanh.pop %v1958
    %v1961 = vtanh.pop %v1959
    %v1962 = vmul.f32 %v1945, %v1960
    %v1963 = vmul.f32 %v1947, %v1961
    %1964 = vst [vmem:[#allocation3] sm:$0x30] %v1962
    %1965 = vst [vmem:[#allocation3 + $0x8] sm:$0x30] %v1963
    %v1966 = vld [vmem:[#allocation2] sm:$0xc0]
    %v1967 = vld [vmem:[#allocation2 + $0x8] sm:$0xc0]
    %v1968 = vld [vmem:[#allocation2 + $0x10] sm:$0xc0]
    %v1969 = vld [vmem:[#allocation2 + $0x18] sm:$0xc0]
    %v1970 = vld [vmem:[#allocation2 + $0x20] sm:$0xc0]
    %v1971 = vld [vmem:[#allocation2 + $0x28] sm:$0xc0]
    %v1972 = vld [vmem:[#allocation2 + $0x30] sm:$0xc0]
    %v1973 = vld [vmem:[#allocation2 + $0x38] sm:$0xc0]
    %v1976 = vrot.slane %v1962, 4
    %v1977 = vrot.slane %v1963, 4
    %1980 = vmatprep.subr.mxu0 %v99
    %1981 = vmatpush1.msra.mxu0 %v98
    %1982 = vmatprep.subr.mxu0 %v107
    %1983 = vmatpush1.msra.mxu0 %v106
    %1984 = vmatprep.subr.mxu0 %v115
    %1985 = vmatpush1.msra.mxu0 %v114
    %1986 = vmatprep.subr.mxu0 %v123
    %1987 = vmatpush1.msra.mxu0 %v122
    %1988 = vmatprep.subr.mxu0 %v131
    %1989 = vmatpush1.msra.mxu0 %v130
    %1990 = vmatprep.subr.mxu0 %v139
    %1991 = vmatpush1.msra.mxu0 %v138
    %1992 = vmatprep.subr.mxu0 %v147
    %1993 = vmatpush1.msra.mxu0 %v146
    %1994 = vmatprep.subr.mxu0 %v155
    %1995 = vmatpush1.msra.mxu0 %v154
    %1996 = vmatprep.subr.mxu0 %v163
    %1997 = vmatpush1.msra.mxu0 %v162
    %1998 = vmatprep.subr.mxu0 %v171
    %1999 = vmatpush1.msra.mxu0 %v170
    %2000 = vmatprep.subr.mxu0 %v179
    %2001 = vmatpush1.msra.mxu0 %v178
    %2002 = vmatprep.subr.mxu0 %v187
    %2003 = vmatpush1.msra.mxu0 %v186
    %2004 = vmatprep.subr.mxu0 %v195
    %2005 = vmatpush1.msra.mxu0 %v194
    %2006 = vmatprep.subr.mxu0 %v203
    %2007 = vmatpush1.msra.mxu0 %v202
    %2008 = vmatprep.subr.mxu0 %v211
    %2009 = vmatpush1.msra.mxu0 %v210
    %2010 = vmatprep.subr.mxu0 %v219
    %2011 = vmatpush1.msra.mxu0 %v218
    %2012 = vmatprep.subr.mxu0 %v227
    %2013 = vmatpush1.msra.mxu0 %v226
    %2014 = vmatprep.subr.mxu0 %v235
    %2015 = vmatpush1.msra.mxu0 %v234
    %2016 = vmatprep.subr.mxu0 %v243
    %2017 = vmatpush1.msra.mxu0 %v242
    %2018 = vmatprep.subr.mxu0 %v251
    %2019 = vmatpush1.msra.mxu0 %v250
    %2020 = vmatprep.subr.mxu0 %v259
    %2021 = vmatpush1.msra.mxu0 %v258
    %2022 = vmatprep.subr.mxu0 %v267
    %2023 = vmatpush1.msra.mxu0 %v266
    %2024 = vmatprep.subr.mxu0 %v275
    %2025 = vmatpush1.msra.mxu0 %v274
    %2026 = vmatprep.subr.mxu0 %v283
    %2027 = vmatpush1.msra.mxu0 %v282
    %2028 = vmatprep.subr.mxu0 %v291
    %2029 = vmatpush1.msra.mxu0 %v290
    %2030 = vmatprep.subr.mxu0 %v299
    %2031 = vmatpush1.msra.mxu0 %v298
    %2032 = vmatprep.subr.mxu0 %v307
    %2033 = vmatpush1.msra.mxu0 %v306
    %2034 = vmatprep.subr.mxu0 %v315
    %2035 = vmatpush1.msra.mxu0 %v314
    %2036 = vmatprep.subr.mxu0 %v323
    %2037 = vmatpush1.msra.mxu0 %v322
    %2038 = vmatprep.subr.mxu0 %v331
    %2039 = vmatpush1.msra.mxu0 %v330
    %2040 = vmatprep.subr.mxu0 %v339
    %2041 = vmatpush1.msra.mxu0 %v338
    %2042 = vmatprep.subr.mxu0 %v347
    %2043 = vmatpush1.msra.mxu0 %v346
    %2044 = vmatprep.mubr.f32.mxu0 %v1977
    %2045 = vmatmul.mubr.f32.gmra.mrb[0].mxu0 %v1976
    %v2046 = vpop.f32.mrb[0].mxu0
    %v2047 = vadd.f32 0.0, %v2046
    %v2048 = vpop.f32.mrb[0].mxu0
    %v2049 = vadd.f32 0.0, %v2048
    %2050 = vdwg.mxu0
    %2051 = vmatprep.subr.mxu0 %v101
    %2052 = vmatpush1.msra.mxu0 %v100
    %2053 = vmatprep.subr.mxu0 %v109
    %2054 = vmatpush1.msra.mxu0 %v108
    %2055 = vmatprep.subr.mxu0 %v117
    %2056 = vmatpush1.msra.mxu0 %v116
    %2057 = vmatprep.subr.mxu0 %v125
    %2058 = vmatpush1.msra.mxu0 %v124
    %2059 = vmatprep.subr.mxu0 %v133
    %2060 = vmatpush1.msra.mxu0 %v132
    %2061 = vmatprep.subr.mxu0 %v141
    %2062 = vmatpush1.msra.mxu0 %v140
    %2063 = vmatprep.subr.mxu0 %v149
    %2064 = vmatpush1.msra.mxu0 %v148
    %2065 = vmatprep.subr.mxu0 %v157
    %2066 = vmatpush1.msra.mxu0 %v156
    %2067 = vmatprep.subr.mxu0 %v165
    %2068 = vmatpush1.msra.mxu0 %v164
    %2069 = vmatprep.subr.mxu0 %v173
    %2070 = vmatpush1.msra.mxu0 %v172
    %2071 = vmatprep.subr.mxu0 %v181
    %2072 = vmatpush1.msra.mxu0 %v180
    %2073 = vmatprep.subr.mxu0 %v189
    %2074 = vmatpush1.msra.mxu0 %v188
    %2075 = vmatprep.subr.mxu0 %v197
    %2076 = vmatpush1.msra.mxu0 %v196
    %2077 = vmatprep.subr.mxu0 %v205
    %2078 = vmatpush1.msra.mxu0 %v204
    %2079 = vmatprep.subr.mxu0 %v213
    %2080 = vmatpush1.msra.mxu0 %v212
    %2081 = vmatprep.subr.mxu0 %v221
    %2082 = vmatpush1.msra.mxu0 %v220
    %2083 = vmatprep.subr.mxu0 %v229
    %2084 = vmatpush1.msra.mxu0 %v228
    %2085 = vmatprep.subr.mxu0 %v237
    %2086 = vmatpush1.msra.mxu0 %v236
    %2087 = vmatprep.subr.mxu0 %v245
    %2088 = vmatpush1.msra.mxu0 %v244
    %2089 = vmatprep.subr.mxu0 %v253
    %2090 = vmatpush1.msra.mxu0 %v252
    %2091 = vmatprep.subr.mxu0 %v261
    %2092 = vmatpush1.msra.mxu0 %v260
    %2093 = vmatprep.subr.mxu0 %v269
    %2094 = vmatpush1.msra.mxu0 %v268
    %2095 = vmatprep.subr.mxu0 %v277
    %2096 = vmatpush1.msra.mxu0 %v276
    %2097 = vmatprep.subr.mxu0 %v285
    %2098 = vmatpush1.msra.mxu0 %v284
    %2099 = vmatprep.subr.mxu0 %v293
    %2100 = vmatpush1.msra.mxu0 %v292
    %2101 = vmatprep.subr.mxu0 %v301
    %2102 = vmatpush1.msra.mxu0 %v300
    %2103 = vmatprep.subr.mxu0 %v309
    %2104 = vmatpush1.msra.mxu0 %v308
    %2105 = vmatprep.subr.mxu0 %v317
    %2106 = vmatpush1.msra.mxu0 %v316
    %2107 = vmatprep.subr.mxu0 %v325
    %2108 = vmatpush1.msra.mxu0 %v324
    %2109 = vmatprep.subr.mxu0 %v333
    %2110 = vmatpush1.msra.mxu0 %v332
    %2111 = vmatprep.subr.mxu0 %v341
    %2112 = vmatpush1.msra.mxu0 %v340
    %2113 = vmatprep.subr.mxu0 %v349
    %2114 = vmatpush1.msra.mxu0 %v348
    %2115 = vmatprep.mubr.f32.mxu0 %v1977
    %2116 = vmatmul.mubr.f32.gmra.mrb[0].mxu0 %v1976
    %v2117 = vpop.f32.mrb[0].mxu0
    %v2118 = vadd.f32 0.0, %v2117
    %v2119 = vpop.f32.mrb[0].mxu0
    %v2120 = vadd.f32 0.0, %v2119
    %2121 = vdwg.mxu0
    %2122 = vmatprep.subr.mxu0 %v103
    %2123 = vmatpush1.msra.mxu0 %v102
    %2124 = vmatprep.subr.mxu0 %v111
    %2125 = vmatpush1.msra.mxu0 %v110
    %2126 = vmatprep.subr.mxu0 %v119
    %2127 = vmatpush1.msra.mxu0 %v118
    %2128 = vmatprep.subr.mxu0 %v127
    %2129 = vmatpush1.msra.mxu0 %v126
    %2130 = vmatprep.subr.mxu0 %v135
    %2131 = vmatpush1.msra.mxu0 %v134
    %2132 = vmatprep.subr.mxu0 %v143
    %2133 = vmatpush1.msra.mxu0 %v142
    %2134 = vmatprep.subr.mxu0 %v151
    %2135 = vmatpush1.msra.mxu0 %v150
    %2136 = vmatprep.subr.mxu0 %v159
    %2137 = vmatpush1.msra.mxu0 %v158
    %2138 = vmatprep.subr.mxu0 %v167
    %2139 = vmatpush1.msra.mxu0 %v166
    %2140 = vmatprep.subr.mxu0 %v175
    %2141 = vmatpush1.msra.mxu0 %v174
    %2142 = vmatprep.subr.mxu0 %v183
    %2143 = vmatpush1.msra.mxu0 %v182
    %2144 = vmatprep.subr.mxu0 %v191
    %2145 = vmatpush1.msra.mxu0 %v190
    %2146 = vmatprep.subr.mxu0 %v199
    %2147 = vmatpush1.msra.mxu0 %v198
    %2148 = vmatprep.subr.mxu0 %v207
    %2149 = vmatpush1.msra.mxu0 %v206
    %2150 = vmatprep.subr.mxu0 %v215
    %2151 = vmatpush1.msra.mxu0 %v214
    %2152 = vmatprep.subr.mxu0 %v223
    %2153 = vmatpush1.msra.mxu0 %v222
    %2154 = vmatprep.subr.mxu0 %v231
    %2155 = vmatpush1.msra.mxu0 %v230
    %2156 = vmatprep.subr.mxu0 %v239
    %2157 = vmatpush1.msra.mxu0 %v238
    %2158 = vmatprep.subr.mxu0 %v247
    %2159 = vmatpush1.msra.mxu0 %v246
    %2160 = vmatprep.subr.mxu0 %v255
    %2161 = vmatpush1.msra.mxu0 %v254
    %2162 = vmatprep.subr.mxu0 %v263
    %2163 = vmatpush1.msra.mxu0 %v262
    %2164 = vmatprep.subr.mxu0 %v271
    %2165 = vmatpush1.msra.mxu0 %v270
    %2166 = vmatprep.subr.mxu0 %v279
    %2167 = vmatpush1.msra.mxu0 %v278
    %2168 = vmatprep.subr.mxu0 %v287
    %2169 = vmatpush1.msra.mxu0 %v286
    %2170 = vmatprep.subr.mxu0 %v295
    %2171 = vmatpush1.msra.mxu0 %v294
    %2172 = vmatprep.subr.mxu0 %v303
    %2173 = vmatpush1.msra.mxu0 %v302
    %2174 = vmatprep.subr.mxu0 %v311
    %2175 = vmatpush1.msra.mxu0 %v310
    %2176 = vmatprep.subr.mxu0 %v319
    %2177 = vmatpush1.msra.mxu0 %v318
    %2178 = vmatprep.subr.mxu0 %v327
    %2179 = vmatpush1.msra.mxu0 %v326
    %2180 = vmatprep.subr.mxu0 %v335
    %2181 = vmatpush1.msra.mxu0 %v334
    %2182 = vmatprep.subr.mxu0 %v343
    %2183 = vmatpush1.msra.mxu0 %v342
    %2184 = vmatprep.subr.mxu0 %v351
    %2185 = vmatpush1.msra.mxu0 %v350
    %2186 = vmatprep.mubr.f32.mxu0 %v1977
    %2187 = vmatmul.mubr.f32.gmra.mrb[0].mxu0 %v1976
    %v2188 = vpop.f32.mrb[0].mxu0
    %v2189 = vadd.f32 0.0, %v2188
    %v2190 = vpop.f32.mrb[0].mxu0
    %v2191 = vadd.f32 0.0, %v2190
    %2192 = vdwg.mxu0
    %2193 = vmatprep.subr.mxu0 %v105
    %2194 = vmatpush1.msra.mxu0 %v104
    %2195 = vmatprep.subr.mxu0 %v113
    %2196 = vmatpush1.msra.mxu0 %v112
    %2197 = vmatprep.subr.mxu0 %v121
    %2198 = vmatpush1.msra.mxu0 %v120
    %2199 = vmatprep.subr.mxu0 %v129
    %2200 = vmatpush1.msra.mxu0 %v128
    %2201 = vmatprep.subr.mxu0 %v137
    %2202 = vmatpush1.msra.mxu0 %v136
    %2203 = vmatprep.subr.mxu0 %v145
    %2204 = vmatpush1.msra.mxu0 %v144
    %2205 = vmatprep.subr.mxu0 %v153
    %2206 = vmatpush1.msra.mxu0 %v152
    %2207 = vmatprep.subr.mxu0 %v161
    %2208 = vmatpush1.msra.mxu0 %v160
    %2209 = vmatprep.subr.mxu0 %v169
    %2210 = vmatpush1.msra.mxu0 %v168
    %2211 = vmatprep.subr.mxu0 %v177
    %2212 = vmatpush1.msra.mxu0 %v176
    %2213 = vmatprep.subr.mxu0 %v185
    %2214 = vmatpush1.msra.mxu0 %v184
    %2215 = vmatprep.subr.mxu0 %v193
    %2216 = vmatpush1.msra.mxu0 %v192
    %2217 = vmatprep.subr.mxu0 %v201
    %2218 = vmatpush1.msra.mxu0 %v200
    %2219 = vmatprep.subr.mxu0 %v209
    %2220 = vmatpush1.msra.mxu0 %v208
    %2221 = vmatprep.subr.mxu0 %v217
    %2222 = vmatpush1.msra.mxu0 %v216
    %2223 = vmatprep.subr.mxu0 %v225
    %2224 = vmatpush1.msra.mxu0 %v224
    %2225 = vmatprep.subr.mxu0 %v233
    %2226 = vmatpush1.msra.mxu0 %v232
    %2227 = vmatprep.subr.mxu0 %v241
    %2228 = vmatpush1.msra.mxu0 %v240
    %2229 = vmatprep.subr.mxu0 %v249
    %2230 = vmatpush1.msra.mxu0 %v248
    %2231 = vmatprep.subr.mxu0 %v257
    %2232 = vmatpush1.msra.mxu0 %v256
    %2233 = vmatprep.subr.mxu0 %v265
    %2234 = vmatpush1.msra.mxu0 %v264
    %2235 = vmatprep.subr.mxu0 %v273
    %2236 = vmatpush1.msra.mxu0 %v272
    %2237 = vmatprep.subr.mxu0 %v281
    %2238 = vmatpush1.msra.mxu0 %v280
    %2239 = vmatprep.subr.mxu0 %v289
    %2240 = vmatpush1.msra.mxu0 %v288
    %2241 = vmatprep.subr.mxu0 %v297
    %2242 = vmatpush1.msra.mxu0 %v296
    %2243 = vmatprep.subr.mxu0 %v305
    %2244 = vmatpush1.msra.mxu0 %v304
    %2245 = vmatprep.subr.mxu0 %v313
    %2246 = vmatpush1.msra.mxu0 %v312
    %2247 = vmatprep.subr.mxu0 %v321
    %2248 = vmatpush1.msra.mxu0 %v320
    %2249 = vmatprep.subr.mxu0 %v329
    %2250 = vmatpush1.msra.mxu0 %v328
    %2251 = vmatprep.subr.mxu0 %v337
    %2252 = vmatpush1.msra.mxu0 %v336
    %2253 = vmatprep.subr.mxu0 %v345
    %2254 = vmatpush1.msra.mxu0 %v344
    %2255 = vmatprep.subr.mxu0 %v353
    %2256 = vmatpush1.msra.mxu0 %v352
    %2257 = vmatprep.mubr.f32.mxu0 %v1977
    %2258 = vmatmul.mubr.f32.gmra.mrb[0].mxu0 %v1976
    %v2259 = vpop.f32.mrb[0].mxu0
    %v2260 = vadd.f32 0.0, %v2259
    %v2261 = vpop.f32.mrb[0].mxu0
    %v2262 = vadd.f32 0.0, %v2261
    %2263 = vdwg.mxu0
    %v2272 = vrot.slane %v2047, 2
    %v2273 = vrot.slane %v2049, 2
    %v2274 = vrot.slane %v2118, 2
    %v2275 = vrot.slane %v2120, 2
    %v2276 = vrot.slane %v2189, 2
    %v2277 = vrot.slane %v2191, 2
    %v2278 = vrot.slane %v2260, 2
    %v2279 = vrot.slane %v2262, 2
    %v2288 = vadd.f32 %v1966, %v2272
    %v2289 = vadd.f32 %v1967, %v2273
    %v2290 = vadd.f32 %v1968, %v2274
    %v2291 = vadd.f32 %v1969, %v2275
    %v2292 = vadd.f32 %v1970, %v2276
    %v2293 = vadd.f32 %v1971, %v2277
    %v2294 = vadd.f32 %v1972, %v2278
    %v2295 = vadd.f32 %v1973, %v2279
    %v2296 = vxor.u32 %v2288, 2147483648
    %v2297 = vxor.u32 %v2289, 2147483648
    %v2298 = vmul.f32 %v2296, 1.442695
    %v2299 = vpow.pop %v2298
    %v2300 = vmul.f32 %v2297, 1.442695
    %v2301 = vpow.pop %v2300
    %v2302 = vadd.f32 %v2299, 1.0
    %v2303 = vadd.f32 %v2301, 1.0
    %v2304 = vrcp.pop %v2302
    %v2305 = vmul.f32 1.0, %v2304
    %v2306 = vrcp.pop %v2303
    %v2307 = vmul.f32 1.0, %v2306
    %v2308 = vxor.u32 %v2290, 2147483648
    %v2309 = vxor.u32 %v2291, 2147483648
    %v2310 = vmul.f32 %v2308, 1.442695
    %v2311 = vpow.pop %v2310
    %v2312 = vmul.f32 %v2309, 1.442695
    %v2313 = vpow.pop %v2312
    %v2314 = vadd.f32 %v2311, 1.0
    %v2315 = vadd.f32 %v2313, 1.0
    %v2316 = vrcp.pop %v2314
    %v2317 = vmul.f32 1.0, %v2316
    %v2318 = vrcp.pop %v2315
    %v2319 = vmul.f32 1.0, %v2318
    %v2320 = vtanh.pop %v2292
    %v2321 = vtanh.pop %v2293
    %v2322 = vxor.u32 %v2294, 2147483648
    %v2323 = vxor.u32 %v2295, 2147483648
    %v2324 = vmul.f32 %v2322, 1.442695
    %v2325 = vpow.pop %v2324
    %v2326 = vmul.f32 %v2323, 1.442695
    %v2327 = vpow.pop %v2326
    %v2328 = vadd.f32 %v2325, 1.0
    %v2329 = vadd.f32 %v2327, 1.0
    %v2330 = vrcp.pop %v2328
    %v2331 = vmul.f32 1.0, %v2330
    %v2332 = vrcp.pop %v2329
    %v2333 = vmul.f32 1.0, %v2332
    %v2336 = vrot.slane %v1958, 6
    %v2337 = vrot.slane %v1959, 6
    %v2340 = vmul.f32 %v2317, %v2336
    %v2341 = vmul.f32 %v2319, %v2337
    %v2342 = vmul.f32 %v2305, %v2320
    %v2343 = vmul.f32 %v2307, %v2321
    %v2344 = vadd.f32 %v2340, %v2342
    %v2345 = vadd.f32 %v2341, %v2343
    %v2346 = vtanh.pop %v2344
    %v2347 = vtanh.pop %v2345
    %v2348 = vmul.f32 %v2331, %v2346
    %v2349 = vmul.f32 %v2333, %v2347
    %2350 = vst [vmem:[#allocation3] sm:$0xc0] %v2348
    %2351 = vst [vmem:[#allocation3 + $0x8] sm:$0xc0] %v2349
    %v2352 = vld [vmem:[#allocation2 + $0x40] sm:$0x3]
    %v2353 = vld [vmem:[#allocation2 + $0x48] sm:$0x3]
    %v2354 = vld [vmem:[#allocation2 + $0x50] sm:$0x3]
    %v2355 = vld [vmem:[#allocation2 + $0x58] sm:$0x3]
    %v2356 = vld [vmem:[#allocation2 + $0x60] sm:$0x3]
    %v2357 = vld [vmem:[#allocation2 + $0x68] sm:$0x3]
    %v2358 = vld [vmem:[#allocation2 + $0x70] sm:$0x3]
    %v2359 = vld [vmem:[#allocation2 + $0x78] sm:$0x3]
    %v2362 = vrot.slane %v2348, 6
    %v2363 = vrot.slane %v2349, 6
    %2366 = vmatprep.subr.mxu0 %v99
    %2367 = vmatpush1.msra.mxu0 %v98
    %2368 = vmatprep.subr.mxu0 %v107
    %2369 = vmatpush1.msra.mxu0 %v106
    %2370 = vmatprep.subr.mxu0 %v115
    %2371 = vmatpush1.msra.mxu0 %v114
    %2372 = vmatprep.subr.mxu0 %v123
    %2373 = vmatpush1.msra.mxu0 %v122
    %2374 = vmatprep.subr.mxu0 %v131
    %2375 = vmatpush1.msra.mxu0 %v130
    %2376 = vmatprep.subr.mxu0 %v139
    %2377 = vmatpush1.msra.mxu0 %v138
    %2378 = vmatprep.subr.mxu0 %v147
    %2379 = vmatpush1.msra.mxu0 %v146
    %2380 = vmatprep.subr.mxu0 %v155
    %2381 = vmatpush1.msra.mxu0 %v154
    %2382 = vmatprep.subr.mxu0 %v163
    %2383 = vmatpush1.msra.mxu0 %v162
    %2384 = vmatprep.subr.mxu0 %v171
    %2385 = vmatpush1.msra.mxu0 %v170
    %2386 = vmatprep.subr.mxu0 %v179
    %2387 = vmatpush1.msra.mxu0 %v178
    %2388 = vmatprep.subr.mxu0 %v187
    %2389 = vmatpush1.msra.mxu0 %v186
    %2390 = vmatprep.subr.mxu0 %v195
    %2391 = vmatpush1.msra.mxu0 %v194
    %2392 = vmatprep.subr.mxu0 %v203
    %2393 = vmatpush1.msra.mxu0 %v202
    %2394 = vmatprep.subr.mxu0 %v211
    %2395 = vmatpush1.msra.mxu0 %v210
    %2396 = vmatprep.subr.mxu0 %v219
    %2397 = vmatpush1.msra.mxu0 %v218
    %2398 = vmatprep.subr.mxu0 %v227
    %2399 = vmatpush1.msra.mxu0 %v226
    %2400 = vmatprep.subr.mxu0 %v235
    %2401 = vmatpush1.msra.mxu0 %v234
    %2402 = vmatprep.subr.mxu0 %v243
    %2403 = vmatpush1.msra.mxu0 %v242
    %2404 = vmatprep.subr.mxu0 %v251
    %2405 = vmatpush1.msra.mxu0 %v250
    %2406 = vmatprep.subr.mxu0 %v259
    %2407 = vmatpush1.msra.mxu0 %v258
    %2408 = vmatprep.subr.mxu0 %v267
    %2409 = vmatpush1.msra.mxu0 %v266
    %2410 = vmatprep.subr.mxu0 %v275
    %2411 = vmatpush1.msra.mxu0 %v274
    %2412 = vmatprep.subr.mxu0 %v283
    %2413 = vmatpush1.msra.mxu0 %v282
    %2414 = vmatprep.subr.mxu0 %v291
    %2415 = vmatpush1.msra.mxu0 %v290
    %2416 = vmatprep.subr.mxu0 %v299
    %2417 = vmatpush1.msra.mxu0 %v298
    %2418 = vmatprep.subr.mxu0 %v307
    %2419 = vmatpush1.msra.mxu0 %v306
    %2420 = vmatprep.subr.mxu0 %v315
    %2421 = vmatpush1.msra.mxu0 %v314
    %2422 = vmatprep.subr.mxu0 %v323
    %2423 = vmatpush1.msra.mxu0 %v322
    %2424 = vmatprep.subr.mxu0 %v331
    %2425 = vmatpush1.msra.mxu0 %v330
    %2426 = vmatprep.subr.mxu0 %v339
    %2427 = vmatpush1.msra.mxu0 %v338
    %2428 = vmatprep.subr.mxu0 %v347
    %2429 = vmatpush1.msra.mxu0 %v346
    %2430 = vmatprep.mubr.f32.mxu0 %v2363
    %2431 = vmatmul.mubr.f32.gmra.mrb[0].mxu0 %v2362
    %v2432 = vpop.f32.mrb[0].mxu0
    %v2433 = vadd.f32 0.0, %v2432
    %v2434 = vpop.f32.mrb[0].mxu0
    %v2435 = vadd.f32 0.0, %v2434
    %2436 = vdwg.mxu0
    %2437 = vmatprep.subr.mxu0 %v101
    %2438 = vmatpush1.msra.mxu0 %v100
    %2439 = vmatprep.subr.mxu0 %v109
    %2440 = vmatpush1.msra.mxu0 %v108
    %2441 = vmatprep.subr.mxu0 %v117
    %2442 = vmatpush1.msra.mxu0 %v116
    %2443 = vmatprep.subr.mxu0 %v125
    %2444 = vmatpush1.msra.mxu0 %v124
    %2445 = vmatprep.subr.mxu0 %v133
    %2446 = vmatpush1.msra.mxu0 %v132
    %2447 = vmatprep.subr.mxu0 %v141
    %2448 = vmatpush1.msra.mxu0 %v140
    %2449 = vmatprep.subr.mxu0 %v149
    %2450 = vmatpush1.msra.mxu0 %v148
    %2451 = vmatprep.subr.mxu0 %v157
    %2452 = vmatpush1.msra.mxu0 %v156
    %2453 = vmatprep.subr.mxu0 %v165
    %2454 = vmatpush1.msra.mxu0 %v164
    %2455 = vmatprep.subr.mxu0 %v173
    %2456 = vmatpush1.msra.mxu0 %v172
    %2457 = vmatprep.subr.mxu0 %v181
    %2458 = vmatpush1.msra.mxu0 %v180
    %2459 = vmatprep.subr.mxu0 %v189
    %2460 = vmatpush1.msra.mxu0 %v188
    %2461 = vmatprep.subr.mxu0 %v197
    %2462 = vmatpush1.msra.mxu0 %v196
    %2463 = vmatprep.subr.mxu0 %v205
    %2464 = vmatpush1.msra.mxu0 %v204
    %2465 = vmatprep.subr.mxu0 %v213
    %2466 = vmatpush1.msra.mxu0 %v212
    %2467 = vmatprep.subr.mxu0 %v221
    %2468 = vmatpush1.msra.mxu0 %v220
    %2469 = vmatprep.subr.mxu0 %v229
    %2470 = vmatpush1.msra.mxu0 %v228
    %2471 = vmatprep.subr.mxu0 %v237
    %2472 = vmatpush1.msra.mxu0 %v236
    %2473 = vmatprep.subr.mxu0 %v245
    %2474 = vmatpush1.msra.mxu0 %v244
    %2475 = vmatprep.subr.mxu0 %v253
    %2476 = vmatpush1.msra.mxu0 %v252
    %2477 = vmatprep.subr.mxu0 %v261
    %2478 = vmatpush1.msra.mxu0 %v260
    %2479 = vmatprep.subr.mxu0 %v269
    %2480 = vmatpush1.msra.mxu0 %v268
    %2481 = vmatprep.subr.mxu0 %v277
    %2482 = vmatpush1.msra.mxu0 %v276
    %2483 = vmatprep.subr.mxu0 %v285
    %2484 = vmatpush1.msra.mxu0 %v284
    %2485 = vmatprep.subr.mxu0 %v293
    %2486 = vmatpush1.msra.mxu0 %v292
    %2487 = vmatprep.subr.mxu0 %v301
    %2488 = vmatpush1.msra.mxu0 %v300
    %2489 = vmatprep.subr.mxu0 %v309
    %2490 = vmatpush1.msra.mxu0 %v308
    %2491 = vmatprep.subr.mxu0 %v317
    %2492 = vmatpush1.msra.mxu0 %v316
    %2493 = vmatprep.subr.mxu0 %v325
    %2494 = vmatpush1.msra.mxu0 %v324
    %2495 = vmatprep.subr.mxu0 %v333
    %2496 = vmatpush1.msra.mxu0 %v332
    %2497 = vmatprep.subr.mxu0 %v341
    %2498 = vmatpush1.msra.mxu0 %v340
    %2499 = vmatprep.subr.mxu0 %v349
    %2500 = vmatpush1.msra.mxu0 %v348
    %2501 = vmatprep.mubr.f32.mxu0 %v2363
    %2502 = vmatmul.mubr.f32.gmra.mrb[0].mxu0 %v2362
    %v2503 = vpop.f32.mrb[0].mxu0
    %v2504 = vadd.f32 0.0, %v2503
    %v2505 = vpop.f32.mrb[0].mxu0
    %v2506 = vadd.f32 0.0, %v2505
    %2507 = vdwg.mxu0
    %2508 = vmatprep.subr.mxu0 %v103
    %2509 = vmatpush1.msra.mxu0 %v102
    %2510 = vmatprep.subr.mxu0 %v111
    %2511 = vmatpush1.msra.mxu0 %v110
    %2512 = vmatprep.subr.mxu0 %v119
    %2513 = vmatpush1.msra.mxu0 %v118
    %2514 = vmatprep.subr.mxu0 %v127
    %2515 = vmatpush1.msra.mxu0 %v126
    %2516 = vmatprep.subr.mxu0 %v135
    %2517 = vmatpush1.msra.mxu0 %v134
    %2518 = vmatprep.subr.mxu0 %v143
    %2519 = vmatpush1.msra.mxu0 %v142
    %2520 = vmatprep.subr.mxu0 %v151
    %2521 = vmatpush1.msra.mxu0 %v150
    %2522 = vmatprep.subr.mxu0 %v159
    %2523 = vmatpush1.msra.mxu0 %v158
    %2524 = vmatprep.subr.mxu0 %v167
    %2525 = vmatpush1.msra.mxu0 %v166
    %2526 = vmatprep.subr.mxu0 %v175
    %2527 = vmatpush1.msra.mxu0 %v174
    %2528 = vmatprep.subr.mxu0 %v183
    %2529 = vmatpush1.msra.mxu0 %v182
    %2530 = vmatprep.subr.mxu0 %v191
    %2531 = vmatpush1.msra.mxu0 %v190
    %2532 = vmatprep.subr.mxu0 %v199
    %2533 = vmatpush1.msra.mxu0 %v198
    %2534 = vmatprep.subr.mxu0 %v207
    %2535 = vmatpush1.msra.mxu0 %v206
    %2536 = vmatprep.subr.mxu0 %v215
    %2537 = vmatpush1.msra.mxu0 %v214
    %2538 = vmatprep.subr.mxu0 %v223
    %2539 = vmatpush1.msra.mxu0 %v222
    %2540 = vmatprep.subr.mxu0 %v231
    %2541 = vmatpush1.msra.mxu0 %v230
    %2542 = vmatprep.subr.mxu0 %v239
    %2543 = vmatpush1.msra.mxu0 %v238
    %2544 = vmatprep.subr.mxu0 %v247
    %2545 = vmatpush1.msra.mxu0 %v246
    %2546 = vmatprep.subr.mxu0 %v255
    %2547 = vmatpush1.msra.mxu0 %v254
    %2548 = vmatprep.subr.mxu0 %v263
    %2549 = vmatpush1.msra.mxu0 %v262
    %2550 = vmatprep.subr.mxu0 %v271
    %2551 = vmatpush1.msra.mxu0 %v270
    %2552 = vmatprep.subr.mxu0 %v279
    %2553 = vmatpush1.msra.mxu0 %v278
    %2554 = vmatprep.subr.mxu0 %v287
    %2555 = vmatpush1.msra.mxu0 %v286
    %2556 = vmatprep.subr.mxu0 %v295
    %2557 = vmatpush1.msra.mxu0 %v294
    %2558 = vmatprep.subr.mxu0 %v303
    %2559 = vmatpush1.msra.mxu0 %v302
    %2560 = vmatprep.subr.mxu0 %v311
    %2561 = vmatpush1.msra.mxu0 %v310
    %2562 = vmatprep.subr.mxu0 %v319
    %2563 = vmatpush1.msra.mxu0 %v318
    %2564 = vmatprep.subr.mxu0 %v327
    %2565 = vmatpush1.msra.mxu0 %v326
    %2566 = vmatprep.subr.mxu0 %v335
    %2567 = vmatpush1.msra.mxu0 %v334
    %2568 = vmatprep.subr.mxu0 %v343
    %2569 = vmatpush1.msra.mxu0 %v342
    %2570 = vmatprep.subr.mxu0 %v351
    %2571 = vmatpush1.msra.mxu0 %v350
    %2572 = vmatprep.mubr.f32.mxu0 %v2363
    %2573 = vmatmul.mubr.f32.gmra.mrb[0].mxu0 %v2362
    %v2574 = vpop.f32.mrb[0].mxu0
    %v2575 = vadd.f32 0.0, %v2574
    %v2576 = vpop.f32.mrb[0].mxu0
    %v2577 = vadd.f32 0.0, %v2576
    %2578 = vdwg.mxu0
    %2579 = vmatprep.subr.mxu0 %v105
    %2580 = vmatpush1.msra.mxu0 %v104
    %2581 = vmatprep.subr.mxu0 %v113
    %2582 = vmatpush1.msra.mxu0 %v112
    %2583 = vmatprep.subr.mxu0 %v121
    %2584 = vmatpush1.msra.mxu0 %v120
    %2585 = vmatprep.subr.mxu0 %v129
    %2586 = vmatpush1.msra.mxu0 %v128
    %2587 = vmatprep.subr.mxu0 %v137
    %2588 = vmatpush1.msra.mxu0 %v136
    %2589 = vmatprep.subr.mxu0 %v145
    %2590 = vmatpush1.msra.mxu0 %v144
    %2591 = vmatprep.subr.mxu0 %v153
    %2592 = vmatpush1.msra.mxu0 %v152
    %2593 = vmatprep.subr.mxu0 %v161
    %2594 = vmatpush1.msra.mxu0 %v160
    %2595 = vmatprep.subr.mxu0 %v169
    %2596 = vmatpush1.msra.mxu0 %v168
    %2597 = vmatprep.subr.mxu0 %v177
    %2598 = vmatpush1.msra.mxu0 %v176
    %2599 = vmatprep.subr.mxu0 %v185
    %2600 = vmatpush1.msra.mxu0 %v184
    %2601 = vmatprep.subr.mxu0 %v193
    %2602 = vmatpush1.msra.mxu0 %v192
    %2603 = vmatprep.subr.mxu0 %v201
    %2604 = vmatpush1.msra.mxu0 %v200
    %2605 = vmatprep.subr.mxu0 %v209
    %2606 = vmatpush1.msra.mxu0 %v208
    %2607 = vmatprep.subr.mxu0 %v217
    %2608 = vmatpush1.msra.mxu0 %v216
    %2609 = vmatprep.subr.mxu0 %v225
    %2610 = vmatpush1.msra.mxu0 %v224
    %2611 = vmatprep.subr.mxu0 %v233
    %2612 = vmatpush1.msra.mxu0 %v232
    %2613 = vmatprep.subr.mxu0 %v241
    %2614 = vmatpush1.msra.mxu0 %v240
    %2615 = vmatprep.subr.mxu0 %v249
    %2616 = vmatpush1.msra.mxu0 %v248
    %2617 = vmatprep.subr.mxu0 %v257
    %2618 = vmatpush1.msra.mxu0 %v256
    %2619 = vmatprep.subr.mxu0 %v265
    %2620 = vmatpush1.msra.mxu0 %v264
    %2621 = vmatprep.subr.mxu0 %v273
    %2622 = vmatpush1.msra.mxu0 %v272
    %2623 = vmatprep.subr.mxu0 %v281
    %2624 = vmatpush1.msra.mxu0 %v280
    %2625 = vmatprep.subr.mxu0 %v289
    %2626 = vmatpush1.msra.mxu0 %v288
    %2627 = vmatprep.subr.mxu0 %v297
    %2628 = vmatpush1.msra.mxu0 %v296
    %2629 = vmatprep.subr.mxu0 %v305
    %2630 = vmatpush1.msra.mxu0 %v304
    %2631 = vmatprep.subr.mxu0 %v313
    %2632 = vmatpush1.msra.mxu0 %v312
    %2633 = vmatprep.subr.mxu0 %v321
    %2634 = vmatpush1.msra.mxu0 %v320
    %2635 = vmatprep.subr.mxu0 %v329
    %2636 = vmatpush1.msra.mxu0 %v328
    %2637 = vmatprep.subr.mxu0 %v337
    %2638 = vmatpush1.msra.mxu0 %v336
    %2639 = vmatprep.subr.mxu0 %v345
    %2640 = vmatpush1.msra.mxu0 %v344
    %2641 = vmatprep.subr.mxu0 %v353
    %2642 = vmatpush1.msra.mxu0 %v352
    %2643 = vmatprep.mubr.f32.mxu0 %v2363
    %2644 = vmatmul.mubr.f32.gmra.mrb[0].mxu0 %v2362
    %v2645 = vpop.f32.mrb[0].mxu0
    %v2646 = vadd.f32 0.0, %v2645
    %v2647 = vpop.f32.mrb[0].mxu0
    %v2648 = vadd.f32 0.0, %v2647
    %2649 = vdwg.mxu0
    %v2650 = vadd.f32 %v2352, %v2433
    %v2651 = vadd.f32 %v2353, %v2435
    %v2652 = vadd.f32 %v2354, %v2504
    %v2653 = vadd.f32 %v2355, %v2506
    %v2654 = vadd.f32 %v2356, %v2575
    %v2655 = vadd.f32 %v2357, %v2577
    %v2656 = vadd.f32 %v2358, %v2646
    %v2657 = vadd.f32 %v2359, %v2648
    %v2658 = vxor.u32 %v2650, 2147483648
    %v2659 = vxor.u32 %v2651, 2147483648
    %v2660 = vmul.f32 %v2658, 1.442695
    %v2661 = vpow.pop %v2660
    %v2662 = vmul.f32 %v2659, 1.442695
    %v2663 = vpow.pop %v2662
    %v2664 = vadd.f32 %v2661, 1.0
    %v2665 = vadd.f32 %v2663, 1.0
    %v2666 = vrcp.pop %v2664
    %v2667 = vmul.f32 1.0, %v2666
    %v2668 = vrcp.pop %v2665
    %v2669 = vmul.f32 1.0, %v2668
    %v2670 = vxor.u32 %v2652, 2147483648
    %v2671 = vxor.u32 %v2653, 2147483648
    %v2672 = vmul.f32 %v2670, 1.442695
    %v2673 = vpow.pop %v2672
    %v2674 = vmul.f32 %v2671, 1.442695
    %v2675 = vpow.pop %v2674
    %v2676 = vadd.f32 %v2673, 1.0
    %v2677 = vadd.f32 %v2675, 1.0
    %v2678 = vrcp.pop %v2676
    %v2679 = vmul.f32 1.0, %v2678
    %v2680 = vrcp.pop %v2677
    %v2681 = vmul.f32 1.0, %v2680
    %v2682 = vtanh.pop %v2654
    %v2683 = vtanh.pop %v2655
    %v2684 = vxor.u32 %v2656, 2147483648
    %v2685 = vxor.u32 %v2657, 2147483648
    %v2686 = vmul.f32 %v2684, 1.442695
    %v2687 = vpow.pop %v2686
    %v2688 = vmul.f32 %v2685, 1.442695
    %v2689 = vpow.pop %v2688
    %v2690 = vadd.f32 %v2687, 1.0
    %v2691 = vadd.f32 %v2689, 1.0
    %v2692 = vrcp.pop %v2690
    %v2693 = vmul.f32 1.0, %v2692
    %v2694 = vrcp.pop %v2691
    %v2695 = vmul.f32 1.0, %v2694
    %v2698 = vrot.slane %v2344, 6
    %v2699 = vrot.slane %v2345, 6
    %v2702 = vmul.f32 %v2679, %v2698
    %v2703 = vmul.f32 %v2681, %v2699
    %v2704 = vmul.f32 %v2667, %v2682
    %v2705 = vmul.f32 %v2669, %v2683
    %v2706 = vadd.f32 %v2702, %v2704
    %v2707 = vadd.f32 %v2703, %v2705
    %v2708 = vtanh.pop %v2706
    %v2709 = vtanh.pop %v2707
    %v2710 = vmul.f32 %v2693, %v2708
    %v2711 = vmul.f32 %v2695, %v2709
    %2712 = vst [vmem:[#allocation3 + $0x10] sm:$0x3] %v2710
    %2713 = vst [vmem:[#allocation3 + $0x18] sm:$0x3] %v2711
    %v2714 = vld [vmem:[#allocation2 + $0x40] sm:$0xc]
    %v2715 = vld [vmem:[#allocation2 + $0x48] sm:$0xc]
    %v2716 = vld [vmem:[#allocation2 + $0x50] sm:$0xc]
    %v2717 = vld [vmem:[#allocation2 + $0x58] sm:$0xc]
    %v2718 = vld [vmem:[#allocation2 + $0x60] sm:$0xc]
    %v2719 = vld [vmem:[#allocation2 + $0x68] sm:$0xc]
    %v2720 = vld [vmem:[#allocation2 + $0x70] sm:$0xc]
    %v2721 = vld [vmem:[#allocation2 + $0x78] sm:$0xc]
    %2722 = vmatprep.subr.mxu0 %v99
    %2723 = vmatpush1.msra.mxu0 %v98
    %2724 = vmatprep.subr.mxu0 %v107
    %2725 = vmatpush1.msra.mxu0 %v106
    %2726 = vmatprep.subr.mxu0 %v115
    %2727 = vmatpush1.msra.mxu0 %v114
    %2728 = vmatprep.subr.mxu0 %v123
    %2729 = vmatpush1.msra.mxu0 %v122
    %2730 = vmatprep.subr.mxu0 %v131
    %2731 = vmatpush1.msra.mxu0 %v130
    %2732 = vmatprep.subr.mxu0 %v139
    %2733 = vmatpush1.msra.mxu0 %v138
    %2734 = vmatprep.subr.mxu0 %v147
    %2735 = vmatpush1.msra.mxu0 %v146
    %2736 = vmatprep.subr.mxu0 %v155
    %2737 = vmatpush1.msra.mxu0 %v154
    %2738 = vmatprep.subr.mxu0 %v163
    %2739 = vmatpush1.msra.mxu0 %v162
    %2740 = vmatprep.subr.mxu0 %v171
    %2741 = vmatpush1.msra.mxu0 %v170
    %2742 = vmatprep.subr.mxu0 %v179
    %2743 = vmatpush1.msra.mxu0 %v178
    %2744 = vmatprep.subr.mxu0 %v187
    %2745 = vmatpush1.msra.mxu0 %v186
    %2746 = vmatprep.subr.mxu0 %v195
    %2747 = vmatpush1.msra.mxu0 %v194
    %2748 = vmatprep.subr.mxu0 %v203
    %2749 = vmatpush1.msra.mxu0 %v202
    %2750 = vmatprep.subr.mxu0 %v211
    %2751 = vmatpush1.msra.mxu0 %v210
    %2752 = vmatprep.subr.mxu0 %v219
    %2753 = vmatpush1.msra.mxu0 %v218
    %2754 = vmatprep.subr.mxu0 %v227
    %2755 = vmatpush1.msra.mxu0 %v226
    %2756 = vmatprep.subr.mxu0 %v235
    %2757 = vmatpush1.msra.mxu0 %v234
    %2758 = vmatprep.subr.mxu0 %v243
    %2759 = vmatpush1.msra.mxu0 %v242
    %2760 = vmatprep.subr.mxu0 %v251
    %2761 = vmatpush1.msra.mxu0 %v250
    %2762 = vmatprep.subr.mxu0 %v259
    %2763 = vmatpush1.msra.mxu0 %v258
    %2764 = vmatprep.subr.mxu0 %v267
    %2765 = vmatpush1.msra.mxu0 %v266
    %2766 = vmatprep.subr.mxu0 %v275
    %2767 = vmatpush1.msra.mxu0 %v274
    %2768 = vmatprep.subr.mxu0 %v283
    %2769 = vmatpush1.msra.mxu0 %v282
    %2770 = vmatprep.subr.mxu0 %v291
    %2771 = vmatpush1.msra.mxu0 %v290
    %2772 = vmatprep.subr.mxu0 %v299
    %2773 = vmatpush1.msra.mxu0 %v298
    %2774 = vmatprep.subr.mxu0 %v307
    %2775 = vmatpush1.msra.mxu0 %v306
    %2776 = vmatprep.subr.mxu0 %v315
    %2777 = vmatpush1.msra.mxu0 %v314
    %2778 = vmatprep.subr.mxu0 %v323
    %2779 = vmatpush1.msra.mxu0 %v322
    %2780 = vmatprep.subr.mxu0 %v331
    %2781 = vmatpush1.msra.mxu0 %v330
    %2782 = vmatprep.subr.mxu0 %v339
    %2783 = vmatpush1.msra.mxu0 %v338
    %2784 = vmatprep.subr.mxu0 %v347
    %2785 = vmatpush1.msra.mxu0 %v346
    %2786 = vmatprep.mubr.f32.mxu0 %v2711
    %2787 = vmatmul.mubr.f32.gmra.mrb[0].mxu0 %v2710
    %v2788 = vpop.f32.mrb[0].mxu0
    %v2789 = vadd.f32 0.0, %v2788
    %v2790 = vpop.f32.mrb[0].mxu0
    %v2791 = vadd.f32 0.0, %v2790
    %2792 = vdwg.mxu0
    %2793 = vmatprep.subr.mxu0 %v101
    %2794 = vmatpush1.msra.mxu0 %v100
    %2795 = vmatprep.subr.mxu0 %v109
    %2796 = vmatpush1.msra.mxu0 %v108
    %2797 = vmatprep.subr.mxu0 %v117
    %2798 = vmatpush1.msra.mxu0 %v116
    %2799 = vmatprep.subr.mxu0 %v125
    %2800 = vmatpush1.msra.mxu0 %v124
    %2801 = vmatprep.subr.mxu0 %v133
    %2802 = vmatpush1.msra.mxu0 %v132
    %2803 = vmatprep.subr.mxu0 %v141
    %2804 = vmatpush1.msra.mxu0 %v140
    %2805 = vmatprep.subr.mxu0 %v149
    %2806 = vmatpush1.msra.mxu0 %v148
    %2807 = vmatprep.subr.mxu0 %v157
    %2808 = vmatpush1.msra.mxu0 %v156
    %2809 = vmatprep.subr.mxu0 %v165
    %2810 = vmatpush1.msra.mxu0 %v164
    %2811 = vmatprep.subr.mxu0 %v173
    %2812 = vmatpush1.msra.mxu0 %v172
    %2813 = vmatprep.subr.mxu0 %v181
    %2814 = vmatpush1.msra.mxu0 %v180
    %2815 = vmatprep.subr.mxu0 %v189
    %2816 = vmatpush1.msra.mxu0 %v188
    %2817 = vmatprep.subr.mxu0 %v197
    %2818 = vmatpush1.msra.mxu0 %v196
    %2819 = vmatprep.subr.mxu0 %v205
    %2820 = vmatpush1.msra.mxu0 %v204
    %2821 = vmatprep.subr.mxu0 %v213
    %2822 = vmatpush1.msra.mxu0 %v212
    %2823 = vmatprep.subr.mxu0 %v221
    %2824 = vmatpush1.msra.mxu0 %v220
    %2825 = vmatprep.subr.mxu0 %v229
    %2826 = vmatpush1.msra.mxu0 %v228
    %2827 = vmatprep.subr.mxu0 %v237
    %2828 = vmatpush1.msra.mxu0 %v236
    %2829 = vmatprep.subr.mxu0 %v245
    %2830 = vmatpush1.msra.mxu0 %v244
    %2831 = vmatprep.subr.mxu0 %v253
    %2832 = vmatpush1.msra.mxu0 %v252
    %2833 = vmatprep.subr.mxu0 %v261
    %2834 = vmatpush1.msra.mxu0 %v260
    %2835 = vmatprep.subr.mxu0 %v269
    %2836 = vmatpush1.msra.mxu0 %v268
    %2837 = vmatprep.subr.mxu0 %v277
    %2838 = vmatpush1.msra.mxu0 %v276
    %2839 = vmatprep.subr.mxu0 %v285
    %2840 = vmatpush1.msra.mxu0 %v284
    %2841 = vmatprep.subr.mxu0 %v293
    %2842 = vmatpush1.msra.mxu0 %v292
    %2843 = vmatprep.subr.mxu0 %v301
    %2844 = vmatpush1.msra.mxu0 %v300
    %2845 = vmatprep.subr.mxu0 %v309
    %2846 = vmatpush1.msra.mxu0 %v308
    %2847 = vmatprep.subr.mxu0 %v317
    %2848 = vmatpush1.msra.mxu0 %v316
    %2849 = vmatprep.subr.mxu0 %v325
    %2850 = vmatpush1.msra.mxu0 %v324
    %2851 = vmatprep.subr.mxu0 %v333
    %2852 = vmatpush1.msra.mxu0 %v332
    %2853 = vmatprep.subr.mxu0 %v341
    %2854 = vmatpush1.msra.mxu0 %v340
    %2855 = vmatprep.subr.mxu0 %v349
    %2856 = vmatpush1.msra.mxu0 %v348
    %2857 = vmatprep.mubr.f32.mxu0 %v2711
    %2858 = vmatmul.mubr.f32.gmra.mrb[0].mxu0 %v2710
    %v2859 = vpop.f32.mrb[0].mxu0
    %v2860 = vadd.f32 0.0, %v2859
    %v2861 = vpop.f32.mrb[0].mxu0
    %v2862 = vadd.f32 0.0, %v2861
    %2863 = vdwg.mxu0
    %2864 = vmatprep.subr.mxu0 %v103
    %2865 = vmatpush1.msra.mxu0 %v102
    %2866 = vmatprep.subr.mxu0 %v111
    %2867 = vmatpush1.msra.mxu0 %v110
    %2868 = vmatprep.subr.mxu0 %v119
    %2869 = vmatpush1.msra.mxu0 %v118
    %2870 = vmatprep.subr.mxu0 %v127
    %2871 = vmatpush1.msra.mxu0 %v126
    %2872 = vmatprep.subr.mxu0 %v135
    %2873 = vmatpush1.msra.mxu0 %v134
    %2874 = vmatprep.subr.mxu0 %v143
    %2875 = vmatpush1.msra.mxu0 %v142
    %2876 = vmatprep.subr.mxu0 %v151
    %2877 = vmatpush1.msra.mxu0 %v150
    %2878 = vmatprep.subr.mxu0 %v159
    %2879 = vmatpush1.msra.mxu0 %v158
    %2880 = vmatprep.subr.mxu0 %v167
    %2881 = vmatpush1.msra.mxu0 %v166
    %2882 = vmatprep.subr.mxu0 %v175
    %2883 = vmatpush1.msra.mxu0 %v174
    %2884 = vmatprep.subr.mxu0 %v183
    %2885 = vmatpush1.msra.mxu0 %v182
    %2886 = vmatprep.subr.mxu0 %v191
    %2887 = vmatpush1.msra.mxu0 %v190
    %2888 = vmatprep.subr.mxu0 %v199
    %2889 = vmatpush1.msra.mxu0 %v198
    %2890 = vmatprep.subr.mxu0 %v207
    %2891 = vmatpush1.msra.mxu0 %v206
    %2892 = vmatprep.subr.mxu0 %v215
    %2893 = vmatpush1.msra.mxu0 %v214
    %2894 = vmatprep.subr.mxu0 %v223
    %2895 = vmatpush1.msra.mxu0 %v222
    %2896 = vmatprep.subr.mxu0 %v231
    %2897 = vmatpush1.msra.mxu0 %v230
    %2898 = vmatprep.subr.mxu0 %v239
    %2899 = vmatpush1.msra.mxu0 %v238
    %2900 = vmatprep.subr.mxu0 %v247
    %2901 = vmatpush1.msra.mxu0 %v246
    %2902 = vmatprep.subr.mxu0 %v255
    %2903 = vmatpush1.msra.mxu0 %v254
    %2904 = vmatprep.subr.mxu0 %v263
    %2905 = vmatpush1.msra.mxu0 %v262
    %2906 = vmatprep.subr.mxu0 %v271
    %2907 = vmatpush1.msra.mxu0 %v270
    %2908 = vmatprep.subr.mxu0 %v279
    %2909 = vmatpush1.msra.mxu0 %v278
    %2910 = vmatprep.subr.mxu0 %v287
    %2911 = vmatpush1.msra.mxu0 %v286
    %2912 = vmatprep.subr.mxu0 %v295
    %2913 = vmatpush1.msra.mxu0 %v294
    %2914 = vmatprep.subr.mxu0 %v303
    %2915 = vmatpush1.msra.mxu0 %v302
    %2916 = vmatprep.subr.mxu0 %v311
    %2917 = vmatpush1.msra.mxu0 %v310
    %2918 = vmatprep.subr.mxu0 %v319
    %2919 = vmatpush1.msra.mxu0 %v318
    %2920 = vmatprep.subr.mxu0 %v327
    %2921 = vmatpush1.msra.mxu0 %v326
    %2922 = vmatprep.subr.mxu0 %v335
    %2923 = vmatpush1.msra.mxu0 %v334
    %2924 = vmatprep.subr.mxu0 %v343
    %2925 = vmatpush1.msra.mxu0 %v342
    %2926 = vmatprep.subr.mxu0 %v351
    %2927 = vmatpush1.msra.mxu0 %v350
    %2928 = vmatprep.mubr.f32.mxu0 %v2711
    %2929 = vmatmul.mubr.f32.gmra.mrb[0].mxu0 %v2710
    %v2930 = vpop.f32.mrb[0].mxu0
    %v2931 = vadd.f32 0.0, %v2930
    %v2932 = vpop.f32.mrb[0].mxu0
    %v2933 = vadd.f32 0.0, %v2932
    %2934 = vdwg.mxu0
    %2935 = vmatprep.subr.mxu0 %v105
    %2936 = vmatpush1.msra.mxu0 %v104
    %2937 = vmatprep.subr.mxu0 %v113
    %2938 = vmatpush1.msra.mxu0 %v112
    %2939 = vmatprep.subr.mxu0 %v121
    %2940 = vmatpush1.msra.mxu0 %v120
    %2941 = vmatprep.subr.mxu0 %v129
    %2942 = vmatpush1.msra.mxu0 %v128
    %2943 = vmatprep.subr.mxu0 %v137
    %2944 = vmatpush1.msra.mxu0 %v136
    %2945 = vmatprep.subr.mxu0 %v145
    %2946 = vmatpush1.msra.mxu0 %v144
    %2947 = vmatprep.subr.mxu0 %v153
    %2948 = vmatpush1.msra.mxu0 %v152
    %2949 = vmatprep.subr.mxu0 %v161
    %2950 = vmatpush1.msra.mxu0 %v160
    %2951 = vmatprep.subr.mxu0 %v169
    %2952 = vmatpush1.msra.mxu0 %v168
    %2953 = vmatprep.subr.mxu0 %v177
    %2954 = vmatpush1.msra.mxu0 %v176
    %2955 = vmatprep.subr.mxu0 %v185
    %2956 = vmatpush1.msra.mxu0 %v184
    %2957 = vmatprep.subr.mxu0 %v193
    %2958 = vmatpush1.msra.mxu0 %v192
    %2959 = vmatprep.subr.mxu0 %v201
    %2960 = vmatpush1.msra.mxu0 %v200
    %2961 = vmatprep.subr.mxu0 %v209
    %2962 = vmatpush1.msra.mxu0 %v208
    %2963 = vmatprep.subr.mxu0 %v217
    %2964 = vmatpush1.msra.mxu0 %v216
    %2965 = vmatprep.subr.mxu0 %v225
    %2966 = vmatpush1.msra.mxu0 %v224
    %2967 = vmatprep.subr.mxu0 %v233
    %2968 = vmatpush1.msra.mxu0 %v232
    %2969 = vmatprep.subr.mxu0 %v241
    %2970 = vmatpush1.msra.mxu0 %v240
    %2971 = vmatprep.subr.mxu0 %v249
    %2972 = vmatpush1.msra.mxu0 %v248
    %2973 = vmatprep.subr.mxu0 %v257
    %2974 = vmatpush1.msra.mxu0 %v256
    %2975 = vmatprep.subr.mxu0 %v265
    %2976 = vmatpush1.msra.mxu0 %v264
    %2977 = vmatprep.subr.mxu0 %v273
    %2978 = vmatpush1.msra.mxu0 %v272
    %2979 = vmatprep.subr.mxu0 %v281
    %2980 = vmatpush1.msra.mxu0 %v280
    %2981 = vmatprep.subr.mxu0 %v289
    %2982 = vmatpush1.msra.mxu0 %v288
    %2983 = vmatprep.subr.mxu0 %v297
    %2984 = vmatpush1.msra.mxu0 %v296
    %2985 = vmatprep.subr.mxu0 %v305
    %2986 = vmatpush1.msra.mxu0 %v304
    %2987 = vmatprep.subr.mxu0 %v313
    %2988 = vmatpush1.msra.mxu0 %v312
    %2989 = vmatprep.subr.mxu0 %v321
    %2990 = vmatpush1.msra.mxu0 %v320
    %2991 = vmatprep.subr.mxu0 %v329
    %2992 = vmatpush1.msra.mxu0 %v328
    %2993 = vmatprep.subr.mxu0 %v337
    %2994 = vmatpush1.msra.mxu0 %v336
    %2995 = vmatprep.subr.mxu0 %v345
    %2996 = vmatpush1.msra.mxu0 %v344
    %2997 = vmatprep.subr.mxu0 %v353
    %2998 = vmatpush1.msra.mxu0 %v352
    %2999 = vmatprep.mubr.f32.mxu0 %v2711
    %3000 = vmatmul.mubr.f32.gmra.mrb[0].mxu0 %v2710
    %v3001 = vpop.f32.mrb[0].mxu0
    %v3002 = vadd.f32 0.0, %v3001
    %v3003 = vpop.f32.mrb[0].mxu0
    %v3004 = vadd.f32 0.0, %v3003
    %3005 = vdwg.mxu0
    %v3014 = vrot.slane %v2789, 6
    %v3015 = vrot.slane %v2791, 6
    %v3016 = vrot.slane %v2860, 6
    %v3017 = vrot.slane %v2862, 6
    %v3018 = vrot.slane %v2931, 6
    %v3019 = vrot.slane %v2933, 6
    %v3020 = vrot.slane %v3002, 6
    %v3021 = vrot.slane %v3004, 6
    %v3030 = vadd.f32 %v2714, %v3014
    %v3031 = vadd.f32 %v2715, %v3015
    %v3032 = vadd.f32 %v2716, %v3016
    %v3033 = vadd.f32 %v2717, %v3017
    %v3034 = vadd.f32 %v2718, %v3018
    %v3035 = vadd.f32 %v2719, %v3019
    %v3036 = vadd.f32 %v2720, %v3020
    %v3037 = vadd.f32 %v2721, %v3021
    %v3038 = vxor.u32 %v3030, 2147483648
    %v3039 = vxor.u32 %v3031, 2147483648
    %v3040 = vmul.f32 %v3038, 1.442695
    %v3041 = vpow.pop %v3040
    %v3042 = vmul.f32 %v3039, 1.442695
    %v3043 = vpow.pop %v3042
    %v3044 = vadd.f32 %v3041, 1.0
    %v3045 = vadd.f32 %v3043, 1.0
    %v3046 = vrcp.pop %v3044
    %v3047 = vmul.f32 1.0, %v3046
    %v3048 = vrcp.pop %v3045
    %v3049 = vmul.f32 1.0, %v3048
    %v3050 = vxor.u32 %v3032, 2147483648
    %v3051 = vxor.u32 %v3033, 2147483648
    %v3052 = vmul.f32 %v3050, 1.442695
    %v3053 = vpow.pop %v3052
    %v3054 = vmul.f32 %v3051, 1.442695
    %v3055 = vpow.pop %v3054
    %v3056 = vadd.f32 %v3053, 1.0
    %v3057 = vadd.f32 %v3055, 1.0
    %v3058 = vrcp.pop %v3056
    %v3059 = vmul.f32 1.0, %v3058
    %v3060 = vrcp.pop %v3057
    %v3061 = vmul.f32 1.0, %v3060
    %v3062 = vtanh.pop %v3034
    %v3063 = vtanh.pop %v3035
    %v3064 = vxor.u32 %v3036, 2147483648
    %v3065 = vxor.u32 %v3037, 2147483648
    %v3066 = vmul.f32 %v3064, 1.442695
    %v3067 = vpow.pop %v3066
    %v3068 = vmul.f32 %v3065, 1.442695
    %v3069 = vpow.pop %v3068
    %v3070 = vadd.f32 %v3067, 1.0
    %v3071 = vadd.f32 %v3069, 1.0
    %v3072 = vrcp.pop %v3070
    %v3073 = vmul.f32 1.0, %v3072
    %v3074 = vrcp.pop %v3071
    %v3075 = vmul.f32 1.0, %v3074
    %v3078 = vrot.slane %v2706, 6
    %v3079 = vrot.slane %v2707, 6
    %v3082 = vmul.f32 %v3059, %v3078
    %v3083 = vmul.f32 %v3061, %v3079
    %v3084 = vmul.f32 %v3047, %v3062
    %v3085 = vmul.f32 %v3049, %v3063
    %v3086 = vadd.f32 %v3082, %v3084
    %v3087 = vadd.f32 %v3083, %v3085
    %v3088 = vtanh.pop %v3086
    %v3089 = vtanh.pop %v3087
    %v3090 = vmul.f32 %v3073, %v3088
    %v3091 = vmul.f32 %v3075, %v3089
    %3092 = vst [vmem:[#allocation3 + $0x10] sm:$0xc] %v3090
    %3093 = vst [vmem:[#allocation3 + $0x18] sm:$0xc] %v3091
    %v3094 = vld [vmem:[#allocation2 + $0x40] sm:$0x30]
    %v3095 = vld [vmem:[#allocation2 + $0x48] sm:$0x30]
    %v3096 = vld [vmem:[#allocation2 + $0x50] sm:$0x30]
    %v3097 = vld [vmem:[#allocation2 + $0x58] sm:$0x30]
    %v3098 = vld [vmem:[#allocation2 + $0x60] sm:$0x30]
    %v3099 = vld [vmem:[#allocation2 + $0x68] sm:$0x30]
    %v3100 = vld [vmem:[#allocation2 + $0x70] sm:$0x30]
    %v3101 = vld [vmem:[#allocation2 + $0x78] sm:$0x30]
    %v3104 = vrot.slane %v3090, 2
    %v3105 = vrot.slane %v3091, 2
    %3108 = vmatprep.subr.mxu0 %v99
    %3109 = vmatpush1.msra.mxu0 %v98
    %3110 = vmatprep.subr.mxu0 %v107
    %3111 = vmatpush1.msra.mxu0 %v106
    %3112 = vmatprep.subr.mxu0 %v115
    %3113 = vmatpush1.msra.mxu0 %v114
    %3114 = vmatprep.subr.mxu0 %v123
    %3115 = vmatpush1.msra.mxu0 %v122
    %3116 = vmatprep.subr.mxu0 %v131
    %3117 = vmatpush1.msra.mxu0 %v130
    %3118 = vmatprep.subr.mxu0 %v139
    %3119 = vmatpush1.msra.mxu0 %v138
    %3120 = vmatprep.subr.mxu0 %v147
    %3121 = vmatpush1.msra.mxu0 %v146
    %3122 = vmatprep.subr.mxu0 %v155
    %3123 = vmatpush1.msra.mxu0 %v154
    %3124 = vmatprep.subr.mxu0 %v163
    %3125 = vmatpush1.msra.mxu0 %v162
    %3126 = vmatprep.subr.mxu0 %v171
    %3127 = vmatpush1.msra.mxu0 %v170
    %3128 = vmatprep.subr.mxu0 %v179
    %3129 = vmatpush1.msra.mxu0 %v178
    %3130 = vmatprep.subr.mxu0 %v187
    %3131 = vmatpush1.msra.mxu0 %v186
    %3132 = vmatprep.subr.mxu0 %v195
    %3133 = vmatpush1.msra.mxu0 %v194
    %3134 = vmatprep.subr.mxu0 %v203
    %3135 = vmatpush1.msra.mxu0 %v202
    %3136 = vmatprep.subr.mxu0 %v211
    %3137 = vmatpush1.msra.mxu0 %v210
    %3138 = vmatprep.subr.mxu0 %v219
    %3139 = vmatpush1.msra.mxu0 %v218
    %3140 = vmatprep.subr.mxu0 %v227
    %3141 = vmatpush1.msra.mxu0 %v226
    %3142 = vmatprep.subr.mxu0 %v235
    %3143 = vmatpush1.msra.mxu0 %v234
    %3144 = vmatprep.subr.mxu0 %v243
    %3145 = vmatpush1.msra.mxu0 %v242
    %3146 = vmatprep.subr.mxu0 %v251
    %3147 = vmatpush1.msra.mxu0 %v250
    %3148 = vmatprep.subr.mxu0 %v259
    %3149 = vmatpush1.msra.mxu0 %v258
    %3150 = vmatprep.subr.mxu0 %v267
    %3151 = vmatpush1.msra.mxu0 %v266
    %3152 = vmatprep.subr.mxu0 %v275
    %3153 = vmatpush1.msra.mxu0 %v274
    %3154 = vmatprep.subr.mxu0 %v283
    %3155 = vmatpush1.msra.mxu0 %v282
    %3156 = vmatprep.subr.mxu0 %v291
    %3157 = vmatpush1.msra.mxu0 %v290
    %3158 = vmatprep.subr.mxu0 %v299
    %3159 = vmatpush1.msra.mxu0 %v298
    %3160 = vmatprep.subr.mxu0 %v307
    %3161 = vmatpush1.msra.mxu0 %v306
    %3162 = vmatprep.subr.mxu0 %v315
    %3163 = vmatpush1.msra.mxu0 %v314
    %3164 = vmatprep.subr.mxu0 %v323
    %3165 = vmatpush1.msra.mxu0 %v322
    %3166 = vmatprep.subr.mxu0 %v331
    %3167 = vmatpush1.msra.mxu0 %v330
    %3168 = vmatprep.subr.mxu0 %v339
    %3169 = vmatpush1.msra.mxu0 %v338
    %3170 = vmatprep.subr.mxu0 %v347
    %3171 = vmatpush1.msra.mxu0 %v346
    %3172 = vmatprep.mubr.f32.mxu0 %v3105
    %3173 = vmatmul.mubr.f32.gmra.mrb[0].mxu0 %v3104
    %v3174 = vpop.f32.mrb[0].mxu0
    %v3175 = vadd.f32 0.0, %v3174
    %v3176 = vpop.f32.mrb[0].mxu0
    %v3177 = vadd.f32 0.0, %v3176
    %3178 = vdwg.mxu0
    %3179 = vmatprep.subr.mxu0 %v101
    %3180 = vmatpush1.msra.mxu0 %v100
    %3181 = vmatprep.subr.mxu0 %v109
    %3182 = vmatpush1.msra.mxu0 %v108
    %3183 = vmatprep.subr.mxu0 %v117
    %3184 = vmatpush1.msra.mxu0 %v116
    %3185 = vmatprep.subr.mxu0 %v125
    %3186 = vmatpush1.msra.mxu0 %v124
    %3187 = vmatprep.subr.mxu0 %v133
    %3188 = vmatpush1.msra.mxu0 %v132
    %3189 = vmatprep.subr.mxu0 %v141
    %3190 = vmatpush1.msra.mxu0 %v140
    %3191 = vmatprep.subr.mxu0 %v149
    %3192 = vmatpush1.msra.mxu0 %v148
    %3193 = vmatprep.subr.mxu0 %v157
    %3194 = vmatpush1.msra.mxu0 %v156
    %3195 = vmatprep.subr.mxu0 %v165
    %3196 = vmatpush1.msra.mxu0 %v164
    %3197 = vmatprep.subr.mxu0 %v173
    %3198 = vmatpush1.msra.mxu0 %v172
    %3199 = vmatprep.subr.mxu0 %v181
    %3200 = vmatpush1.msra.mxu0 %v180
    %3201 = vmatprep.subr.mxu0 %v189
    %3202 = vmatpush1.msra.mxu0 %v188
    %3203 = vmatprep.subr.mxu0 %v197
    %3204 = vmatpush1.msra.mxu0 %v196
    %3205 = vmatprep.subr.mxu0 %v205
    %3206 = vmatpush1.msra.mxu0 %v204
    %3207 = vmatprep.subr.mxu0 %v213
    %3208 = vmatpush1.msra.mxu0 %v212
    %3209 = vmatprep.subr.mxu0 %v221
    %3210 = vmatpush1.msra.mxu0 %v220
    %3211 = vmatprep.subr.mxu0 %v229
    %3212 = vmatpush1.msra.mxu0 %v228
    %3213 = vmatprep.subr.mxu0 %v237
    %3214 = vmatpush1.msra.mxu0 %v236
    %3215 = vmatprep.subr.mxu0 %v245
    %3216 = vmatpush1.msra.mxu0 %v244
    %3217 = vmatprep.subr.mxu0 %v253
    %3218 = vmatpush1.msra.mxu0 %v252
    %3219 = vmatprep.subr.mxu0 %v261
    %3220 = vmatpush1.msra.mxu0 %v260
    %3221 = vmatprep.subr.mxu0 %v269
    %3222 = vmatpush1.msra.mxu0 %v268
    %3223 = vmatprep.subr.mxu0 %v277
    %3224 = vmatpush1.msra.mxu0 %v276
    %3225 = vmatprep.subr.mxu0 %v285
    %3226 = vmatpush1.msra.mxu0 %v284
    %3227 = vmatprep.subr.mxu0 %v293
    %3228 = vmatpush1.msra.mxu0 %v292
    %3229 = vmatprep.subr.mxu0 %v301
    %3230 = vmatpush1.msra.mxu0 %v300
    %3231 = vmatprep.subr.mxu0 %v309
    %3232 = vmatpush1.msra.mxu0 %v308
    %3233 = vmatprep.subr.mxu0 %v317
    %3234 = vmatpush1.msra.mxu0 %v316
    %3235 = vmatprep.subr.mxu0 %v325
    %3236 = vmatpush1.msra.mxu0 %v324
    %3237 = vmatprep.subr.mxu0 %v333
    %3238 = vmatpush1.msra.mxu0 %v332
    %3239 = vmatprep.subr.mxu0 %v341
    %3240 = vmatpush1.msra.mxu0 %v340
    %3241 = vmatprep.subr.mxu0 %v349
    %3242 = vmatpush1.msra.mxu0 %v348
    %3243 = vmatprep.mubr.f32.mxu0 %v3105
    %3244 = vmatmul.mubr.f32.gmra.mrb[0].mxu0 %v3104
    %v3245 = vpop.f32.mrb[0].mxu0
    %v3246 = vadd.f32 0.0, %v3245
    %v3247 = vpop.f32.mrb[0].mxu0
    %v3248 = vadd.f32 0.0, %v3247
    %3249 = vdwg.mxu0
    %3250 = vmatprep.subr.mxu0 %v103
    %3251 = vmatpush1.msra.mxu0 %v102
    %3252 = vmatprep.subr.mxu0 %v111
    %3253 = vmatpush1.msra.mxu0 %v110
    %3254 = vmatprep.subr.mxu0 %v119
    %3255 = vmatpush1.msra.mxu0 %v118
    %3256 = vmatprep.subr.mxu0 %v127
    %3257 = vmatpush1.msra.mxu0 %v126
    %3258 = vmatprep.subr.mxu0 %v135
    %3259 = vmatpush1.msra.mxu0 %v134
    %3260 = vmatprep.subr.mxu0 %v143
    %3261 = vmatpush1.msra.mxu0 %v142
    %3262 = vmatprep.subr.mxu0 %v151
    %3263 = vmatpush1.msra.mxu0 %v150
    %3264 = vmatprep.subr.mxu0 %v159
    %3265 = vmatpush1.msra.mxu0 %v158
    %3266 = vmatprep.subr.mxu0 %v167
    %3267 = vmatpush1.msra.mxu0 %v166
    %3268 = vmatprep.subr.mxu0 %v175
    %3269 = vmatpush1.msra.mxu0 %v174
    %3270 = vmatprep.subr.mxu0 %v183
    %3271 = vmatpush1.msra.mxu0 %v182
    %3272 = vmatprep.subr.mxu0 %v191
    %3273 = vmatpush1.msra.mxu0 %v190
    %3274 = vmatprep.subr.mxu0 %v199
    %3275 = vmatpush1.msra.mxu0 %v198
    %3276 = vmatprep.subr.mxu0 %v207
    %3277 = vmatpush1.msra.mxu0 %v206
    %3278 = vmatprep.subr.mxu0 %v215
    %3279 = vmatpush1.msra.mxu0 %v214
    %3280 = vmatprep.subr.mxu0 %v223
    %3281 = vmatpush1.msra.mxu0 %v222
    %3282 = vmatprep.subr.mxu0 %v231
    %3283 = vmatpush1.msra.mxu0 %v230
    %3284 = vmatprep.subr.mxu0 %v239
    %3285 = vmatpush1.msra.mxu0 %v238
    %3286 = vmatprep.subr.mxu0 %v247
    %3287 = vmatpush1.msra.mxu0 %v246
    %3288 = vmatprep.subr.mxu0 %v255
    %3289 = vmatpush1.msra.mxu0 %v254
    %3290 = vmatprep.subr.mxu0 %v263
    %3291 = vmatpush1.msra.mxu0 %v262
    %3292 = vmatprep.subr.mxu0 %v271
    %3293 = vmatpush1.msra.mxu0 %v270
    %3294 = vmatprep.subr.mxu0 %v279
    %3295 = vmatpush1.msra.mxu0 %v278
    %3296 = vmatprep.subr.mxu0 %v287
    %3297 = vmatpush1.msra.mxu0 %v286
    %3298 = vmatprep.subr.mxu0 %v295
    %3299 = vmatpush1.msra.mxu0 %v294
    %3300 = vmatprep.subr.mxu0 %v303
    %3301 = vmatpush1.msra.mxu0 %v302
    %3302 = vmatprep.subr.mxu0 %v311
    %3303 = vmatpush1.msra.mxu0 %v310
    %3304 = vmatprep.subr.mxu0 %v319
    %3305 = vmatpush1.msra.mxu0 %v318
    %3306 = vmatprep.subr.mxu0 %v327
    %3307 = vmatpush1.msra.mxu0 %v326
    %3308 = vmatprep.subr.mxu0 %v335
    %3309 = vmatpush1.msra.mxu0 %v334
    %3310 = vmatprep.subr.mxu0 %v343
    %3311 = vmatpush1.msra.mxu0 %v342
    %3312 = vmatprep.subr.mxu0 %v351
    %3313 = vmatpush1.msra.mxu0 %v350
    %3314 = vmatprep.mubr.f32.mxu0 %v3105
    %3315 = vmatmul.mubr.f32.gmra.mrb[0].mxu0 %v3104
    %v3316 = vpop.f32.mrb[0].mxu0
    %v3317 = vadd.f32 0.0, %v3316
    %v3318 = vpop.f32.mrb[0].mxu0
    %v3319 = vadd.f32 0.0, %v3318
    %3320 = vdwg.mxu0
    %3321 = vmatprep.subr.mxu0 %v105
    %3322 = vmatpush1.msra.mxu0 %v104
    %3323 = vmatprep.subr.mxu0 %v113
    %3324 = vmatpush1.msra.mxu0 %v112
    %3325 = vmatprep.subr.mxu0 %v121
    %3326 = vmatpush1.msra.mxu0 %v120
    %3327 = vmatprep.subr.mxu0 %v129
    %3328 = vmatpush1.msra.mxu0 %v128
    %3329 = vmatprep.subr.mxu0 %v137
    %3330 = vmatpush1.msra.mxu0 %v136
    %3331 = vmatprep.subr.mxu0 %v145
    %3332 = vmatpush1.msra.mxu0 %v144
    %3333 = vmatprep.subr.mxu0 %v153
    %3334 = vmatpush1.msra.mxu0 %v152
    %3335 = vmatprep.subr.mxu0 %v161
    %3336 = vmatpush1.msra.mxu0 %v160
    %3337 = vmatprep.subr.mxu0 %v169
    %3338 = vmatpush1.msra.mxu0 %v168
    %3339 = vmatprep.subr.mxu0 %v177
    %3340 = vmatpush1.msra.mxu0 %v176
    %3341 = vmatprep.subr.mxu0 %v185
    %3342 = vmatpush1.msra.mxu0 %v184
    %3343 = vmatprep.subr.mxu0 %v193
    %3344 = vmatpush1.msra.mxu0 %v192
    %3345 = vmatprep.subr.mxu0 %v201
    %3346 = vmatpush1.msra.mxu0 %v200
    %3347 = vmatprep.subr.mxu0 %v209
    %3348 = vmatpush1.msra.mxu0 %v208
    %3349 = vmatprep.subr.mxu0 %v217
    %3350 = vmatpush1.msra.mxu0 %v216
    %3351 = vmatprep.subr.mxu0 %v225
    %3352 = vmatpush1.msra.mxu0 %v224
    %3353 = vmatprep.subr.mxu0 %v233
    %3354 = vmatpush1.msra.mxu0 %v232
    %3355 = vmatprep.subr.mxu0 %v241
    %3356 = vmatpush1.msra.mxu0 %v240
    %3357 = vmatprep.subr.mxu0 %v249
    %3358 = vmatpush1.msra.mxu0 %v248
    %3359 = vmatprep.subr.mxu0 %v257
    %3360 = vmatpush1.msra.mxu0 %v256
    %3361 = vmatprep.subr.mxu0 %v265
    %3362 = vmatpush1.msra.mxu0 %v264
    %3363 = vmatprep.subr.mxu0 %v273
    %3364 = vmatpush1.msra.mxu0 %v272
    %3365 = vmatprep.subr.mxu0 %v281
    %3366 = vmatpush1.msra.mxu0 %v280
    %3367 = vmatprep.subr.mxu0 %v289
    %3368 = vmatpush1.msra.mxu0 %v288
    %3369 = vmatprep.subr.mxu0 %v297
    %3370 = vmatpush1.msra.mxu0 %v296
    %3371 = vmatprep.subr.mxu0 %v305
    %3372 = vmatpush1.msra.mxu0 %v304
    %3373 = vmatprep.subr.mxu0 %v313
    %3374 = vmatpush1.msra.mxu0 %v312
    %3375 = vmatprep.subr.mxu0 %v321
    %3376 = vmatpush1.msra.mxu0 %v320
    %3377 = vmatprep.subr.mxu0 %v329
    %3378 = vmatpush1.msra.mxu0 %v328
    %3379 = vmatprep.subr.mxu0 %v337
    %3380 = vmatpush1.msra.mxu0 %v336
    %3381 = vmatprep.subr.mxu0 %v345
    %3382 = vmatpush1.msra.mxu0 %v344
    %3383 = vmatprep.subr.mxu0 %v353
    %3384 = vmatpush1.msra.mxu0 %v352
    %3385 = vmatprep.mubr.f32.mxu0 %v3105
    %3386 = vmatmul.mubr.f32.gmra.mrb[0].mxu0 %v3104
    %v3387 = vpop.f32.mrb[0].mxu0
    %v3388 = vadd.f32 0.0, %v3387
    %v3389 = vpop.f32.mrb[0].mxu0
    %v3390 = vadd.f32 0.0, %v3389
    %3391 = vdwg.mxu0
    %v3400 = vrot.slane %v3175, 4
    %v3401 = vrot.slane %v3177, 4
    %v3402 = vrot.slane %v3246, 4
    %v3403 = vrot.slane %v3248, 4
    %v3404 = vrot.slane %v3317, 4
    %v3405 = vrot.slane %v3319, 4
    %v3406 = vrot.slane %v3388, 4
    %v3407 = vrot.slane %v3390, 4
    %v3416 = vadd.f32 %v3094, %v3400
    %v3417 = vadd.f32 %v3095, %v3401
    %v3418 = vadd.f32 %v3096, %v3402
    %v3419 = vadd.f32 %v3097, %v3403
    %v3420 = vadd.f32 %v3098, %v3404
    %v3421 = vadd.f32 %v3099, %v3405
    %v3422 = vadd.f32 %v3100, %v3406
    %v3423 = vadd.f32 %v3101, %v3407
    %v3424 = vxor.u32 %v3416, 2147483648
    %v3425 = vxor.u32 %v3417, 2147483648
    %v3426 = vmul.f32 %v3424, 1.442695
    %v3427 = vpow.pop %v3426
    %v3428 = vmul.f32 %v3425, 1.442695
    %v3429 = vpow.pop %v3428
    %v3430 = vadd.f32 %v3427, 1.0
    %v3431 = vadd.f32 %v3429, 1.0
    %v3432 = vrcp.pop %v3430
    %v3433 = vmul.f32 1.0, %v3432
    %v3434 = vrcp.pop %v3431
    %v3435 = vmul.f32 1.0, %v3434
    %v3436 = vxor.u32 %v3418, 2147483648
    %v3437 = vxor.u32 %v3419, 2147483648
    %v3438 = vmul.f32 %v3436, 1.442695
    %v3439 = vpow.pop %v3438
    %v3440 = vmul.f32 %v3437, 1.442695
    %v3441 = vpow.pop %v3440
    %v3442 = vadd.f32 %v3439, 1.0
    %v3443 = vadd.f32 %v3441, 1.0
    %v3444 = vrcp.pop %v3442
    %v3445 = vmul.f32 1.0, %v3444
    %v3446 = vrcp.pop %v3443
    %v3447 = vmul.f32 1.0, %v3446
    %v3448 = vtanh.pop %v3420
    %v3449 = vtanh.pop %v3421
    %v3450 = vxor.u32 %v3422, 2147483648
    %v3451 = vxor.u32 %v3423, 2147483648
    %v3452 = vmul.f32 %v3450, 1.442695
    %v3453 = vpow.pop %v3452
    %v3454 = vmul.f32 %v3451, 1.442695
    %v3455 = vpow.pop %v3454
    %v3456 = vadd.f32 %v3453, 1.0
    %v3457 = vadd.f32 %v3455, 1.0
    %v3458 = vrcp.pop %v3456
    %v3459 = vmul.f32 1.0, %v3458
    %v3460 = vrcp.pop %v3457
    %v3461 = vmul.f32 1.0, %v3460
    %v3464 = vrot.slane %v3086, 6
    %v3465 = vrot.slane %v3087, 6
    %v3468 = vmul.f32 %v3445, %v3464
    %v3469 = vmul.f32 %v3447, %v3465
    %v3470 = vmul.f32 %v3433, %v3448
    %v3471 = vmul.f32 %v3435, %v3449
    %v3472 = vadd.f32 %v3468, %v3470
    %v3473 = vadd.f32 %v3469, %v3471
    %v3474 = vtanh.pop %v3472
    %v3475 = vtanh.pop %v3473
    %v3476 = vmul.f32 %v3459, %v3474
    %v3477 = vmul.f32 %v3461, %v3475
    %3478 = vst [vmem:[#allocation3 + $0x10] sm:$0x30] %v3476
    %3479 = vst [vmem:[#allocation3 + $0x18] sm:$0x30] %v3477
    %v3480 = vld [vmem:[#allocation2 + $0x40] sm:$0xc0]
    %v3481 = vld [vmem:[#allocation2 + $0x48] sm:$0xc0]
    %v3482 = vld [vmem:[#allocation2 + $0x50] sm:$0xc0]
    %v3483 = vld [vmem:[#allocation2 + $0x58] sm:$0xc0]
    %v3484 = vld [vmem:[#allocation2 + $0x60] sm:$0xc0]
    %v3485 = vld [vmem:[#allocation2 + $0x68] sm:$0xc0]
    %v3486 = vld [vmem:[#allocation2 + $0x70] sm:$0xc0]
    %v3487 = vld [vmem:[#allocation2 + $0x78] sm:$0xc0]
    %v3490 = vrot.slane %v3476, 4
    %v3491 = vrot.slane %v3477, 4
    %3494 = vmatprep.subr.mxu0 %v99
    %3495 = vmatpush1.msra.mxu0 %v98
    %3496 = vmatprep.subr.mxu0 %v107
    %3497 = vmatpush1.msra.mxu0 %v106
    %3498 = vmatprep.subr.mxu0 %v115
    %3499 = vmatpush1.msra.mxu0 %v114
    %3500 = vmatprep.subr.mxu0 %v123
    %3501 = vmatpush1.msra.mxu0 %v122
    %3502 = vmatprep.subr.mxu0 %v131
    %3503 = vmatpush1.msra.mxu0 %v130
    %3504 = vmatprep.subr.mxu0 %v139
    %3505 = vmatpush1.msra.mxu0 %v138
    %3506 = vmatprep.subr.mxu0 %v147
    %3507 = vmatpush1.msra.mxu0 %v146
    %3508 = vmatprep.subr.mxu0 %v155
    %3509 = vmatpush1.msra.mxu0 %v154
    %3510 = vmatprep.subr.mxu0 %v163
    %3511 = vmatpush1.msra.mxu0 %v162
    %3512 = vmatprep.subr.mxu0 %v171
    %3513 = vmatpush1.msra.mxu0 %v170
    %3514 = vmatprep.subr.mxu0 %v179
    %3515 = vmatpush1.msra.mxu0 %v178
    %3516 = vmatprep.subr.mxu0 %v187
    %3517 = vmatpush1.msra.mxu0 %v186
    %3518 = vmatprep.subr.mxu0 %v195
    %3519 = vmatpush1.msra.mxu0 %v194
    %3520 = vmatprep.subr.mxu0 %v203
    %3521 = vmatpush1.msra.mxu0 %v202
    %3522 = vmatprep.subr.mxu0 %v211
    %3523 = vmatpush1.msra.mxu0 %v210
    %3524 = vmatprep.subr.mxu0 %v219
    %3525 = vmatpush1.msra.mxu0 %v218
    %3526 = vmatprep.subr.mxu0 %v227
    %3527 = vmatpush1.msra.mxu0 %v226
    %3528 = vmatprep.subr.mxu0 %v235
    %3529 = vmatpush1.msra.mxu0 %v234
    %3530 = vmatprep.subr.mxu0 %v243
    %3531 = vmatpush1.msra.mxu0 %v242
    %3532 = vmatprep.subr.mxu0 %v251
    %3533 = vmatpush1.msra.mxu0 %v250
    %3534 = vmatprep.subr.mxu0 %v259
    %3535 = vmatpush1.msra.mxu0 %v258
    %3536 = vmatprep.subr.mxu0 %v267
    %3537 = vmatpush1.msra.mxu0 %v266
    %3538 = vmatprep.subr.mxu0 %v275
    %3539 = vmatpush1.msra.mxu0 %v274
    %3540 = vmatprep.subr.mxu0 %v283
    %3541 = vmatpush1.msra.mxu0 %v282
    %3542 = vmatprep.subr.mxu0 %v291
    %3543 = vmatpush1.msra.mxu0 %v290
    %3544 = vmatprep.subr.mxu0 %v299
    %3545 = vmatpush1.msra.mxu0 %v298
    %3546 = vmatprep.subr.mxu0 %v307
    %3547 = vmatpush1.msra.mxu0 %v306
    %3548 = vmatprep.subr.mxu0 %v315
    %3549 = vmatpush1.msra.mxu0 %v314
    %3550 = vmatprep.subr.mxu0 %v323
    %3551 = vmatpush1.msra.mxu0 %v322
    %3552 = vmatprep.subr.mxu0 %v331
    %3553 = vmatpush1.msra.mxu0 %v330
    %3554 = vmatprep.subr.mxu0 %v339
    %3555 = vmatpush1.msra.mxu0 %v338
    %3556 = vmatprep.subr.mxu0 %v347
    %3557 = vmatpush1.msra.mxu0 %v346
    %3558 = vmatprep.mubr.f32.mxu0 %v3491
    %3559 = vmatmul.mubr.f32.gmra.mrb[0].mxu0 %v3490
    %v3560 = vpop.f32.mrb[0].mxu0
    %v3561 = vadd.f32 0.0, %v3560
    %v3562 = vpop.f32.mrb[0].mxu0
    %v3563 = vadd.f32 0.0, %v3562
    %3564 = vdwg.mxu0
    %3565 = vmatprep.subr.mxu0 %v101
    %3566 = vmatpush1.msra.mxu0 %v100
    %3567 = vmatprep.subr.mxu0 %v109
    %3568 = vmatpush1.msra.mxu0 %v108
    %3569 = vmatprep.subr.mxu0 %v117
    %3570 = vmatpush1.msra.mxu0 %v116
    %3571 = vmatprep.subr.mxu0 %v125
    %3572 = vmatpush1.msra.mxu0 %v124
    %3573 = vmatprep.subr.mxu0 %v133
    %3574 = vmatpush1.msra.mxu0 %v132
    %3575 = vmatprep.subr.mxu0 %v141
    %3576 = vmatpush1.msra.mxu0 %v140
    %3577 = vmatprep.subr.mxu0 %v149
    %3578 = vmatpush1.msra.mxu0 %v148
    %3579 = vmatprep.subr.mxu0 %v157
    %3580 = vmatpush1.msra.mxu0 %v156
    %3581 = vmatprep.subr.mxu0 %v165
    %3582 = vmatpush1.msra.mxu0 %v164
    %3583 = vmatprep.subr.mxu0 %v173
    %3584 = vmatpush1.msra.mxu0 %v172
    %3585 = vmatprep.subr.mxu0 %v181
    %3586 = vmatpush1.msra.mxu0 %v180
    %3587 = vmatprep.subr.mxu0 %v189
    %3588 = vmatpush1.msra.mxu0 %v188
    %3589 = vmatprep.subr.mxu0 %v197
    %3590 = vmatpush1.msra.mxu0 %v196
    %3591 = vmatprep.subr.mxu0 %v205
    %3592 = vmatpush1.msra.mxu0 %v204
    %3593 = vmatprep.subr.mxu0 %v213
    %3594 = vmatpush1.msra.mxu0 %v212
    %3595 = vmatprep.subr.mxu0 %v221
    %3596 = vmatpush1.msra.mxu0 %v220
    %3597 = vmatprep.subr.mxu0 %v229
    %3598 = vmatpush1.msra.mxu0 %v228
    %3599 = vmatprep.subr.mxu0 %v237
    %3600 = vmatpush1.msra.mxu0 %v236
    %3601 = vmatprep.subr.mxu0 %v245
    %3602 = vmatpush1.msra.mxu0 %v244
    %3603 = vmatprep.subr.mxu0 %v253
    %3604 = vmatpush1.msra.mxu0 %v252
    %3605 = vmatprep.subr.mxu0 %v261
    %3606 = vmatpush1.msra.mxu0 %v260
    %3607 = vmatprep.subr.mxu0 %v269
    %3608 = vmatpush1.msra.mxu0 %v268
    %3609 = vmatprep.subr.mxu0 %v277
    %3610 = vmatpush1.msra.mxu0 %v276
    %3611 = vmatprep.subr.mxu0 %v285
    %3612 = vmatpush1.msra.mxu0 %v284
    %3613 = vmatprep.subr.mxu0 %v293
    %3614 = vmatpush1.msra.mxu0 %v292
    %3615 = vmatprep.subr.mxu0 %v301
    %3616 = vmatpush1.msra.mxu0 %v300
    %3617 = vmatprep.subr.mxu0 %v309
    %3618 = vmatpush1.msra.mxu0 %v308
    %3619 = vmatprep.subr.mxu0 %v317
    %3620 = vmatpush1.msra.mxu0 %v316
    %3621 = vmatprep.subr.mxu0 %v325
    %3622 = vmatpush1.msra.mxu0 %v324
    %3623 = vmatprep.subr.mxu0 %v333
    %3624 = vmatpush1.msra.mxu0 %v332
    %3625 = vmatprep.subr.mxu0 %v341
    %3626 = vmatpush1.msra.mxu0 %v340
    %3627 = vmatprep.subr.mxu0 %v349
    %3628 = vmatpush1.msra.mxu0 %v348
    %3629 = vmatprep.mubr.f32.mxu0 %v3491
    %3630 = vmatmul.mubr.f32.gmra.mrb[0].mxu0 %v3490
    %v3631 = vpop.f32.mrb[0].mxu0
    %v3632 = vadd.f32 0.0, %v3631
    %v3633 = vpop.f32.mrb[0].mxu0
    %v3634 = vadd.f32 0.0, %v3633
    %3635 = vdwg.mxu0
    %3636 = vmatprep.subr.mxu0 %v103
    %3637 = vmatpush1.msra.mxu0 %v102
    %3638 = vmatprep.subr.mxu0 %v111
    %3639 = vmatpush1.msra.mxu0 %v110
    %3640 = vmatprep.subr.mxu0 %v119
    %3641 = vmatpush1.msra.mxu0 %v118
    %3642 = vmatprep.subr.mxu0 %v127
    %3643 = vmatpush1.msra.mxu0 %v126
    %3644 = vmatprep.subr.mxu0 %v135
    %3645 = vmatpush1.msra.mxu0 %v134
    %3646 = vmatprep.subr.mxu0 %v143
    %3647 = vmatpush1.msra.mxu0 %v142
    %3648 = vmatprep.subr.mxu0 %v151
    %3649 = vmatpush1.msra.mxu0 %v150
    %3650 = vmatprep.subr.mxu0 %v159
    %3651 = vmatpush1.msra.mxu0 %v158
    %3652 = vmatprep.subr.mxu0 %v167
    %3653 = vmatpush1.msra.mxu0 %v166
    %3654 = vmatprep.subr.mxu0 %v175
    %3655 = vmatpush1.msra.mxu0 %v174
    %3656 = vmatprep.subr.mxu0 %v183
    %3657 = vmatpush1.msra.mxu0 %v182
    %3658 = vmatprep.subr.mxu0 %v191
    %3659 = vmatpush1.msra.mxu0 %v190
    %3660 = vmatprep.subr.mxu0 %v199
    %3661 = vmatpush1.msra.mxu0 %v198
    %3662 = vmatprep.subr.mxu0 %v207
    %3663 = vmatpush1.msra.mxu0 %v206
    %3664 = vmatprep.subr.mxu0 %v215
    %3665 = vmatpush1.msra.mxu0 %v214
    %3666 = vmatprep.subr.mxu0 %v223
    %3667 = vmatpush1.msra.mxu0 %v222
    %3668 = vmatprep.subr.mxu0 %v231
    %3669 = vmatpush1.msra.mxu0 %v230
    %3670 = vmatprep.subr.mxu0 %v239
    %3671 = vmatpush1.msra.mxu0 %v238
    %3672 = vmatprep.subr.mxu0 %v247
    %3673 = vmatpush1.msra.mxu0 %v246
    %3674 = vmatprep.subr.mxu0 %v255
    %3675 = vmatpush1.msra.mxu0 %v254
    %3676 = vmatprep.subr.mxu0 %v263
    %3677 = vmatpush1.msra.mxu0 %v262
    %3678 = vmatprep.subr.mxu0 %v271
    %3679 = vmatpush1.msra.mxu0 %v270
    %3680 = vmatprep.subr.mxu0 %v279
    %3681 = vmatpush1.msra.mxu0 %v278
    %3682 = vmatprep.subr.mxu0 %v287
    %3683 = vmatpush1.msra.mxu0 %v286
    %3684 = vmatprep.subr.mxu0 %v295
    %3685 = vmatpush1.msra.mxu0 %v294
    %3686 = vmatprep.subr.mxu0 %v303
    %3687 = vmatpush1.msra.mxu0 %v302
    %3688 = vmatprep.subr.mxu0 %v311
    %3689 = vmatpush1.msra.mxu0 %v310
    %3690 = vmatprep.subr.mxu0 %v319
    %3691 = vmatpush1.msra.mxu0 %v318
    %3692 = vmatprep.subr.mxu0 %v327
    %3693 = vmatpush1.msra.mxu0 %v326
    %3694 = vmatprep.subr.mxu0 %v335
    %3695 = vmatpush1.msra.mxu0 %v334
    %3696 = vmatprep.subr.mxu0 %v343
    %3697 = vmatpush1.msra.mxu0 %v342
    %3698 = vmatprep.subr.mxu0 %v351
    %3699 = vmatpush1.msra.mxu0 %v350
    %3700 = vmatprep.mubr.f32.mxu0 %v3491
    %3701 = vmatmul.mubr.f32.gmra.mrb[0].mxu0 %v3490
    %v3702 = vpop.f32.mrb[0].mxu0
    %v3703 = vadd.f32 0.0, %v3702
    %v3704 = vpop.f32.mrb[0].mxu0
    %v3705 = vadd.f32 0.0, %v3704
    %3706 = vdwg.mxu0
    %3707 = vmatprep.subr.mxu0 %v105
    %3708 = vmatpush1.msra.mxu0 %v104
    %3709 = vmatprep.subr.mxu0 %v113
    %3710 = vmatpush1.msra.mxu0 %v112
    %3711 = vmatprep.subr.mxu0 %v121
    %3712 = vmatpush1.msra.mxu0 %v120
    %3713 = vmatprep.subr.mxu0 %v129
    %3714 = vmatpush1.msra.mxu0 %v128
    %3715 = vmatprep.subr.mxu0 %v137
    %3716 = vmatpush1.msra.mxu0 %v136
    %3717 = vmatprep.subr.mxu0 %v145
    %3718 = vmatpush1.msra.mxu0 %v144
    %3719 = vmatprep.subr.mxu0 %v153
    %3720 = vmatpush1.msra.mxu0 %v152
    %3721 = vmatprep.subr.mxu0 %v161
    %3722 = vmatpush1.msra.mxu0 %v160
    %3723 = vmatprep.subr.mxu0 %v169
    %3724 = vmatpush1.msra.mxu0 %v168
    %3725 = vmatprep.subr.mxu0 %v177
    %3726 = vmatpush1.msra.mxu0 %v176
    %3727 = vmatprep.subr.mxu0 %v185
    %3728 = vmatpush1.msra.mxu0 %v184
    %3729 = vmatprep.subr.mxu0 %v193
    %3730 = vmatpush1.msra.mxu0 %v192
    %3731 = vmatprep.subr.mxu0 %v201
    %3732 = vmatpush1.msra.mxu0 %v200
    %3733 = vmatprep.subr.mxu0 %v209
    %3734 = vmatpush1.msra.mxu0 %v208
    %3735 = vmatprep.subr.mxu0 %v217
    %3736 = vmatpush1.msra.mxu0 %v216
    %3737 = vmatprep.subr.mxu0 %v225
    %3738 = vmatpush1.msra.mxu0 %v224
    %3739 = vmatprep.subr.mxu0 %v233
    %3740 = vmatpush1.msra.mxu0 %v232
    %3741 = vmatprep.subr.mxu0 %v241
    %3742 = vmatpush1.msra.mxu0 %v240
    %3743 = vmatprep.subr.mxu0 %v249
    %3744 = vmatpush1.msra.mxu0 %v248
    %3745 = vmatprep.subr.mxu0 %v257
    %3746 = vmatpush1.msra.mxu0 %v256
    %3747 = vmatprep.subr.mxu0 %v265
    %3748 = vmatpush1.msra.mxu0 %v264
    %3749 = vmatprep.subr.mxu0 %v273
    %3750 = vmatpush1.msra.mxu0 %v272
    %3751 = vmatprep.subr.mxu0 %v281
    %3752 = vmatpush1.msra.mxu0 %v280
    %3753 = vmatprep.subr.mxu0 %v289
    %3754 = vmatpush1.msra.mxu0 %v288
    %3755 = vmatprep.subr.mxu0 %v297
    %3756 = vmatpush1.msra.mxu0 %v296
    %3757 = vmatprep.subr.mxu0 %v305
    %3758 = vmatpush1.msra.mxu0 %v304
    %3759 = vmatprep.subr.mxu0 %v313
    %3760 = vmatpush1.msra.mxu0 %v312
    %3761 = vmatprep.subr.mxu0 %v321
    %3762 = vmatpush1.msra.mxu0 %v320
    %3763 = vmatprep.subr.mxu0 %v329
    %3764 = vmatpush1.msra.mxu0 %v328
    %3765 = vmatprep.subr.mxu0 %v337
    %3766 = vmatpush1.msra.mxu0 %v336
    %3767 = vmatprep.subr.mxu0 %v345
    %3768 = vmatpush1.msra.mxu0 %v344
    %3769 = vmatprep.subr.mxu0 %v353
    %3770 = vmatpush1.msra.mxu0 %v352
    %3771 = vmatprep.mubr.f32.mxu0 %v3491
    %3772 = vmatmul.mubr.f32.gmra.mrb[0].mxu0 %v3490
    %v3773 = vpop.f32.mrb[0].mxu0
    %v3774 = vadd.f32 0.0, %v3773
    %v3775 = vpop.f32.mrb[0].mxu0
    %v3776 = vadd.f32 0.0, %v3775
    %3777 = vdwg.mxu0
    %v3786 = vrot.slane %v3561, 2
    %v3787 = vrot.slane %v3563, 2
    %v3788 = vrot.slane %v3632, 2
    %v3789 = vrot.slane %v3634, 2
    %v3790 = vrot.slane %v3703, 2
    %v3791 = vrot.slane %v3705, 2
    %v3792 = vrot.slane %v3774, 2
    %v3793 = vrot.slane %v3776, 2
    %v3802 = vadd.f32 %v3480, %v3786
    %v3803 = vadd.f32 %v3481, %v3787
    %v3804 = vadd.f32 %v3482, %v3788
    %v3805 = vadd.f32 %v3483, %v3789
    %v3806 = vadd.f32 %v3484, %v3790
    %v3807 = vadd.f32 %v3485, %v3791
    %v3808 = vadd.f32 %v3486, %v3792
    %v3809 = vadd.f32 %v3487, %v3793
    %v3810 = vxor.u32 %v3802, 2147483648
    %v3811 = vxor.u32 %v3803, 2147483648
    %v3812 = vmul.f32 %v3810, 1.442695
    %v3813 = vpow.pop %v3812
    %v3814 = vmul.f32 %v3811, 1.442695
    %v3815 = vpow.pop %v3814
    %v3816 = vadd.f32 %v3813, 1.0
    %v3817 = vadd.f32 %v3815, 1.0
    %v3818 = vrcp.pop %v3816
    %v3819 = vmul.f32 1.0, %v3818
    %v3820 = vrcp.pop %v3817
    %v3821 = vmul.f32 1.0, %v3820
    %v3822 = vxor.u32 %v3804, 2147483648
    %v3823 = vxor.u32 %v3805, 2147483648
    %v3824 = vmul.f32 %v3822, 1.442695
    %v3825 = vpow.pop %v3824
    %v3826 = vmul.f32 %v3823, 1.442695
    %v3827 = vpow.pop %v3826
    %v3828 = vadd.f32 %v3825, 1.0
    %v3829 = vadd.f32 %v3827, 1.0
    %v3830 = vrcp.pop %v3828
    %v3831 = vmul.f32 1.0, %v3830
    %v3832 = vrcp.pop %v3829
    %v3833 = vmul.f32 1.0, %v3832
    %v3834 = vtanh.pop %v3806
    %v3835 = vtanh.pop %v3807
    %v3836 = vxor.u32 %v3808, 2147483648
    %v3837 = vxor.u32 %v3809, 2147483648
    %v3838 = vmul.f32 %v3836, 1.442695
    %v3839 = vpow.pop %v3838
    %v3840 = vmul.f32 %v3837, 1.442695
    %v3841 = vpow.pop %v3840
    %v3842 = vadd.f32 %v3839, 1.0
    %v3843 = vadd.f32 %v3841, 1.0
    %v3844 = vrcp.pop %v3842
    %v3845 = vmul.f32 1.0, %v3844
    %v3846 = vrcp.pop %v3843
    %v3847 = vmul.f32 1.0, %v3846
    %v3850 = vrot.slane %v3472, 6
    %v3851 = vrot.slane %v3473, 6
    %v3854 = vmul.f32 %v3831, %v3850
    %v3855 = vmul.f32 %v3833, %v3851
    %v3856 = vmul.f32 %v3819, %v3834
    %v3857 = vmul.f32 %v3821, %v3835
    %v3858 = vadd.f32 %v3854, %v3856
    %v3859 = vadd.f32 %v3855, %v3857
    %v3860 = vtanh.pop %v3858
    %v3861 = vtanh.pop %v3859
    %v3862 = vmul.f32 %v3845, %v3860
    %v3863 = vmul.f32 %v3847, %v3861
    %3864 = vst [vmem:[#allocation3 + $0x10] sm:$0xc0] %v3862
    %3865 = vst [vmem:[#allocation3 + $0x18] sm:$0xc0] %v3863
    %v3866 = vld [vmem:[#allocation3] sm:$0xff]
    %v3867 = vld [vmem:[#allocation3 + $0x8] sm:$0xff]
    %v3868 = vld [vmem:[#allocation3 + $0x10] sm:$0xff]
    %v3869 = vld [vmem:[#allocation3 + $0x18] sm:$0xff]
    %v3870 = vld [vmem:[#allocation10] sm:$0xff]
    %v3871 = vld [vmem:[#allocation10 + $0x8] sm:$0xff]
    %v3872 = vld [vmem:[#allocation10 + $0x10] sm:$0xff]
    %v3873 = vld [vmem:[#allocation10 + $0x18] sm:$0xff]
    %v3874 = vld [vmem:[#allocation10 + $0x20] sm:$0xff]
    %v3875 = vld [vmem:[#allocation10 + $0x28] sm:$0xff]
    %v3876 = vld [vmem:[#allocation10 + $0x30] sm:$0xff]
    %v3877 = vld [vmem:[#allocation10 + $0x38] sm:$0xff]
    %v3878 = vld [vmem:[#allocation10 + $0x40] sm:$0xff]
    %v3879 = vld [vmem:[#allocation10 + $0x48] sm:$0xff]
    %v3880 = vld [vmem:[#allocation10 + $0x50] sm:$0xff]
    %v3881 = vld [vmem:[#allocation10 + $0x58] sm:$0xff]
    %v3882 = vld [vmem:[#allocation10 + $0x60] sm:$0xff]
    %v3883 = vld [vmem:[#allocation10 + $0x68] sm:$0xff]
    %v3884 = vld [vmem:[#allocation10 + $0x70] sm:$0xff]
    %v3885 = vld [vmem:[#allocation10 + $0x78] sm:$0xff]
    %v3886 = vld [vmem:[#allocation10 + $0x80] sm:$0xff]
    %v3887 = vld [vmem:[#allocation10 + $0x88] sm:$0xff]
    %v3888 = vld [vmem:[#allocation10 + $0x90] sm:$0xff]
    %v3889 = vld [vmem:[#allocation10 + $0x98] sm:$0xff]
    %v3890 = vld [vmem:[#allocation10 + $0xa0] sm:$0xff]
    %v3891 = vld [vmem:[#allocation10 + $0xa8] sm:$0xff]
    %v3892 = vld [vmem:[#allocation10 + $0xb0] sm:$0xff]
    %v3893 = vld [vmem:[#allocation10 + $0xb8] sm:$0xff]
    %v3894 = vld [vmem:[#allocation10 + $0xc0] sm:$0xff]
    %v3895 = vld [vmem:[#allocation10 + $0xc8] sm:$0xff]
    %v3896 = vld [vmem:[#allocation10 + $0xd0] sm:$0xff]
    %v3897 = vld [vmem:[#allocation10 + $0xd8] sm:$0xff]
    %v3898 = vld [vmem:[#allocation10 + $0xe0] sm:$0xff]
    %v3899 = vld [vmem:[#allocation10 + $0xe8] sm:$0xff]
    %v3900 = vld [vmem:[#allocation10 + $0xf0] sm:$0xff]
    %v3901 = vld [vmem:[#allocation10 + $0xf8] sm:$0xff]
    %v3902 = vld [vmem:[#allocation10 + $0x100] sm:$0xff]
    %v3903 = vld [vmem:[#allocation10 + $0x108] sm:$0xff]
    %v3904 = vld [vmem:[#allocation10 + $0x110] sm:$0xff]
    %v3905 = vld [vmem:[#allocation10 + $0x118] sm:$0xff]
    %v3906 = vld [vmem:[#allocation10 + $0x120] sm:$0xff]
    %v3907 = vld [vmem:[#allocation10 + $0x128] sm:$0xff]
    %v3908 = vld [vmem:[#allocation10 + $0x130] sm:$0xff]
    %v3909 = vld [vmem:[#allocation10 + $0x138] sm:$0xff]
    %v3910 = vld [vmem:[#allocation10 + $0x140] sm:$0xff]
    %v3911 = vld [vmem:[#allocation10 + $0x148] sm:$0xff]
    %v3912 = vld [vmem:[#allocation10 + $0x150] sm:$0xff]
    %v3913 = vld [vmem:[#allocation10 + $0x158] sm:$0xff]
    %v3914 = vld [vmem:[#allocation10 + $0x160] sm:$0xff]
    %v3915 = vld [vmem:[#allocation10 + $0x168] sm:$0xff]
    %v3916 = vld [vmem:[#allocation10 + $0x170] sm:$0xff]
    %v3917 = vld [vmem:[#allocation10 + $0x178] sm:$0xff]
    %v3918 = vld [vmem:[#allocation10 + $0x180] sm:$0xff]
    %v3919 = vld [vmem:[#allocation10 + $0x188] sm:$0xff]
    %v3920 = vld [vmem:[#allocation10 + $0x190] sm:$0xff]
    %v3921 = vld [vmem:[#allocation10 + $0x198] sm:$0xff]
    %v3922 = vld [vmem:[#allocation10 + $0x1a0] sm:$0xff]
    %v3923 = vld [vmem:[#allocation10 + $0x1a8] sm:$0xff]
    %v3924 = vld [vmem:[#allocation10 + $0x1b0] sm:$0xff]
    %v3925 = vld [vmem:[#allocation10 + $0x1b8] sm:$0xff]
    %v3926 = vld [vmem:[#allocation10 + $0x1c0] sm:$0xff]
    %v3927 = vld [vmem:[#allocation10 + $0x1c8] sm:$0xff]
    %v3928 = vld [vmem:[#allocation10 + $0x1d0] sm:$0xff]
    %v3929 = vld [vmem:[#allocation10 + $0x1d8] sm:$0xff]
    %v3930 = vld [vmem:[#allocation10 + $0x1e0] sm:$0xff]
    %v3931 = vld [vmem:[#allocation10 + $0x1e8] sm:$0xff]
    %v3932 = vld [vmem:[#allocation10 + $0x1f0] sm:$0xff]
    %v3933 = vld [vmem:[#allocation10 + $0x1f8] sm:$0xff]
    %v3934 = vld [vmem:[%s5] sm:$0x3]
    %v3936 = vlaneseq
    %v3937 = vshrl.u32 %v3936, 7
    %v3938 = vsub.s32 0, %v3937
    %v3939 = vrot.slane %v3934, %v3938
    %v3940 = vlaneseq
    %v3941 = vshrl.u32 %v3940, 7
    %v3942 = vsub.s32 1, %v3941
    %v3943 = vrot.slane %v3934, %v3942
    %3946 = vmatprep.subr.mxu0 %v3871
    %3947 = vmatpush1.msra.mxu0 %v3870
    %3948 = vmatprep.subr.mxu0 %v3873
    %3949 = vmatpush1.msra.mxu0 %v3872
    %3950 = vmatprep.subr.mxu0 %v3875
    %3951 = vmatpush1.msra.mxu0 %v3874
    %3952 = vmatprep.subr.mxu0 %v3877
    %3953 = vmatpush1.msra.mxu0 %v3876
    %3954 = vmatprep.subr.mxu0 %v3879
    %3955 = vmatpush1.msra.mxu0 %v3878
    %3956 = vmatprep.subr.mxu0 %v3881
    %3957 = vmatpush1.msra.mxu0 %v3880
    %3958 = vmatprep.subr.mxu0 %v3883
    %3959 = vmatpush1.msra.mxu0 %v3882
    %3960 = vmatprep.subr.mxu0 %v3885
    %3961 = vmatpush1.msra.mxu0 %v3884
    %3962 = vmatprep.subr.mxu0 %v3887
    %3963 = vmatpush1.msra.mxu0 %v3886
    %3964 = vmatprep.subr.mxu0 %v3889
    %3965 = vmatpush1.msra.mxu0 %v3888
    %3966 = vmatprep.subr.mxu0 %v3891
    %3967 = vmatpush1.msra.mxu0 %v3890
    %3968 = vmatprep.subr.mxu0 %v3893
    %3969 = vmatpush1.msra.mxu0 %v3892
    %3970 = vmatprep.subr.mxu0 %v3895
    %3971 = vmatpush1.msra.mxu0 %v3894
    %3972 = vmatprep.subr.mxu0 %v3897
    %3973 = vmatpush1.msra.mxu0 %v3896
    %3974 = vmatprep.subr.mxu0 %v3899
    %3975 = vmatpush1.msra.mxu0 %v3898
    %3976 = vmatprep.subr.mxu0 %v3901
    %3977 = vmatpush1.msra.mxu0 %v3900
    %3978 = vmatprep.subr.mxu0 %v3903
    %3979 = vmatpush1.msra.mxu0 %v3902
    %3980 = vmatprep.subr.mxu0 %v3905
    %3981 = vmatpush1.msra.mxu0 %v3904
    %3982 = vmatprep.subr.mxu0 %v3907
    %3983 = vmatpush1.msra.mxu0 %v3906
    %3984 = vmatprep.subr.mxu0 %v3909
    %3985 = vmatpush1.msra.mxu0 %v3908
    %3986 = vmatprep.subr.mxu0 %v3911
    %3987 = vmatpush1.msra.mxu0 %v3910
    %3988 = vmatprep.subr.mxu0 %v3913
    %3989 = vmatpush1.msra.mxu0 %v3912
    %3990 = vmatprep.subr.mxu0 %v3915
    %3991 = vmatpush1.msra.mxu0 %v3914
    %3992 = vmatprep.subr.mxu0 %v3917
    %3993 = vmatpush1.msra.mxu0 %v3916
    %3994 = vmatprep.subr.mxu0 %v3919
    %3995 = vmatpush1.msra.mxu0 %v3918
    %3996 = vmatprep.subr.mxu0 %v3921
    %3997 = vmatpush1.msra.mxu0 %v3920
    %3998 = vmatprep.subr.mxu0 %v3923
    %3999 = vmatpush1.msra.mxu0 %v3922
    %4000 = vmatprep.subr.mxu0 %v3925
    %4001 = vmatpush1.msra.mxu0 %v3924
    %4002 = vmatprep.subr.mxu0 %v3927
    %4003 = vmatpush1.msra.mxu0 %v3926
    %4004 = vmatprep.subr.mxu0 %v3929
    %4005 = vmatpush1.msra.mxu0 %v3928
    %4006 = vmatprep.subr.mxu0 %v3931
    %4007 = vmatpush1.msra.mxu0 %v3930
    %4008 = vmatprep.subr.mxu0 %v3933
    %4009 = vmatpush1.msra.mxu0 %v3932
    %4010 = vmatprep.mubr.f32.mxu0 %v3867
    %4011 = vmatmul.mubr.f32.gmra.mrb[0].mxu0 %v3866
    %v4012 = vpop.f32.mrb[0].mxu0
    %v4013 = vadd.f32 %v3939, %v4012
    %v4014 = vpop.f32.mrb[0].mxu0
    %v4015 = vadd.f32 %v3943, %v4014
    %4016 = vmatprep.mubr.f32.mxu0 %v3869
    %4017 = vmatmul.mubr.f32.gmra.mrb[0].mxu0 %v3868
    %v4018 = vpop.f32.mrb[0].mxu0
    %v4019 = vadd.f32 %v3939, %v4018
    %v4020 = vpop.f32.mrb[0].mxu0
    %v4021 = vadd.f32 %v3943, %v4020
    %4022 = vdwg.mxu0
    %v4023 = vmax.f32 %v4013, 0.0
    %v4024 = vmax.f32 %v4015, 0.0
    %v4025 = vmax.f32 %v4019, 0.0
    %v4026 = vmax.f32 %v4021, 0.0
    %v4027 = vld [vmem:[#allocation12] sm:$0xff]
    %v4028 = vld [vmem:[#allocation12 + $0x8] sm:$0xff]
    %v4029 = vld [vmem:[#allocation12 + $0x10] sm:$0xff]
    %v4030 = vld [vmem:[#allocation12 + $0x18] sm:$0xff]
    %v4031 = vld [vmem:[#allocation12 + $0x20] sm:$0xff]
    %v4032 = vld [vmem:[#allocation12 + $0x28] sm:$0xff]
    %v4033 = vld [vmem:[#allocation12 + $0x30] sm:$0xff]
    %v4034 = vld [vmem:[#allocation12 + $0x38] sm:$0xff]
    %v4035 = vld [vmem:[#allocation12 + $0x40] sm:$0xff]
    %v4036 = vld [vmem:[#allocation12 + $0x48] sm:$0xff]
    %v4037 = vld [vmem:[#allocation12 + $0x50] sm:$0xff]
    %v4038 = vld [vmem:[#allocation12 + $0x58] sm:$0xff]
    %v4039 = vld [vmem:[#allocation12 + $0x60] sm:$0xff]
    %v4040 = vld [vmem:[#allocation12 + $0x68] sm:$0xff]
    %v4041 = vld [vmem:[#allocation12 + $0x70] sm:$0xff]
    %v4042 = vld [vmem:[#allocation12 + $0x78] sm:$0xff]
    %v4043 = vld [vmem:[#allocation12 + $0x80] sm:$0xff]
    %v4044 = vld [vmem:[#allocation12 + $0x88] sm:$0xff]
    %v4045 = vld [vmem:[#allocation12 + $0x90] sm:$0xff]
    %v4046 = vld [vmem:[#allocation12 + $0x98] sm:$0xff]
    %v4047 = vld [vmem:[#allocation12 + $0xa0] sm:$0xff]
    %v4048 = vld [vmem:[#allocation12 + $0xa8] sm:$0xff]
    %v4049 = vld [vmem:[#allocation12 + $0xb0] sm:$0xff]
    %v4050 = vld [vmem:[#allocation12 + $0xb8] sm:$0xff]
    %v4051 = vld [vmem:[#allocation12 + $0xc0] sm:$0xff]
    %v4052 = vld [vmem:[#allocation12 + $0xc8] sm:$0xff]
    %v4053 = vld [vmem:[#allocation12 + $0xd0] sm:$0xff]
    %v4054 = vld [vmem:[#allocation12 + $0xd8] sm:$0xff]
    %v4055 = vld [vmem:[#allocation12 + $0xe0] sm:$0xff]
    %v4056 = vld [vmem:[#allocation12 + $0xe8] sm:$0xff]
    %v4057 = vld [vmem:[#allocation12 + $0xf0] sm:$0xff]
    %v4058 = vld [vmem:[#allocation12 + $0xf8] sm:$0xff]
    %v4059 = vld [vmem:[%s7] sm:$0x1]
    %v4061 = vlaneseq
    %v4062 = vshrl.u32 %v4061, 7
    %v4063 = vsub.s32 0, %v4062
    %v4064 = vrot.slane %v4059, %v4063
    %4066 = vmatprep.subr.mxu0 0.0
    %4067 = vmatpush1.msra.mxu0 %v4027
    %4068 = vmatprep.subr.mxu0 0.0
    %4069 = vmatpush1.msra.mxu0 %v4028
    %4070 = vmatprep.subr.mxu0 0.0
    %4071 = vmatpush1.msra.mxu0 %v4029
    %4072 = vmatprep.subr.mxu0 0.0
    %4073 = vmatpush1.msra.mxu0 %v4030
    %4074 = vmatprep.subr.mxu0 0.0
    %4075 = vmatpush1.msra.mxu0 %v4031
    %4076 = vmatprep.subr.mxu0 0.0
    %4077 = vmatpush1.msra.mxu0 %v4032
    %4078 = vmatprep.subr.mxu0 0.0
    %4079 = vmatpush1.msra.mxu0 %v4033
    %4080 = vmatprep.subr.mxu0 0.0
    %4081 = vmatpush1.msra.mxu0 %v4034
    %4082 = vmatprep.subr.mxu0 0.0
    %4083 = vmatpush1.msra.mxu0 %v4035
    %4084 = vmatprep.subr.mxu0 0.0
    %4085 = vmatpush1.msra.mxu0 %v4036
    %4086 = vmatprep.subr.mxu0 0.0
    %4087 = vmatpush1.msra.mxu0 %v4037
    %4088 = vmatprep.subr.mxu0 0.0
    %4089 = vmatpush1.msra.mxu0 %v4038
    %4090 = vmatprep.subr.mxu0 0.0
    %4091 = vmatpush1.msra.mxu0 %v4039
    %4092 = vmatprep.subr.mxu0 0.0
    %4093 = vmatpush1.msra.mxu0 %v4040
    %4094 = vmatprep.subr.mxu0 0.0
    %4095 = vmatpush1.msra.mxu0 %v4041
    %4096 = vmatprep.subr.mxu0 0.0
    %4097 = vmatpush1.msra.mxu0 %v4042
    %4098 = vmatprep.subr.mxu0 0.0
    %4099 = vmatpush1.msra.mxu0 %v4043
    %4100 = vmatprep.subr.mxu0 0.0
    %4101 = vmatpush1.msra.mxu0 %v4044
    %4102 = vmatprep.subr.mxu0 0.0
    %4103 = vmatpush1.msra.mxu0 %v4045
    %4104 = vmatprep.subr.mxu0 0.0
    %4105 = vmatpush1.msra.mxu0 %v4046
    %4106 = vmatprep.subr.mxu0 0.0
    %4107 = vmatpush1.msra.mxu0 %v4047
    %4108 = vmatprep.subr.mxu0 0.0
    %4109 = vmatpush1.msra.mxu0 %v4048
    %4110 = vmatprep.subr.mxu0 0.0
    %4111 = vmatpush1.msra.mxu0 %v4049
    %4112 = vmatprep.subr.mxu0 0.0
    %4113 = vmatpush1.msra.mxu0 %v4050
    %4114 = vmatprep.subr.mxu0 0.0
    %4115 = vmatpush1.msra.mxu0 %v4051
    %4116 = vmatprep.subr.mxu0 0.0
    %4117 = vmatpush1.msra.mxu0 %v4052
    %4118 = vmatprep.subr.mxu0 0.0
    %4119 = vmatpush1.msra.mxu0 %v4053
    %4120 = vmatprep.subr.mxu0 0.0
    %4121 = vmatpush1.msra.mxu0 %v4054
    %4122 = vmatprep.subr.mxu0 0.0
    %4123 = vmatpush1.msra.mxu0 %v4055
    %4124 = vmatprep.subr.mxu0 0.0
    %4125 = vmatpush1.msra.mxu0 %v4056
    %4126 = vmatprep.subr.mxu0 0.0
    %4127 = vmatpush1.msra.mxu0 %v4057
    %4128 = vmatprep.subr.mxu0 0.0
    %4129 = vmatpush1.msra.mxu0 %v4058
    %4130 = vmatprep.mubr.f32.mxu0 %v4024
    %4131 = vmatmul.mubr.f32.gmra.mrb[0].mxu0 %v4023
    %v4132 = vpop.f32.mrb[0].mxu0
    %v4133 = vadd.f32 %v4064, %v4132
    %v4134 = vpop.f32.mrb[0].mxu0
    %4135 = vmatprep.mubr.f32.mxu0 %v4026
    %4136 = vmatmul.mubr.f32.gmra.mrb[0].mxu0 %v4025
    %v4137 = vpop.f32.mrb[0].mxu0
    %v4138 = vadd.f32 %v4064, %v4137
    %v4139 = vpop.f32.mrb[0].mxu0
    %4140 = vdwg.mxu0
    %4141 = vst [vmem:[#allocation13] sm:$0xff] %v4133
    %4142 = vst [vmem:[#allocation13 + $0x8] sm:$0xff] %v4138
    // Predicated region
    $region54: #{tpu_custom_call.1} parent=1 // pred_check
      _
    $region55: #{tpu_custom_call.1} parent=1 // pred_check_branch
      %4144 = sbr.rel (0) target = $region57
    $region56: #{tpu_custom_call.1} parent=1 // pred_region
      %s4146 = ssub.s32 256, 256
      %4147 = vsyncadd [#allocation6], %s4146
      %s4148 = sshll.u32 [#allocation13], 4
      %s4149 = int_to_ptr.vmem [resolvable:$true] %s4148
      %4154 = dma.vmem_to_hbm [thread:$0]  %s4149, 256, %s8, [#allocation6], 128, 128, 8
    $region57: #{tpu_custom_call.1} parent=1 // pred_fallthru
      _
    // Predicated region
    $region58: #{tpu_custom_call.1} parent=1 // pred_check
      _
    $region59: #{tpu_custom_call.1} parent=1 // pred_check_branch
      %4156 = sbr.rel (0) target = $region61
    $region60: #{tpu_custom_call.1} parent=1 // pred_region
      %4157 = dma.done [#allocation6], 256
    $region61: #{tpu_custom_call.1} parent=1 // pred_fallthru
      _
    %4158 = vsyncpa [#allocation5], 1
    %4159 = vsyncpa [#allocation8], 1
    %4160 = vsyncpa [#allocation11], 1
    %4161 = vsyncpa [#allocation6], 1

</llo_original>
